<compile_context>
chip_gen: v6e
topology: v6e:2x2x1
jax: 0.10.0
libtpu: 0.0.40
codegen_flags: <defaults>
</compile_context>

<pallas_src>
import jax
import jax.numpy as jnp
from jax.experimental import pallas as pl
from jax.experimental.pallas import tpu as pltpu


# ----------------------------------------------------------------------------
# Fused kernel for one block of BV videos:
#   features (1x1 conv + ReLU)  ->  global avg pool  ->  GRU (batched over BV,
#   fused r|z|n gates, hoisted input projection)  ->  Linear  ->  Softmax.
#
#   x_ref     : (C, BV*T*HW)  bf16   channel-major video block, pixels lane-dense
#   wconv_ref : (F, C)        bf16   1x1 conv weight
#   bconv_ref : (F, 1)        f32
#   wih_ref   : (3H, F)       bf16   torch weight_ih_l0 layout, rows = (r|z|n)
#   whh_ref   : (3H, H)       bf16   torch weight_hh_l0 layout
#   bih_ref   : (3H, 1)       f32
#   bhh_ref   : (3H, 1)       f32
#   wfc_ref   : (NC, H)       bf16   torch nn.Linear layout
#   bfc_ref   : (NC, 1)       f32
#   o_ref     : (NC, BV)      f32    softmax probabilities (one column per video)
#   feats_scr : (F, BV*T)     f32    VMEM scratch used once to assemble pooled feats
#                                    (outside the recurrence — not a per-step buffer)
# ----------------------------------------------------------------------------
def video_kernel(x_ref, wconv_ref, bconv_ref, wih_ref, whh_ref,
                 bih_ref, bhh_ref, wfc_ref, bfc_ref, o_ref, feats_scr):
    NB = x_ref.shape[1]                 # BV*T*HW
    H = whh_ref.shape[1]
    NC, BV = o_ref.shape
    BVT = feats_scr.shape[1]            # BV*T
    T = BVT // BV
    HW = NB // BVT
    f32 = jnp.float32
    bf16 = jnp.bfloat16

    # --- Backbone stand-in: 1x1 conv + ReLU over ALL frames of ALL BV videos as
    #     ONE MXU matmul (F,C)@(C, BV*T*HW).  bf16 operands, f32 accumulation,
    #     bias/ReLU in f32.  (For real backbone feature maps this intermediate
    #     should be chunked over HW / frames so peak VMEM stays bounded; at these
    #     shapes it is only F*NB*4 = 512 KiB.)
    y = jnp.dot(wconv_ref[...], x_ref[...], preferred_element_type=f32)  # (F, NB)
    y = jnp.maximum(y + bconv_ref[...], 0.0)

    # --- adaptive_avg_pool2d((1,1)): per-frame mean over the HW lanes.
    #     Chunked XLU lane-reductions; results are written into a tiny scratch in
    #     FRAME-major column order (j = t*BV + v) so every GRU step later reads a
    #     contiguous lane slice.  This single assembly round-trip happens once,
    #     outside the recurrence.
    for v in range(BV):
        for t in range(T):
            src = (v * T + t) * HW
            col = jnp.sum(y[:, src:src + HW], axis=1, keepdims=True)     # (F, 1)
            dst = t * BV + v
            feats_scr[:, dst:dst + 1] = col
    feats = feats_scr[...] * (1.0 / HW)                                  # (F, BV*T) f32

    # --- GRU input projection for ALL (frame, video) columns at once, fused gates.
    #     Kept in registers (3H x BV*T = 96 x 16 f32) — no VMEM scratch, no per-step
    #     reload.  Weights stay in torch-native (3H, F) layout -> plain matmul.
    gi = jnp.dot(wih_ref[...], feats.astype(bf16),
                 preferred_element_type=f32) + bih_ref[...]              # (3H, BV*T)

    # --- GRU recurrence, batched over the BV videos (hidden state = one column per
    #     video).  whh / bhh hoisted out of the loop.  Static Python loop: T is
    #     small; for large T switch to a bounded-unroll fori_loop over a
    #     VMEM-resident gi to keep vreg live ranges in check.
    whh = whh_ref[...]                  # (3H, H) bf16
    bhh = bhh_ref[...]                  # (3H, 1) f32
    h = jnp.zeros((H, BV), f32)
    for t in range(T):
        gi_t = gi[:, t * BV:(t + 1) * BV]                                # (3H, BV)
        gh = jnp.dot(whh, h.astype(bf16), preferred_element_type=f32) + bhh
        r = jax.nn.sigmoid(gi_t[:H] + gh[:H])
        z = jax.nn.sigmoid(gi_t[H:2 * H] + gh[H:2 * H])
        n = jnp.tanh(gi_t[2 * H:] + r * gh[2 * H:])
        h = (1.0 - z) * n + z * h                                        # (H, BV) f32

    # --- classifier head (one matmul for all BV videos) + softmax over classes.
    logits = jnp.dot(wfc_ref[...], h.astype(bf16),
                     preferred_element_type=f32) + bfc_ref[...]          # (NC, BV)
    m = jnp.max(logits, axis=0, keepdims=True)
    e = jnp.exp(logits - m)
    probs = e * pl.reciprocal(jnp.sum(e, axis=0, keepdims=True), approx=False)
    # NOTE: (NC, BV) = (8, 2) is a tiny masked store; if NC/B grow, widen to a
    # lane-dense slab instead (review's out_spec lever).
    o_ref[...] = probs.astype(o_ref.dtype)


# ----------------------------------------------------------------------------
# Wrapper
# ----------------------------------------------------------------------------
def video_model_forward(x, params, videos_per_block=None):
    """x: (B, T, C, H, W) float32.  params in PyTorch-native layouts (see main).
    Returns (B, n_classes) softmax probabilities."""
    B, T, C, Hs, Ws = x.shape
    HW = Hs * Ws
    wconv, bconv, wih, whh, bih, bhh, wfc, bfc = params
    F = wconv.shape[0]
    H3 = wih.shape[0]
    H = H3 // 3
    NC = wfc.shape[0]

    # BV videos per grid step.  Default: the whole batch in one step (maximizes the
    # batched-GRU M dimension — the dominant latency lever).  On v7x with a large
    # batch, pick BV = B // 2 so both TensorCores get one grid step each.
    BV = B if videos_per_block is None else videos_per_block
    assert B % BV == 0
    grid = (B // BV,)

    # Channel-major layout (C, B*T*HW): pixels of every frame are lane-dense and the
    # whole block feeds one (F,C)@(C, BV*T*HW) matmul.  bf16 halves HBM/VMEM traffic
    # for the video block.  C=4 < 8 sublanes is padded 2-4x in VMEM — accepted for
    # the 1x1-conv stand-in (a real backbone should present C as a multiple of 8/16).
    x_c = jnp.transpose(x, (2, 0, 1, 3, 4)).reshape(C, B * T * HW).astype(jnp.bfloat16)

    # VMEM footprint (per grid step): x block ~128 KiB (double-buffered), conv
    # intermediate ~512 KiB, weights < 50 KiB, scratch 16 KiB  ->  ~1 MiB total,
    # far under v7x's 64 MiB as well as v5e/v6e's 128 MiB.  32 MiB limit = headroom.
    # The constant-index weight specs could additionally use pipeline_mode=
    # pl.Buffered(1); with a 1-step grid and KiB-scale weights it buys nothing here.
    out_t = pl.pallas_call(
        video_kernel,
        out_shape=jax.ShapeDtypeStruct((NC, B), jnp.float32),
        grid=grid,
        in_specs=[
            pl.BlockSpec((C, BV * T * HW), lambda i: (0, i)),   # BV videos, lane-dense
            pl.BlockSpec((F, C), lambda i: (0, 0)),             # conv w   (bf16)
            pl.BlockSpec((F, 1), lambda i: (0, 0)),             # conv b   (f32)
            pl.BlockSpec((H3, F), lambda i: (0, 0)),            # W_ih     (bf16, torch layout)
            pl.BlockSpec((H3, H), lambda i: (0, 0)),            # W_hh     (bf16, torch layout)
            pl.BlockSpec((H3, 1), lambda i: (0, 0)),            # b_ih     (f32)
            pl.BlockSpec((H3, 1), lambda i: (0, 0)),            # b_hh     (f32)
            pl.BlockSpec((NC, H), lambda i: (0, 0)),            # fc w     (bf16, torch layout)
            pl.BlockSpec((NC, 1), lambda i: (0, 0)),            # fc b     (f32)
        ],
        out_specs=pl.BlockSpec((NC, BV), lambda i: (0, i)),
        scratch_shapes=[pltpu.VMEM((F, BV * T), jnp.float32)],
        compiler_params=pltpu.CompilerParams(
            dimension_semantics=("parallel",),
            vmem_limit_bytes=32 * 1024 * 1024),
    )(x_c,
      wconv.astype(jnp.bfloat16), bconv,
      wih.astype(jnp.bfloat16), whh.astype(jnp.bfloat16), bih, bhh,
      wfc.astype(jnp.bfloat16), bfc)

    return out_t.T                                              # (B, NC)


# ----------------------------------------------------------------------------
# Pure-JAX reference (mirrors the PyTorch per-video forward loop, torch layouts).
# mxu_dtype=bf16 reproduces the kernel's operand casts for a tight structural check.
# ----------------------------------------------------------------------------
def reference_forward(x, params, mxu_dtype=jnp.float32):
    wconv, bconv, wih, whh, bih, bhh, wfc, bfc = params
    B, T, C, Hs, Ws = x.shape
    F = wconv.shape[0]
    H = whh.shape[1]
    d = mxu_dtype
    outs = []
    for b in range(B):
        xb = x[b].reshape(T, C, Hs * Ws)                                   # (T, C, HW)
        y = jnp.einsum('fc,tcp->tfp', wconv.astype(d), xb.astype(d),
                       preferred_element_type=jnp.float32) + bconv.reshape(1, F, 1)
        y = jnp.maximum(y, 0.0)                                            # features
        feats = y.mean(axis=-1)                                            # (T, F)
        h = jnp.zeros((1, H), jnp.float32)
        for t in range(T):
            gi = jnp.dot(feats[t:t + 1].astype(d), wih.T.astype(d),
                         preferred_element_type=jnp.float32) + bih.reshape(1, -1)
            gh = jnp.dot(h.astype(d), whh.T.astype(d),
                         preferred_element_type=jnp.float32) + bhh.reshape(1, -1)
            r = jax.nn.sigmoid(gi[:, :H] + gh[:, :H])
            z = jax.nn.sigmoid(gi[:, H:2 * H] + gh[:, H:2 * H])
            n = jnp.tanh(gi[:, 2 * H:] + r * gh[:, 2 * H:])
            h = (1.0 - z) * n + z * h
        logits = jnp.dot(h.astype(d), wfc.T.astype(d),
                         preferred_element_type=jnp.float32) + bfc.reshape(1, -1)
        outs.append(jax.nn.softmax(logits, axis=1))
    return jnp.concatenate(outs, axis=0)


if __name__ == "__main__":
    # Small shapes consistent with the module's forward.
    B, T, C, Hs, Ws = 2, 8, 4, 16, 16     # batch of videos, frames, frame NCHW
    F = 32                                # image_model.features[-1].out_channels
    HID = 32                              # GRU hidden_size
    NC = 8                                # n_classes

    key = jax.random.PRNGKey(0)
    ks = jax.random.split(key, 9)
    x = jax.random.normal(ks[0], (B, T, C, Hs, Ws), jnp.float32)

    scale = 0.2
    # Parameters are kept in PyTorch-native layouts (conv: (F,C); GRU weight_ih_l0:
    # (3H,F); weight_hh_l0: (3H,H); Linear: (NC,H)); gate row order is (r|z|n).
    wconv = scale * jax.random.normal(ks[1], (F, C), jnp.float32)
    bconv = scale * jax.random.normal(ks[2], (F, 1), jnp.float32)
    wih = scale * jax.random.normal(ks[3], (3 * HID, F), jnp.float32)
    whh = scale * jax.random.normal(ks[4], (3 * HID, HID), jnp.float32)
    bih = scale * jax.random.normal(ks[5], (3 * HID, 1), jnp.float32)
    bhh = scale * jax.random.normal(ks[6], (3 * HID, 1), jnp.float32)
    wfc = scale * jax.random.normal(ks[7], (NC, HID), jnp.float32)
    bfc = scale * jax.random.normal(ks[8], (NC, 1), jnp.float32)
    params = (wconv, bconv, wih, whh, bih, bhh, wfc, bfc)

    out = jax.block_until_ready(video_model_forward(x, params))
    ref_bf16 = jax.block_until_ready(reference_forward(x, params, mxu_dtype=jnp.bfloat16))
    ref_f32 = jax.block_until_ready(reference_forward(x, params, mxu_dtype=jnp.float32))

    assert out.shape == (B, NC), out.shape
    assert jnp.allclose(jnp.sum(out, axis=1), 1.0, atol=1e-5)
    # Tight check against a reference that applies the same bf16 operand casts.
    assert jnp.allclose(out, ref_bf16, atol=5e-3, rtol=5e-3), \
        float(jnp.max(jnp.abs(out - ref_bf16)))
    # Looser check against the pure-f32 (PyTorch-semantics) reference: bf16 MXU
    # operands with f32 accumulation cost well under this tolerance.
    assert jnp.allclose(out, ref_f32, atol=3e-2, rtol=3e-2), \
        float(jnp.max(jnp.abs(out - ref_f32)))

    print("KERNEL_OK")
</pallas_src>

<mosaic_0001>
module attributes {stable_mosaic.version = 11 : i64} {
  func.func @video_kernel(%arg0: i32, %arg1: memref<4x4096xbf16, #tpu.memory_space<vmem>>, %arg2: memref<32x4xbf16, #tpu.memory_space<vmem>>, %arg3: memref<32x1xf32, #tpu.memory_space<vmem>>, %arg4: memref<96x32xbf16, #tpu.memory_space<vmem>>, %arg5: memref<96x32xbf16, #tpu.memory_space<vmem>>, %arg6: memref<96x1xf32, #tpu.memory_space<vmem>>, %arg7: memref<96x1xf32, #tpu.memory_space<vmem>>, %arg8: memref<8x32xbf16, #tpu.memory_space<vmem>>, %arg9: memref<8x1xf32, #tpu.memory_space<vmem>>, %arg10: memref<8x2xf32, #tpu.memory_space<vmem>>, %arg11: memref<32x16xf32, #tpu.memory_space<vmem>>) attributes {dimension_semantics = [#tpu.dimension_semantics<parallel>], iteration_bounds = array<i64: 1>, scalar_prefetch = 0 : i64, scratch_operands = 1 : i64, tpu.core_type = #tpu.core_type<tc>, window_params = [{transform_indices = @transform_0, window_bounds = array<i64: 4, 4096>}, {pipeline_mode = #tpu.pipeline_mode<synchronous>, transform_indices = @transform_1, window_bounds = array<i64: 32, 4>}, {pipeline_mode = #tpu.pipeline_mode<synchronous>, transform_indices = @transform_2, window_bounds = array<i64: 32, 1>}, {pipeline_mode = #tpu.pipeline_mode<synchronous>, transform_indices = @transform_3, window_bounds = array<i64: 96, 32>}, {pipeline_mode = #tpu.pipeline_mode<synchronous>, transform_indices = @transform_4, window_bounds = array<i64: 96, 32>}, {pipeline_mode = #tpu.pipeline_mode<synchronous>, transform_indices = @transform_5, window_bounds = array<i64: 96, 1>}, {pipeline_mode = #tpu.pipeline_mode<synchronous>, transform_indices = @transform_6, window_bounds = array<i64: 96, 1>}, {pipeline_mode = #tpu.pipeline_mode<synchronous>, transform_indices = @transform_7, window_bounds = array<i64: 8, 32>}, {pipeline_mode = #tpu.pipeline_mode<synchronous>, transform_indices = @transform_8, window_bounds = array<i64: 8, 1>}, {transform_indices = @transform_9, window_bounds = array<i64: 8, 2>}]} {
    %c0 = arith.constant 0 : index
    %c0_0 = arith.constant 0 : index
    %0 = vector.load %arg2[%c0, %c0_0] : memref<32x4xbf16, #tpu.memory_space<vmem>>, vector<32x4xbf16>
    %c0_1 = arith.constant 0 : index
    %c0_2 = arith.constant 0 : index
    %1 = vector.load %arg1[%c0_1, %c0_2] : memref<4x4096xbf16, #tpu.memory_space<vmem>>, vector<4x4096xbf16>
    %cst = arith.constant dense<0.000000e+00> : vector<32x4096xf32>
    %2 = tpu.matmul %0, %1, %cst {dimension_numbers = #tpu.dot_dimension_numbers<[1], [0], [0], [1], [0, 0, 1, 1], [], []>} : vector<32x4xbf16>, vector<4x4096xbf16>, vector<32x4096xf32> -> vector<32x4096xf32>
    %c0_3 = arith.constant 0 : index
    %c0_4 = arith.constant 0 : index
    %3 = vector.load %arg3[%c0_3, %c0_4] : memref<32x1xf32, #tpu.memory_space<vmem>>, vector<32x1xf32>
    %4 = vector.broadcast %3 : vector<32x1xf32> to vector<32x4096xf32>
    %5 = arith.addf %2, %4 : vector<32x4096xf32>
    %cst_5 = arith.constant 0.000000e+00 : f32
    %6 = vector.broadcast %cst_5 : f32 to vector<32x4096xf32>
    %7 = arith.maximumf %5, %6 : vector<32x4096xf32>
    %8 = vector.extract_strided_slice %7 {offsets = [0, 0], sizes = [32, 256], strides = [1, 1]} : vector<32x4096xf32> to vector<32x256xf32>
    %cst_6 = arith.constant dense<0.000000e+00> : vector<32xf32>
    %9 = vector.multi_reduction <add>, %8, %cst_6 [1] : vector<32x256xf32> to vector<32xf32>
    %10 = vector.shape_cast %9 : vector<32xf32> to vector<32x1xf32>
    %c0_7 = arith.constant 0 : index
    %c0_8 = arith.constant 0 : index
    %11 = vector.load %arg11[%c0_7, %c0_8] : memref<32x16xf32, #tpu.memory_space<vmem>>, vector<32x1xf32>
    tpu.vector_store %arg11[%c0_7, %c0_8], %10 {strides = array<i32>} : memref<32x16xf32, #tpu.memory_space<vmem>>, vector<32x1xf32>,
    %12 = vector.extract_strided_slice %7 {offsets = [0, 256], sizes = [32, 256], strides = [1, 1]} : vector<32x4096xf32> to vector<32x256xf32>
    %cst_9 = arith.constant dense<0.000000e+00> : vector<32xf32>
    %13 = vector.multi_reduction <add>, %12, %cst_9 [1] : vector<32x256xf32> to vector<32xf32>
    %14 = vector.shape_cast %13 : vector<32xf32> to vector<32x1xf32>
    %c0_10 = arith.constant 0 : index
    %c2 = arith.constant 2 : index
    %15 = vector.load %arg11[%c0_10, %c2] : memref<32x16xf32, #tpu.memory_space<vmem>>, vector<32x1xf32>
    tpu.vector_store %arg11[%c0_10, %c2], %14 {strides = array<i32>} : memref<32x16xf32, #tpu.memory_space<vmem>>, vector<32x1xf32>,
    %16 = vector.extract_strided_slice %7 {offsets = [0, 512], sizes = [32, 256], strides = [1, 1]} : vector<32x4096xf32> to vector<32x256xf32>
    %cst_11 = arith.constant dense<0.000000e+00> : vector<32xf32>
    %17 = vector.multi_reduction <add>, %16, %cst_11 [1] : vector<32x256xf32> to vector<32xf32>
    %18 = vector.shape_cast %17 : vector<32xf32> to vector<32x1xf32>
    %c0_12 = arith.constant 0 : index
    %c4 = arith.constant 4 : index
    %19 = vector.load %arg11[%c0_12, %c4] : memref<32x16xf32, #tpu.memory_space<vmem>>, vector<32x1xf32>
    tpu.vector_store %arg11[%c0_12, %c4], %18 {strides = array<i32>} : memref<32x16xf32, #tpu.memory_space<vmem>>, vector<32x1xf32>,
    %20 = vector.extract_strided_slice %7 {offsets = [0, 768], sizes = [32, 256], strides = [1, 1]} : vector<32x4096xf32> to vector<32x256xf32>
    %cst_13 = arith.constant dense<0.000000e+00> : vector<32xf32>
    %21 = vector.multi_reduction <add>, %20, %cst_13 [1] : vector<32x256xf32> to vector<32xf32>
    %22 = vector.shape_cast %21 : vector<32xf32> to vector<32x1xf32>
    %c0_14 = arith.constant 0 : index
    %c6 = arith.constant 6 : index
    %23 = vector.load %arg11[%c0_14, %c6] : memref<32x16xf32, #tpu.memory_space<vmem>>, vector<32x1xf32>
    tpu.vector_store %arg11[%c0_14, %c6], %22 {strides = array<i32>} : memref<32x16xf32, #tpu.memory_space<vmem>>, vector<32x1xf32>,
    %24 = vector.extract_strided_slice %7 {offsets = [0, 1024], sizes = [32, 256], strides = [1, 1]} : vector<32x4096xf32> to vector<32x256xf32>
    %cst_15 = arith.constant dense<0.000000e+00> : vector<32xf32>
    %25 = vector.multi_reduction <add>, %24, %cst_15 [1] : vector<32x256xf32> to vector<32xf32>
    %26 = vector.shape_cast %25 : vector<32xf32> to vector<32x1xf32>
    %c0_16 = arith.constant 0 : index
    %c8 = arith.constant 8 : index
    %27 = vector.load %arg11[%c0_16, %c8] : memref<32x16xf32, #tpu.memory_space<vmem>>, vector<32x1xf32>
    tpu.vector_store %arg11[%c0_16, %c8], %26 {strides = array<i32>} : memref<32x16xf32, #tpu.memory_space<vmem>>, vector<32x1xf32>,
    %28 = vector.extract_strided_slice %7 {offsets = [0, 1280], sizes = [32, 256], strides = [1, 1]} : vector<32x4096xf32> to vector<32x256xf32>
    %cst_17 = arith.constant dense<0.000000e+00> : vector<32xf32>
    %29 = vector.multi_reduction <add>, %28, %cst_17 [1] : vector<32x256xf32> to vector<32xf32>
    %30 = vector.shape_cast %29 : vector<32xf32> to vector<32x1xf32>
    %c0_18 = arith.constant 0 : index
    %c10 = arith.constant 10 : index
    %31 = vector.load %arg11[%c0_18, %c10] : memref<32x16xf32, #tpu.memory_space<vmem>>, vector<32x1xf32>
    tpu.vector_store %arg11[%c0_18, %c10], %30 {strides = array<i32>} : memref<32x16xf32, #tpu.memory_space<vmem>>, vector<32x1xf32>,
    %32 = vector.extract_strided_slice %7 {offsets = [0, 1536], sizes = [32, 256], strides = [1, 1]} : vector<32x4096xf32> to vector<32x256xf32>
    %cst_19 = arith.constant dense<0.000000e+00> : vector<32xf32>
    %33 = vector.multi_reduction <add>, %32, %cst_19 [1] : vector<32x256xf32> to vector<32xf32>
    %34 = vector.shape_cast %33 : vector<32xf32> to vector<32x1xf32>
    %c0_20 = arith.constant 0 : index
    %c12 = arith.constant 12 : index
    %35 = vector.load %arg11[%c0_20, %c12] : memref<32x16xf32, #tpu.memory_space<vmem>>, vector<32x1xf32>
    tpu.vector_store %arg11[%c0_20, %c12], %34 {strides = array<i32>} : memref<32x16xf32, #tpu.memory_space<vmem>>, vector<32x1xf32>,
    %36 = vector.extract_strided_slice %7 {offsets = [0, 1792], sizes = [32, 256], strides = [1, 1]} : vector<32x4096xf32> to vector<32x256xf32>
    %cst_21 = arith.constant dense<0.000000e+00> : vector<32xf32>
    %37 = vector.multi_reduction <add>, %36, %cst_21 [1] : vector<32x256xf32> to vector<32xf32>
    %38 = vector.shape_cast %37 : vector<32xf32> to vector<32x1xf32>
    %c0_22 = arith.constant 0 : index
    %c14 = arith.constant 14 : index
    %39 = vector.load %arg11[%c0_22, %c14] : memref<32x16xf32, #tpu.memory_space<vmem>>, vector<32x1xf32>
    tpu.vector_store %arg11[%c0_22, %c14], %38 {strides = array<i32>} : memref<32x16xf32, #tpu.memory_space<vmem>>, vector<32x1xf32>,
    %40 = vector.extract_strided_slice %7 {offsets = [0, 2048], sizes = [32, 256], strides = [1, 1]} : vector<32x4096xf32> to vector<32x256xf32>
    %cst_23 = arith.constant dense<0.000000e+00> : vector<32xf32>
    %41 = vector.multi_reduction <add>, %40, %cst_23 [1] : vector<32x256xf32> to vector<32xf32>
    %42 = vector.shape_cast %41 : vector<32xf32> to vector<32x1xf32>
    %c0_24 = arith.constant 0 : index
    %c1 = arith.constant 1 : index
    %43 = vector.load %arg11[%c0_24, %c1] : memref<32x16xf32, #tpu.memory_space<vmem>>, vector<32x1xf32>
    tpu.vector_store %arg11[%c0_24, %c1], %42 {strides = array<i32>} : memref<32x16xf32, #tpu.memory_space<vmem>>, vector<32x1xf32>,
    %44 = vector.extract_strided_slice %7 {offsets = [0, 2304], sizes = [32, 256], strides = [1, 1]} : vector<32x4096xf32> to vector<32x256xf32>
    %cst_25 = arith.constant dense<0.000000e+00> : vector<32xf32>
    %45 = vector.multi_reduction <add>, %44, %cst_25 [1] : vector<32x256xf32> to vector<32xf32>
    %46 = vector.shape_cast %45 : vector<32xf32> to vector<32x1xf32>
    %c0_26 = arith.constant 0 : index
    %c3 = arith.constant 3 : index
    %47 = vector.load %arg11[%c0_26, %c3] : memref<32x16xf32, #tpu.memory_space<vmem>>, vector<32x1xf32>
    tpu.vector_store %arg11[%c0_26, %c3], %46 {strides = array<i32>} : memref<32x16xf32, #tpu.memory_space<vmem>>, vector<32x1xf32>,
    %48 = vector.extract_strided_slice %7 {offsets = [0, 2560], sizes = [32, 256], strides = [1, 1]} : vector<32x4096xf32> to vector<32x256xf32>
    %cst_27 = arith.constant dense<0.000000e+00> : vector<32xf32>
    %49 = vector.multi_reduction <add>, %48, %cst_27 [1] : vector<32x256xf32> to vector<32xf32>
    %50 = vector.shape_cast %49 : vector<32xf32> to vector<32x1xf32>
    %c0_28 = arith.constant 0 : index
    %c5 = arith.constant 5 : index
    %51 = vector.load %arg11[%c0_28, %c5] : memref<32x16xf32, #tpu.memory_space<vmem>>, vector<32x1xf32>
    tpu.vector_store %arg11[%c0_28, %c5], %50 {strides = array<i32>} : memref<32x16xf32, #tpu.memory_space<vmem>>, vector<32x1xf32>,
    %52 = vector.extract_strided_slice %7 {offsets = [0, 2816], sizes = [32, 256], strides = [1, 1]} : vector<32x4096xf32> to vector<32x256xf32>
    %cst_29 = arith.constant dense<0.000000e+00> : vector<32xf32>
    %53 = vector.multi_reduction <add>, %52, %cst_29 [1] : vector<32x256xf32> to vector<32xf32>
    %54 = vector.shape_cast %53 : vector<32xf32> to vector<32x1xf32>
    %c0_30 = arith.constant 0 : index
    %c7 = arith.constant 7 : index
    %55 = vector.load %arg11[%c0_30, %c7] : memref<32x16xf32, #tpu.memory_space<vmem>>, vector<32x1xf32>
    tpu.vector_store %arg11[%c0_30, %c7], %54 {strides = array<i32>} : memref<32x16xf32, #tpu.memory_space<vmem>>, vector<32x1xf32>,
    %56 = vector.extract_strided_slice %7 {offsets = [0, 3072], sizes = [32, 256], strides = [1, 1]} : vector<32x4096xf32> to vector<32x256xf32>
    %cst_31 = arith.constant dense<0.000000e+00> : vector<32xf32>
    %57 = vector.multi_reduction <add>, %56, %cst_31 [1] : vector<32x256xf32> to vector<32xf32>
    %58 = vector.shape_cast %57 : vector<32xf32> to vector<32x1xf32>
    %c0_32 = arith.constant 0 : index
    %c9 = arith.constant 9 : index
    %59 = vector.load %arg11[%c0_32, %c9] : memref<32x16xf32, #tpu.memory_space<vmem>>, vector<32x1xf32>
    tpu.vector_store %arg11[%c0_32, %c9], %58 {strides = array<i32>} : memref<32x16xf32, #tpu.memory_space<vmem>>, vector<32x1xf32>,
    %60 = vector.extract_strided_slice %7 {offsets = [0, 3328], sizes = [32, 256], strides = [1, 1]} : vector<32x4096xf32> to vector<32x256xf32>
    %cst_33 = arith.constant dense<0.000000e+00> : vector<32xf32>
    %61 = vector.multi_reduction <add>, %60, %cst_33 [1] : vector<32x256xf32> to vector<32xf32>
    %62 = vector.shape_cast %61 : vector<32xf32> to vector<32x1xf32>
    %c0_34 = arith.constant 0 : index
    %c11 = arith.constant 11 : index
    %63 = vector.load %arg11[%c0_34, %c11] : memref<32x16xf32, #tpu.memory_space<vmem>>, vector<32x1xf32>
    tpu.vector_store %arg11[%c0_34, %c11], %62 {strides = array<i32>} : memref<32x16xf32, #tpu.memory_space<vmem>>, vector<32x1xf32>,
    %64 = vector.extract_strided_slice %7 {offsets = [0, 3584], sizes = [32, 256], strides = [1, 1]} : vector<32x4096xf32> to vector<32x256xf32>
    %cst_35 = arith.constant dense<0.000000e+00> : vector<32xf32>
    %65 = vector.multi_reduction <add>, %64, %cst_35 [1] : vector<32x256xf32> to vector<32xf32>
    %66 = vector.shape_cast %65 : vector<32xf32> to vector<32x1xf32>
    %c0_36 = arith.constant 0 : index
    %c13 = arith.constant 13 : index
    %67 = vector.load %arg11[%c0_36, %c13] : memref<32x16xf32, #tpu.memory_space<vmem>>, vector<32x1xf32>
    tpu.vector_store %arg11[%c0_36, %c13], %66 {strides = array<i32>} : memref<32x16xf32, #tpu.memory_space<vmem>>, vector<32x1xf32>,
    %68 = vector.extract_strided_slice %7 {offsets = [0, 3840], sizes = [32, 256], strides = [1, 1]} : vector<32x4096xf32> to vector<32x256xf32>
    %cst_37 = arith.constant dense<0.000000e+00> : vector<32xf32>
    %69 = vector.multi_reduction <add>, %68, %cst_37 [1] : vector<32x256xf32> to vector<32xf32>
    %70 = vector.shape_cast %69 : vector<32xf32> to vector<32x1xf32>
    %c0_38 = arith.constant 0 : index
    %c15 = arith.constant 15 : index
    %71 = vector.load %arg11[%c0_38, %c15] : memref<32x16xf32, #tpu.memory_space<vmem>>, vector<32x1xf32>
    tpu.vector_store %arg11[%c0_38, %c15], %70 {strides = array<i32>} : memref<32x16xf32, #tpu.memory_space<vmem>>, vector<32x1xf32>,
    %c0_39 = arith.constant 0 : index
    %c0_40 = arith.constant 0 : index
    %72 = vector.load %arg11[%c0_39, %c0_40] : memref<32x16xf32, #tpu.memory_space<vmem>>, vector<32x16xf32>
    %cst_41 = arith.constant 3.906250e-03 : f32
    %73 = vector.broadcast %cst_41 : f32 to vector<32x16xf32>
    %74 = arith.mulf %72, %73 : vector<32x16xf32>
    %c0_42 = arith.constant 0 : index
    %c0_43 = arith.constant 0 : index
    %75 = vector.load %arg4[%c0_42, %c0_43] : memref<96x32xbf16, #tpu.memory_space<vmem>>, vector<96x32xbf16>
    %76 = arith.truncf %74 : vector<32x16xf32> to vector<32x16xbf16>
    %cst_44 = arith.constant dense<0.000000e+00> : vector<96x16xf32>
    %77 = tpu.matmul %75, %76, %cst_44 {dimension_numbers = #tpu.dot_dimension_numbers<[1], [0], [0], [1], [0, 0, 1, 1], [], []>} : vector<96x32xbf16>, vector<32x16xbf16>, vector<96x16xf32> -> vector<96x16xf32>
    %c0_45 = arith.constant 0 : index
    %c0_46 = arith.constant 0 : index
    %78 = vector.load %arg6[%c0_45, %c0_46] : memref<96x1xf32, #tpu.memory_space<vmem>>, vector<96x1xf32>
    %79 = vector.broadcast %78 : vector<96x1xf32> to vector<96x16xf32>
    %80 = arith.addf %77, %79 : vector<96x16xf32>
    %c0_47 = arith.constant 0 : index
    %c0_48 = arith.constant 0 : index
    %81 = vector.load %arg5[%c0_47, %c0_48] : memref<96x32xbf16, #tpu.memory_space<vmem>>, vector<96x32xbf16>
    %c0_49 = arith.constant 0 : index
    %c0_50 = arith.constant 0 : index
    %82 = vector.load %arg7[%c0_49, %c0_50] : memref<96x1xf32, #tpu.memory_space<vmem>>, vector<96x1xf32>
    %cst_51 = arith.constant 0.000000e+00 : f32
    %83 = vector.broadcast %cst_51 : f32 to vector<32x2xf32>
    %84 = vector.extract_strided_slice %80 {offsets = [0, 0], sizes = [96, 2], strides = [1, 1]} : vector<96x16xf32> to vector<96x2xf32>
    %85 = arith.truncf %83 : vector<32x2xf32> to vector<32x2xbf16>
    %cst_52 = arith.constant dense<0.000000e+00> : vector<96x2xf32>
    %86 = tpu.matmul %81, %85, %cst_52 {dimension_numbers = #tpu.dot_dimension_numbers<[1], [0], [0], [1], [0, 0, 1, 1], [], []>} : vector<96x32xbf16>, vector<32x2xbf16>, vector<96x2xf32> -> vector<96x2xf32>
    %87 = vector.broadcast %82 : vector<96x1xf32> to vector<96x2xf32>
    %88 = arith.addf %86, %87 : vector<96x2xf32>
    %89 = vector.extract_strided_slice %84 {offsets = [0, 0], sizes = [32, 2], strides = [1, 1]} : vector<96x2xf32> to vector<32x2xf32>
    %90 = vector.extract_strided_slice %88 {offsets = [0, 0], sizes = [32, 2], strides = [1, 1]} : vector<96x2xf32> to vector<32x2xf32>
    %91 = arith.addf %89, %90 : vector<32x2xf32>
    %92 = arith.negf %91 : vector<32x2xf32>
    %93 = math.exp %92 : vector<32x2xf32>
    %cst_53 = arith.constant 1.000000e+00 : f32
    %94 = vector.broadcast %cst_53 : f32 to vector<32x2xf32>
    %95 = arith.addf %94, %93 : vector<32x2xf32>
    %96 = arith.divf %94, %95 : vector<32x2xf32>
    %97 = vector.extract_strided_slice %84 {offsets = [32, 0], sizes = [32, 2], strides = [1, 1]} : vector<96x2xf32> to vector<32x2xf32>
    %98 = vector.extract_strided_slice %88 {offsets = [32, 0], sizes = [32, 2], strides = [1, 1]} : vector<96x2xf32> to vector<32x2xf32>
    %99 = arith.addf %97, %98 : vector<32x2xf32>
    %100 = arith.negf %99 : vector<32x2xf32>
    %101 = math.exp %100 : vector<32x2xf32>
    %cst_54 = arith.constant 1.000000e+00 : f32
    %102 = vector.broadcast %cst_54 : f32 to vector<32x2xf32>
    %103 = arith.addf %102, %101 : vector<32x2xf32>
    %104 = arith.divf %102, %103 : vector<32x2xf32>
    %105 = vector.extract_strided_slice %84 {offsets = [64, 0], sizes = [32, 2], strides = [1, 1]} : vector<96x2xf32> to vector<32x2xf32>
    %106 = vector.extract_strided_slice %88 {offsets = [64, 0], sizes = [32, 2], strides = [1, 1]} : vector<96x2xf32> to vector<32x2xf32>
    %107 = arith.mulf %96, %106 : vector<32x2xf32>
    %108 = arith.addf %105, %107 : vector<32x2xf32>
    %109 = math.tanh %108 : vector<32x2xf32>
    %cst_55 = arith.constant 1.000000e+00 : f32
    %110 = vector.broadcast %cst_55 : f32 to vector<32x2xf32>
    %111 = arith.subf %110, %104 : vector<32x2xf32>
    %112 = arith.mulf %111, %109 : vector<32x2xf32>
    %113 = arith.mulf %104, %83 : vector<32x2xf32>
    %114 = arith.addf %112, %113 : vector<32x2xf32>
    %115 = vector.extract_strided_slice %80 {offsets = [0, 2], sizes = [96, 2], strides = [1, 1]} : vector<96x16xf32> to vector<96x2xf32>
    %116 = arith.truncf %114 : vector<32x2xf32> to vector<32x2xbf16>
    %cst_56 = arith.constant dense<0.000000e+00> : vector<96x2xf32>
    %117 = tpu.matmul %81, %116, %cst_56 {dimension_numbers = #tpu.dot_dimension_numbers<[1], [0], [0], [1], [0, 0, 1, 1], [], []>} : vector<96x32xbf16>, vector<32x2xbf16>, vector<96x2xf32> -> vector<96x2xf32>
    %118 = vector.broadcast %82 : vector<96x1xf32> to vector<96x2xf32>
    %119 = arith.addf %117, %118 : vector<96x2xf32>
    %120 = vector.extract_strided_slice %115 {offsets = [0, 0], sizes = [32, 2], strides = [1, 1]} : vector<96x2xf32> to vector<32x2xf32>
    %121 = vector.extract_strided_slice %119 {offsets = [0, 0], sizes = [32, 2], strides = [1, 1]} : vector<96x2xf32> to vector<32x2xf32>
    %122 = arith.addf %120, %121 : vector<32x2xf32>
    %123 = arith.negf %122 : vector<32x2xf32>
    %124 = math.exp %123 : vector<32x2xf32>
    %cst_57 = arith.constant 1.000000e+00 : f32
    %125 = vector.broadcast %cst_57 : f32 to vector<32x2xf32>
    %126 = arith.addf %125, %124 : vector<32x2xf32>
    %127 = arith.divf %125, %126 : vector<32x2xf32>
    %128 = vector.extract_strided_slice %115 {offsets = [32, 0], sizes = [32, 2], strides = [1, 1]} : vector<96x2xf32> to vector<32x2xf32>
    %129 = vector.extract_strided_slice %119 {offsets = [32, 0], sizes = [32, 2], strides = [1, 1]} : vector<96x2xf32> to vector<32x2xf32>
    %130 = arith.addf %128, %129 : vector<32x2xf32>
    %131 = arith.negf %130 : vector<32x2xf32>
    %132 = math.exp %131 : vector<32x2xf32>
    %cst_58 = arith.constant 1.000000e+00 : f32
    %133 = vector.broadcast %cst_58 : f32 to vector<32x2xf32>
    %134 = arith.addf %133, %132 : vector<32x2xf32>
    %135 = arith.divf %133, %134 : vector<32x2xf32>
    %136 = vector.extract_strided_slice %115 {offsets = [64, 0], sizes = [32, 2], strides = [1, 1]} : vector<96x2xf32> to vector<32x2xf32>
    %137 = vector.extract_strided_slice %119 {offsets = [64, 0], sizes = [32, 2], strides = [1, 1]} : vector<96x2xf32> to vector<32x2xf32>
    %138 = arith.mulf %127, %137 : vector<32x2xf32>
    %139 = arith.addf %136, %138 : vector<32x2xf32>
    %140 = math.tanh %139 : vector<32x2xf32>
    %cst_59 = arith.constant 1.000000e+00 : f32
    %141 = vector.broadcast %cst_59 : f32 to vector<32x2xf32>
    %142 = arith.subf %141, %135 : vector<32x2xf32>
    %143 = arith.mulf %142, %140 : vector<32x2xf32>
    %144 = arith.mulf %135, %114 : vector<32x2xf32>
    %145 = arith.addf %143, %144 : vector<32x2xf32>
    %146 = vector.extract_strided_slice %80 {offsets = [0, 4], sizes = [96, 2], strides = [1, 1]} : vector<96x16xf32> to vector<96x2xf32>
    %147 = arith.truncf %145 : vector<32x2xf32> to vector<32x2xbf16>
    %cst_60 = arith.constant dense<0.000000e+00> : vector<96x2xf32>
    %148 = tpu.matmul %81, %147, %cst_60 {dimension_numbers = #tpu.dot_dimension_numbers<[1], [0], [0], [1], [0, 0, 1, 1], [], []>} : vector<96x32xbf16>, vector<32x2xbf16>, vector<96x2xf32> -> vector<96x2xf32>
    %149 = vector.broadcast %82 : vector<96x1xf32> to vector<96x2xf32>
    %150 = arith.addf %148, %149 : vector<96x2xf32>
    %151 = vector.extract_strided_slice %146 {offsets = [0, 0], sizes = [32, 2], strides = [1, 1]} : vector<96x2xf32> to vector<32x2xf32>
    %152 = vector.extract_strided_slice %150 {offsets = [0, 0], sizes = [32, 2], strides = [1, 1]} : vector<96x2xf32> to vector<32x2xf32>
    %153 = arith.addf %151, %152 : vector<32x2xf32>
    %154 = arith.negf %153 : vector<32x2xf32>
    %155 = math.exp %154 : vector<32x2xf32>
    %cst_61 = arith.constant 1.000000e+00 : f32
    %156 = vector.broadcast %cst_61 : f32 to vector<32x2xf32>
    %157 = arith.addf %156, %155 : vector<32x2xf32>
    %158 = arith.divf %156, %157 : vector<32x2xf32>
    %159 = vector.extract_strided_slice %146 {offsets = [32, 0], sizes = [32, 2], strides = [1, 1]} : vector<96x2xf32> to vector<32x2xf32>
    %160 = vector.extract_strided_slice %150 {offsets = [32, 0], sizes = [32, 2], strides = [1, 1]} : vector<96x2xf32> to vector<32x2xf32>
    %161 = arith.addf %159, %160 : vector<32x2xf32>
    %162 = arith.negf %161 : vector<32x2xf32>
    %163 = math.exp %162 : vector<32x2xf32>
    %cst_62 = arith.constant 1.000000e+00 : f32
    %164 = vector.broadcast %cst_62 : f32 to vector<32x2xf32>
    %165 = arith.addf %164, %163 : vector<32x2xf32>
    %166 = arith.divf %164, %165 : vector<32x2xf32>
    %167 = vector.extract_strided_slice %146 {offsets = [64, 0], sizes = [32, 2], strides = [1, 1]} : vector<96x2xf32> to vector<32x2xf32>
    %168 = vector.extract_strided_slice %150 {offsets = [64, 0], sizes = [32, 2], strides = [1, 1]} : vector<96x2xf32> to vector<32x2xf32>
    %169 = arith.mulf %158, %168 : vector<32x2xf32>
    %170 = arith.addf %167, %169 : vector<32x2xf32>
    %171 = math.tanh %170 : vector<32x2xf32>
    %cst_63 = arith.constant 1.000000e+00 : f32
    %172 = vector.broadcast %cst_63 : f32 to vector<32x2xf32>
    %173 = arith.subf %172, %166 : vector<32x2xf32>
    %174 = arith.mulf %173, %171 : vector<32x2xf32>
    %175 = arith.mulf %166, %145 : vector<32x2xf32>
    %176 = arith.addf %174, %175 : vector<32x2xf32>
    %177 = vector.extract_strided_slice %80 {offsets = [0, 6], sizes = [96, 2], strides = [1, 1]} : vector<96x16xf32> to vector<96x2xf32>
    %178 = arith.truncf %176 : vector<32x2xf32> to vector<32x2xbf16>
    %cst_64 = arith.constant dense<0.000000e+00> : vector<96x2xf32>
    %179 = tpu.matmul %81, %178, %cst_64 {dimension_numbers = #tpu.dot_dimension_numbers<[1], [0], [0], [1], [0, 0, 1, 1], [], []>} : vector<96x32xbf16>, vector<32x2xbf16>, vector<96x2xf32> -> vector<96x2xf32>
    %180 = vector.broadcast %82 : vector<96x1xf32> to vector<96x2xf32>
    %181 = arith.addf %179, %180 : vector<96x2xf32>
    %182 = vector.extract_strided_slice %177 {offsets = [0, 0], sizes = [32, 2], strides = [1, 1]} : vector<96x2xf32> to vector<32x2xf32>
    %183 = vector.extract_strided_slice %181 {offsets = [0, 0], sizes = [32, 2], strides = [1, 1]} : vector<96x2xf32> to vector<32x2xf32>
    %184 = arith.addf %182, %183 : vector<32x2xf32>
    %185 = arith.negf %184 : vector<32x2xf32>
    %186 = math.exp %185 : vector<32x2xf32>
    %cst_65 = arith.constant 1.000000e+00 : f32
    %187 = vector.broadcast %cst_65 : f32 to vector<32x2xf32>
    %188 = arith.addf %187, %186 : vector<32x2xf32>
    %189 = arith.divf %187, %188 : vector<32x2xf32>
    %190 = vector.extract_strided_slice %177 {offsets = [32, 0], sizes = [32, 2], strides = [1, 1]} : vector<96x2xf32> to vector<32x2xf32>
    %191 = vector.extract_strided_slice %181 {offsets = [32, 0], sizes = [32, 2], strides = [1, 1]} : vector<96x2xf32> to vector<32x2xf32>
    %192 = arith.addf %190, %191 : vector<32x2xf32>
    %193 = arith.negf %192 : vector<32x2xf32>
    %194 = math.exp %193 : vector<32x2xf32>
    %cst_66 = arith.constant 1.000000e+00 : f32
    %195 = vector.broadcast %cst_66 : f32 to vector<32x2xf32>
    %196 = arith.addf %195, %194 : vector<32x2xf32>
    %197 = arith.divf %195, %196 : vector<32x2xf32>
    %198 = vector.extract_strided_slice %177 {offsets = [64, 0], sizes = [32, 2], strides = [1, 1]} : vector<96x2xf32> to vector<32x2xf32>
    %199 = vector.extract_strided_slice %181 {offsets = [64, 0], sizes = [32, 2], strides = [1, 1]} : vector<96x2xf32> to vector<32x2xf32>
    %200 = arith.mulf %189, %199 : vector<32x2xf32>
    %201 = arith.addf %198, %200 : vector<32x2xf32>
    %202 = math.tanh %201 : vector<32x2xf32>
    %cst_67 = arith.constant 1.000000e+00 : f32
    %203 = vector.broadcast %cst_67 : f32 to vector<32x2xf32>
    %204 = arith.subf %203, %197 : vector<32x2xf32>
    %205 = arith.mulf %204, %202 : vector<32x2xf32>
    %206 = arith.mulf %197, %176 : vector<32x2xf32>
    %207 = arith.addf %205, %206 : vector<32x2xf32>
    %208 = vector.extract_strided_slice %80 {offsets = [0, 8], sizes = [96, 2], strides = [1, 1]} : vector<96x16xf32> to vector<96x2xf32>
    %209 = arith.truncf %207 : vector<32x2xf32> to vector<32x2xbf16>
    %cst_68 = arith.constant dense<0.000000e+00> : vector<96x2xf32>
    %210 = tpu.matmul %81, %209, %cst_68 {dimension_numbers = #tpu.dot_dimension_numbers<[1], [0], [0], [1], [0, 0, 1, 1], [], []>} : vector<96x32xbf16>, vector<32x2xbf16>, vector<96x2xf32> -> vector<96x2xf32>
    %211 = vector.broadcast %82 : vector<96x1xf32> to vector<96x2xf32>
    %212 = arith.addf %210, %211 : vector<96x2xf32>
    %213 = vector.extract_strided_slice %208 {offsets = [0, 0], sizes = [32, 2], strides = [1, 1]} : vector<96x2xf32> to vector<32x2xf32>
    %214 = vector.extract_strided_slice %212 {offsets = [0, 0], sizes = [32, 2], strides = [1, 1]} : vector<96x2xf32> to vector<32x2xf32>
    %215 = arith.addf %213, %214 : vector<32x2xf32>
    %216 = arith.negf %215 : vector<32x2xf32>
    %217 = math.exp %216 : vector<32x2xf32>
    %cst_69 = arith.constant 1.000000e+00 : f32
    %218 = vector.broadcast %cst_69 : f32 to vector<32x2xf32>
    %219 = arith.addf %218, %217 : vector<32x2xf32>
    %220 = arith.divf %218, %219 : vector<32x2xf32>
    %221 = vector.extract_strided_slice %208 {offsets = [32, 0], sizes = [32, 2], strides = [1, 1]} : vector<96x2xf32> to vector<32x2xf32>
    %222 = vector.extract_strided_slice %212 {offsets = [32, 0], sizes = [32, 2], strides = [1, 1]} : vector<96x2xf32> to vector<32x2xf32>
    %223 = arith.addf %221, %222 : vector<32x2xf32>
    %224 = arith.negf %223 : vector<32x2xf32>
    %225 = math.exp %224 : vector<32x2xf32>
    %cst_70 = arith.constant 1.000000e+00 : f32
    %226 = vector.broadcast %cst_70 : f32 to vector<32x2xf32>
    %227 = arith.addf %226, %225 : vector<32x2xf32>
    %228 = arith.divf %226, %227 : vector<32x2xf32>
    %229 = vector.extract_strided_slice %208 {offsets = [64, 0], sizes = [32, 2], strides = [1, 1]} : vector<96x2xf32> to vector<32x2xf32>
    %230 = vector.extract_strided_slice %212 {offsets = [64, 0], sizes = [32, 2], strides = [1, 1]} : vector<96x2xf32> to vector<32x2xf32>
    %231 = arith.mulf %220, %230 : vector<32x2xf32>
    %232 = arith.addf %229, %231 : vector<32x2xf32>
    %233 = math.tanh %232 : vector<32x2xf32>
    %cst_71 = arith.constant 1.000000e+00 : f32
    %234 = vector.broadcast %cst_71 : f32 to vector<32x2xf32>
    %235 = arith.subf %234, %228 : vector<32x2xf32>
    %236 = arith.mulf %235, %233 : vector<32x2xf32>
    %237 = arith.mulf %228, %207 : vector<32x2xf32>
    %238 = arith.addf %236, %237 : vector<32x2xf32>
    %239 = vector.extract_strided_slice %80 {offsets = [0, 10], sizes = [96, 2], strides = [1, 1]} : vector<96x16xf32> to vector<96x2xf32>
    %240 = arith.truncf %238 : vector<32x2xf32> to vector<32x2xbf16>
    %cst_72 = arith.constant dense<0.000000e+00> : vector<96x2xf32>
    %241 = tpu.matmul %81, %240, %cst_72 {dimension_numbers = #tpu.dot_dimension_numbers<[1], [0], [0], [1], [0, 0, 1, 1], [], []>} : vector<96x32xbf16>, vector<32x2xbf16>, vector<96x2xf32> -> vector<96x2xf32>
    %242 = vector.broadcast %82 : vector<96x1xf32> to vector<96x2xf32>
    %243 = arith.addf %241, %242 : vector<96x2xf32>
    %244 = vector.extract_strided_slice %239 {offsets = [0, 0], sizes = [32, 2], strides = [1, 1]} : vector<96x2xf32> to vector<32x2xf32>
    %245 = vector.extract_strided_slice %243 {offsets = [0, 0], sizes = [32, 2], strides = [1, 1]} : vector<96x2xf32> to vector<32x2xf32>
    %246 = arith.addf %244, %245 : vector<32x2xf32>
    %247 = arith.negf %246 : vector<32x2xf32>
    %248 = math.exp %247 : vector<32x2xf32>
    %cst_73 = arith.constant 1.000000e+00 : f32
    %249 = vector.broadcast %cst_73 : f32 to vector<32x2xf32>
    %250 = arith.addf %249, %248 : vector<32x2xf32>
    %251 = arith.divf %249, %250 : vector<32x2xf32>
    %252 = vector.extract_strided_slice %239 {offsets = [32, 0], sizes = [32, 2], strides = [1, 1]} : vector<96x2xf32> to vector<32x2xf32>
    %253 = vector.extract_strided_slice %243 {offsets = [32, 0], sizes = [32, 2], strides = [1, 1]} : vector<96x2xf32> to vector<32x2xf32>
    %254 = arith.addf %252, %253 : vector<32x2xf32>
    %255 = arith.negf %254 : vector<32x2xf32>
    %256 = math.exp %255 : vector<32x2xf32>
    %cst_74 = arith.constant 1.000000e+00 : f32
    %257 = vector.broadcast %cst_74 : f32 to vector<32x2xf32>
    %258 = arith.addf %257, %256 : vector<32x2xf32>
    %259 = arith.divf %257, %258 : vector<32x2xf32>
    %260 = vector.extract_strided_slice %239 {offsets = [64, 0], sizes = [32, 2], strides = [1, 1]} : vector<96x2xf32> to vector<32x2xf32>
    %261 = vector.extract_strided_slice %243 {offsets = [64, 0], sizes = [32, 2], strides = [1, 1]} : vector<96x2xf32> to vector<32x2xf32>
    %262 = arith.mulf %251, %261 : vector<32x2xf32>
    %263 = arith.addf %260, %262 : vector<32x2xf32>
    %264 = math.tanh %263 : vector<32x2xf32>
    %cst_75 = arith.constant 1.000000e+00 : f32
    %265 = vector.broadcast %cst_75 : f32 to vector<32x2xf32>
    %266 = arith.subf %265, %259 : vector<32x2xf32>
    %267 = arith.mulf %266, %264 : vector<32x2xf32>
    %268 = arith.mulf %259, %238 : vector<32x2xf32>
    %269 = arith.addf %267, %268 : vector<32x2xf32>
    %270 = vector.extract_strided_slice %80 {offsets = [0, 12], sizes = [96, 2], strides = [1, 1]} : vector<96x16xf32> to vector<96x2xf32>
    %271 = arith.truncf %269 : vector<32x2xf32> to vector<32x2xbf16>
    %cst_76 = arith.constant dense<0.000000e+00> : vector<96x2xf32>
    %272 = tpu.matmul %81, %271, %cst_76 {dimension_numbers = #tpu.dot_dimension_numbers<[1], [0], [0], [1], [0, 0, 1, 1], [], []>} : vector<96x32xbf16>, vector<32x2xbf16>, vector<96x2xf32> -> vector<96x2xf32>
    %273 = vector.broadcast %82 : vector<96x1xf32> to vector<96x2xf32>
    %274 = arith.addf %272, %273 : vector<96x2xf32>
    %275 = vector.extract_strided_slice %270 {offsets = [0, 0], sizes = [32, 2], strides = [1, 1]} : vector<96x2xf32> to vector<32x2xf32>
    %276 = vector.extract_strided_slice %274 {offsets = [0, 0], sizes = [32, 2], strides = [1, 1]} : vector<96x2xf32> to vector<32x2xf32>
    %277 = arith.addf %275, %276 : vector<32x2xf32>
    %278 = arith.negf %277 : vector<32x2xf32>
    %279 = math.exp %278 : vector<32x2xf32>
    %cst_77 = arith.constant 1.000000e+00 : f32
    %280 = vector.broadcast %cst_77 : f32 to vector<32x2xf32>
    %281 = arith.addf %280, %279 : vector<32x2xf32>
    %282 = arith.divf %280, %281 : vector<32x2xf32>
    %283 = vector.extract_strided_slice %270 {offsets = [32, 0], sizes = [32, 2], strides = [1, 1]} : vector<96x2xf32> to vector<32x2xf32>
    %284 = vector.extract_strided_slice %274 {offsets = [32, 0], sizes = [32, 2], strides = [1, 1]} : vector<96x2xf32> to vector<32x2xf32>
    %285 = arith.addf %283, %284 : vector<32x2xf32>
    %286 = arith.negf %285 : vector<32x2xf32>
    %287 = math.exp %286 : vector<32x2xf32>
    %cst_78 = arith.constant 1.000000e+00 : f32
    %288 = vector.broadcast %cst_78 : f32 to vector<32x2xf32>
    %289 = arith.addf %288, %287 : vector<32x2xf32>
    %290 = arith.divf %288, %289 : vector<32x2xf32>
    %291 = vector.extract_strided_slice %270 {offsets = [64, 0], sizes = [32, 2], strides = [1, 1]} : vector<96x2xf32> to vector<32x2xf32>
    %292 = vector.extract_strided_slice %274 {offsets = [64, 0], sizes = [32, 2], strides = [1, 1]} : vector<96x2xf32> to vector<32x2xf32>
    %293 = arith.mulf %282, %292 : vector<32x2xf32>
    %294 = arith.addf %291, %293 : vector<32x2xf32>
    %295 = math.tanh %294 : vector<32x2xf32>
    %cst_79 = arith.constant 1.000000e+00 : f32
    %296 = vector.broadcast %cst_79 : f32 to vector<32x2xf32>
    %297 = arith.subf %296, %290 : vector<32x2xf32>
    %298 = arith.mulf %297, %295 : vector<32x2xf32>
    %299 = arith.mulf %290, %269 : vector<32x2xf32>
    %300 = arith.addf %298, %299 : vector<32x2xf32>
    %301 = vector.extract_strided_slice %80 {offsets = [0, 14], sizes = [96, 2], strides = [1, 1]} : vector<96x16xf32> to vector<96x2xf32>
    %302 = arith.truncf %300 : vector<32x2xf32> to vector<32x2xbf16>
    %cst_80 = arith.constant dense<0.000000e+00> : vector<96x2xf32>
    %303 = tpu.matmul %81, %302, %cst_80 {dimension_numbers = #tpu.dot_dimension_numbers<[1], [0], [0], [1], [0, 0, 1, 1], [], []>} : vector<96x32xbf16>, vector<32x2xbf16>, vector<96x2xf32> -> vector<96x2xf32>
    %304 = vector.broadcast %82 : vector<96x1xf32> to vector<96x2xf32>
    %305 = arith.addf %303, %304 : vector<96x2xf32>
    %306 = vector.extract_strided_slice %301 {offsets = [0, 0], sizes = [32, 2], strides = [1, 1]} : vector<96x2xf32> to vector<32x2xf32>
    %307 = vector.extract_strided_slice %305 {offsets = [0, 0], sizes = [32, 2], strides = [1, 1]} : vector<96x2xf32> to vector<32x2xf32>
    %308 = arith.addf %306, %307 : vector<32x2xf32>
    %309 = arith.negf %308 : vector<32x2xf32>
    %310 = math.exp %309 : vector<32x2xf32>
    %cst_81 = arith.constant 1.000000e+00 : f32
    %311 = vector.broadcast %cst_81 : f32 to vector<32x2xf32>
    %312 = arith.addf %311, %310 : vector<32x2xf32>
    %313 = arith.divf %311, %312 : vector<32x2xf32>
    %314 = vector.extract_strided_slice %301 {offsets = [32, 0], sizes = [32, 2], strides = [1, 1]} : vector<96x2xf32> to vector<32x2xf32>
    %315 = vector.extract_strided_slice %305 {offsets = [32, 0], sizes = [32, 2], strides = [1, 1]} : vector<96x2xf32> to vector<32x2xf32>
    %316 = arith.addf %314, %315 : vector<32x2xf32>
    %317 = arith.negf %316 : vector<32x2xf32>
    %318 = math.exp %317 : vector<32x2xf32>
    %cst_82 = arith.constant 1.000000e+00 : f32
    %319 = vector.broadcast %cst_82 : f32 to vector<32x2xf32>
    %320 = arith.addf %319, %318 : vector<32x2xf32>
    %321 = arith.divf %319, %320 : vector<32x2xf32>
    %322 = vector.extract_strided_slice %301 {offsets = [64, 0], sizes = [32, 2], strides = [1, 1]} : vector<96x2xf32> to vector<32x2xf32>
    %323 = vector.extract_strided_slice %305 {offsets = [64, 0], sizes = [32, 2], strides = [1, 1]} : vector<96x2xf32> to vector<32x2xf32>
    %324 = arith.mulf %313, %323 : vector<32x2xf32>
    %325 = arith.addf %322, %324 : vector<32x2xf32>
    %326 = math.tanh %325 : vector<32x2xf32>
    %cst_83 = arith.constant 1.000000e+00 : f32
    %327 = vector.broadcast %cst_83 : f32 to vector<32x2xf32>
    %328 = arith.subf %327, %321 : vector<32x2xf32>
    %329 = arith.mulf %328, %326 : vector<32x2xf32>
    %330 = arith.mulf %321, %300 : vector<32x2xf32>
    %331 = arith.addf %329, %330 : vector<32x2xf32>
    %c0_84 = arith.constant 0 : index
    %c0_85 = arith.constant 0 : index
    %332 = vector.load %arg8[%c0_84, %c0_85] : memref<8x32xbf16, #tpu.memory_space<vmem>>, vector<8x32xbf16>
    %333 = arith.truncf %331 : vector<32x2xf32> to vector<32x2xbf16>
    %cst_86 = arith.constant dense<0.000000e+00> : vector<8x2xf32>
    %334 = tpu.matmul %332, %333, %cst_86 {dimension_numbers = #tpu.dot_dimension_numbers<[1], [0], [0], [1], [0, 0, 1, 1], [], []>} : vector<8x32xbf16>, vector<32x2xbf16>, vector<8x2xf32> -> vector<8x2xf32>
    %c0_87 = arith.constant 0 : index
    %c0_88 = arith.constant 0 : index
    %335 = vector.load %arg9[%c0_87, %c0_88] : memref<8x1xf32, #tpu.memory_space<vmem>>, vector<8x1xf32>
    %336 = vector.broadcast %335 : vector<8x1xf32> to vector<8x2xf32>
    %337 = arith.addf %334, %336 : vector<8x2xf32>
    %cst_89 = arith.constant dense<0xFF800000> : vector<2xf32>
    %338 = vector.multi_reduction <maximumf>, %337, %cst_89 [0] : vector<8x2xf32> to vector<2xf32>
    %339 = vector.shape_cast %338 : vector<2xf32> to vector<1x2xf32>
    %340 = vector.broadcast %339 : vector<1x2xf32> to vector<8x2xf32>
    %341 = arith.subf %337, %340 : vector<8x2xf32>
    %342 = math.exp %341 : vector<8x2xf32>
    %cst_90 = arith.constant dense<0.000000e+00> : vector<2xf32>
    %343 = vector.multi_reduction <add>, %342, %cst_90 [0] : vector<8x2xf32> to vector<2xf32>
    %344 = vector.shape_cast %343 : vector<2xf32> to vector<1x2xf32>
    %345 = tpu.reciprocal %344 : vector<1x2xf32> -> vector<1x2xf32>
    %346 = vector.broadcast %345 : vector<1x2xf32> to vector<8x2xf32>
    %347 = arith.mulf %342, %346 : vector<8x2xf32>
    %c0_91 = arith.constant 0 : index
    %c0_92 = arith.constant 0 : index
    %348 = vector.load %arg10[%c0_91, %c0_92] : memref<8x2xf32, #tpu.memory_space<vmem>>, vector<8x2xf32>
    tpu.vector_store %arg10[%c0_91, %c0_92], %347 {strides = array<i32>} : memref<8x2xf32, #tpu.memory_space<vmem>>, vector<8x2xf32>,
    return
  }
  func.func @transform_0(%arg0: i32) -> (i32, i32) {
    %c0_i32 = arith.constant 0 : i32
    %c0_i32_0 = arith.constant 0 : i32
    return %c0_i32, %arg0 : i32, i32
  }
  func.func @transform_1(%arg0: i32) -> (i32, i32) {
    %c0_i32 = arith.constant 0 : i32
    %c0_i32_0 = arith.constant 0 : i32
    %c0_i32_1 = arith.constant 0 : i32
    return %c0_i32, %c0_i32_0 : i32, i32
  }
  func.func @transform_2(%arg0: i32) -> (i32, i32) {
    %c0_i32 = arith.constant 0 : i32
    %c0_i32_0 = arith.constant 0 : i32
    %c0_i32_1 = arith.constant 0 : i32
    return %c0_i32, %c0_i32_0 : i32, i32
  }
  func.func @transform_3(%arg0: i32) -> (i32, i32) {
    %c0_i32 = arith.constant 0 : i32
    %c0_i32_0 = arith.constant 0 : i32
    %c0_i32_1 = arith.constant 0 : i32
    return %c0_i32, %c0_i32_0 : i32, i32
  }
  func.func @transform_4(%arg0: i32) -> (i32, i32) {
    %c0_i32 = arith.constant 0 : i32
    %c0_i32_0 = arith.constant 0 : i32
    %c0_i32_1 = arith.constant 0 : i32
    return %c0_i32, %c0_i32_0 : i32, i32
  }
  func.func @transform_5(%arg0: i32) -> (i32, i32) {
    %c0_i32 = arith.constant 0 : i32
    %c0_i32_0 = arith.constant 0 : i32
    %c0_i32_1 = arith.constant 0 : i32
    return %c0_i32, %c0_i32_0 : i32, i32
  }
  func.func @transform_6(%arg0: i32) -> (i32, i32) {
    %c0_i32 = arith.constant 0 : i32
    %c0_i32_0 = arith.constant 0 : i32
    %c0_i32_1 = arith.constant 0 : i32
    return %c0_i32, %c0_i32_0 : i32, i32
  }
  func.func @transform_7(%arg0: i32) -> (i32, i32) {
    %c0_i32 = arith.constant 0 : i32
    %c0_i32_0 = arith.constant 0 : i32
    %c0_i32_1 = arith.constant 0 : i32
    return %c0_i32, %c0_i32_0 : i32, i32
  }
  func.func @transform_8(%arg0: i32) -> (i32, i32) {
    %c0_i32 = arith.constant 0 : i32
    %c0_i32_0 = arith.constant 0 : i32
    %c0_i32_1 = arith.constant 0 : i32
    return %c0_i32, %c0_i32_0 : i32, i32
  }
  func.func @transform_9(%arg0: i32) -> (i32, i32) {
    %c0_i32 = arith.constant 0 : i32
    %c0_i32_0 = arith.constant 0 : i32
    return %c0_i32, %arg0 : i32, i32
  }
}

</mosaic_0001>

<llo_original>
// kernel: tpu_custom_call.1
$region0: #{tpu_custom_call.1}
  #allocation0 [shape = 'u32[]', space=smem, size = 0x4, offset = 0x4, fixed_abs, tag = 'smem constant byte address 0x4 - core index']
  #allocation1 [shape = 'u32[144,128]{1,0:T(1,128)}', space=vmem, size = 0x12000, scoped, tag = 'internal scratch']
  #allocation2 [shape = 'f32[32,16]{1,0:T(8,128)}', space=vmem, size = 0x4000, scoped, tag = 'scratch operand']
  %s0 = inlined_call_operand.vmem [shape: bf16[4,4096], index: 0, kind: input, shape index: {}]
  %s1 = inlined_call_operand.vmem [shape: bf16[32,4], index: 1, kind: input, shape index: {}]
  %s2 = inlined_call_operand.vmem [shape: f32[32,1], index: 2, kind: input, shape index: {}]
  %s3 = inlined_call_operand.vmem [shape: bf16[96,32], index: 3, kind: input, shape index: {}]
  %s4 = inlined_call_operand.vmem [shape: bf16[96,32], index: 4, kind: input, shape index: {}]
  %s5 = inlined_call_operand.vmem [shape: f32[96,1], index: 5, kind: input, shape index: {}]
  %s6 = inlined_call_operand.vmem [shape: f32[96,1], index: 6, kind: input, shape index: {}]
  %s7 = inlined_call_operand.vmem [shape: bf16[8,32], index: 7, kind: input, shape index: {}]
  %s8 = inlined_call_operand.vmem [shape: f32[8,1], index: 8, kind: input, shape index: {}]
  %s9 = inlined_call_operand.vmem [shape: f32[8,2], index: 9, kind: output, shape index: {}]
  %s10 = sld [smem:[#allocation0]]
  $region46: #{tpu_custom_call.1} parent=0
    _
  %s12 = ssub.s32 1, %s10
  %s13 = scalar_select 0, %s12, %s10
  // Predicated region
  $region2: #{tpu_custom_call.1} parent=0 // pred_check
    _
  $region3: #{tpu_custom_call.1} parent=0 // pred_check_branch
    %15 = sbr.rel (0) target = $region5
  $region4: #{tpu_custom_call.1} parent=0 // pred_region
    _
  $region5: #{tpu_custom_call.1} parent=0 // pred_fallthru
    _
  // Predicated region
  $region6: #{tpu_custom_call.1} parent=0 // pred_check
    _
  $region7: #{tpu_custom_call.1} parent=0 // pred_check_branch
    %17 = sbr.rel (0) target = $region9
  $region8: #{tpu_custom_call.1} parent=0 // pred_region
    _
  $region9: #{tpu_custom_call.1} parent=0 // pred_fallthru
    _
  // Predicated region
  $region10: #{tpu_custom_call.1} parent=0 // pred_check
    _
  $region11: #{tpu_custom_call.1} parent=0 // pred_check_branch
    %19 = sbr.rel (0) target = $region13
  $region12: #{tpu_custom_call.1} parent=0 // pred_region
    _
  $region13: #{tpu_custom_call.1} parent=0 // pred_fallthru
    _
  // Predicated region
  $region14: #{tpu_custom_call.1} parent=0 // pred_check
    _
  $region15: #{tpu_custom_call.1} parent=0 // pred_check_branch
    %21 = sbr.rel (0) target = $region17
  $region16: #{tpu_custom_call.1} parent=0 // pred_region
    _
  $region17: #{tpu_custom_call.1} parent=0 // pred_fallthru
    _
  // Predicated region
  $region18: #{tpu_custom_call.1} parent=0 // pred_check
    _
  $region19: #{tpu_custom_call.1} parent=0 // pred_check_branch
    %23 = sbr.rel (0) target = $region21
  $region20: #{tpu_custom_call.1} parent=0 // pred_region
    _
  $region21: #{tpu_custom_call.1} parent=0 // pred_fallthru
    _
  // Predicated region
  $region22: #{tpu_custom_call.1} parent=0 // pred_check
    _
  $region23: #{tpu_custom_call.1} parent=0 // pred_check_branch
    %25 = sbr.rel (0) target = $region25
  $region24: #{tpu_custom_call.1} parent=0 // pred_region
    _
  $region25: #{tpu_custom_call.1} parent=0 // pred_fallthru
    _
  // Predicated region
  $region26: #{tpu_custom_call.1} parent=0 // pred_check
    _
  $region27: #{tpu_custom_call.1} parent=0 // pred_check_branch
    %27 = sbr.rel (0) target = $region29
  $region28: #{tpu_custom_call.1} parent=0 // pred_region
    _
  $region29: #{tpu_custom_call.1} parent=0 // pred_fallthru
    _
  // Predicated region
  $region30: #{tpu_custom_call.1} parent=0 // pred_check
    _
  $region31: #{tpu_custom_call.1} parent=0 // pred_check_branch
    %29 = sbr.rel (0) target = $region33
  $region32: #{tpu_custom_call.1} parent=0 // pred_region
    _
  $region33: #{tpu_custom_call.1} parent=0 // pred_fallthru
    _
  // Predicated region
  $region34: #{tpu_custom_call.1} parent=0 // pred_check
    _
  $region35: #{tpu_custom_call.1} parent=0 // pred_check_branch
    %31 = sbr.rel (0) target = $region37
  $region36: #{tpu_custom_call.1} parent=0 // pred_region
    _
  $region37: #{tpu_custom_call.1} parent=0 // pred_fallthru
    _
  %v33 = vld [vmem:[%s1] sm:$0xf]
  %v34 = vld [vmem:[%s1 + $0x4] sm:$0xf]
  %v35 = vld [vmem:[%s1 + $0x8] sm:$0xf]
  %v36 = vld [vmem:[%s1 + $0xc] sm:$0xf]
  %v37 = vld [vmem:[%s0] sm:$0xff]
  %v38 = vld [vmem:[%s0 + $0x8] sm:$0xff]
  %v39 = vld [vmem:[%s0 + $0x10] sm:$0xff]
  %v40 = vld [vmem:[%s0 + $0x18] sm:$0xff]
  %v41 = vld [vmem:[%s0 + $0x20] sm:$0xff]
  %v42 = vld [vmem:[%s0 + $0x28] sm:$0xff]
  %v43 = vld [vmem:[%s0 + $0x30] sm:$0xff]
  %v44 = vld [vmem:[%s0 + $0x38] sm:$0xff]
  %v45 = vld [vmem:[%s2] sm:$0xff]
  %v46 = vld [vmem:[%s2 + $0x8] sm:$0xff]
  %v47 = vld [vmem:[%s2 + $0x10] sm:$0xff]
  %v48 = vld [vmem:[%s2 + $0x18] sm:$0xff]
  %50 = vset.pattern.permute.xlu0 0
  %51 = vperm.xlu0 %50, %v45
  %v52 = vpop.permute.xlu0 %51
  %55 = vset.pattern.permute.xlu0 0
  %56 = vperm.xlu0 %55, %v46
  %v57 = vpop.permute.xlu0 %56
  %60 = vset.pattern.permute.xlu0 0
  %61 = vperm.xlu0 %60, %v47
  %v62 = vpop.permute.xlu0 %61
  %65 = vset.pattern.permute.xlu0 0
  %66 = vperm.xlu0 %65, %v48
  %v67 = vpop.permute.xlu0 %66
  %v73 = vunpack.c.l.b16 %v33
  %v74 = vunpack.c.l.b16 %v34
  %v75 = vunpack.c.l.b16 %v35
  %v76 = vunpack.c.l.b16 %v36
  %v77 = vpack.c.b16 %v74, %v73
  %v78 = vpack.c.b16 %v76, %v75
  %v87 = vcombine.high %v37, %v37
  %v89 = vunpack.c.l.s4 1983009808
  %v90 = vunpack.c.0.s8 %v89
  %v91 = vlaneseq
  %v92 = vshrl.u32 %v91, 7
  %v93 = vsub.s32 %v90, %v92
  %v94 = vrot.slane %v37, %v93
  %v96 = vunpack.c.l.s4 1983009808
  %v97 = vunpack.c.0.s8 %v96
  %v98 = vlaneseq
  %v99 = vshrl.u32 %v98, 7
  %v100 = vsub.s32 %v97, %v99
  %v101 = vrot.slane %v87, %v100
  %v102 = vcombine.high %v94, %v94
  %v103 = vcombine.high %v101, %v101
  %v104 = vcombine.high %v38, %v38
  %v106 = vunpack.c.l.s4 1983009808
  %v107 = vunpack.c.0.s8 %v106
  %v108 = vlaneseq
  %v109 = vshrl.u32 %v108, 7
  %v110 = vsub.s32 %v107, %v109
  %v111 = vrot.slane %v38, %v110
  %v113 = vunpack.c.l.s4 1983009808
  %v114 = vunpack.c.0.s8 %v113
  %v115 = vlaneseq
  %v116 = vshrl.u32 %v115, 7
  %v117 = vsub.s32 %v114, %v116
  %v118 = vrot.slane %v104, %v117
  %v119 = vcombine.high %v111, %v111
  %v120 = vcombine.high %v118, %v118
  %v121 = vcombine.high %v39, %v39
  %v123 = vunpack.c.l.s4 1983009808
  %v124 = vunpack.c.0.s8 %v123
  %v125 = vlaneseq
  %v126 = vshrl.u32 %v125, 7
  %v127 = vsub.s32 %v124, %v126
  %v128 = vrot.slane %v39, %v127
  %v130 = vunpack.c.l.s4 1983009808
  %v131 = vunpack.c.0.s8 %v130
  %v132 = vlaneseq
  %v133 = vshrl.u32 %v132, 7
  %v134 = vsub.s32 %v131, %v133
  %v135 = vrot.slane %v121, %v134
  %v136 = vcombine.high %v128, %v128
  %v137 = vcombine.high %v135, %v135
  %v138 = vcombine.high %v40, %v40
  %v140 = vunpack.c.l.s4 1983009808
  %v141 = vunpack.c.0.s8 %v140
  %v142 = vlaneseq
  %v143 = vshrl.u32 %v142, 7
  %v144 = vsub.s32 %v141, %v143
  %v145 = vrot.slane %v40, %v144
  %v147 = vunpack.c.l.s4 1983009808
  %v148 = vunpack.c.0.s8 %v147
  %v149 = vlaneseq
  %v150 = vshrl.u32 %v149, 7
  %v151 = vsub.s32 %v148, %v150
  %v152 = vrot.slane %v138, %v151
  %v153 = vcombine.high %v145, %v145
  %v154 = vcombine.high %v152, %v152
  %v155 = vcombine.high %v41, %v41
  %v157 = vunpack.c.l.s4 1983009808
  %v158 = vunpack.c.0.s8 %v157
  %v159 = vlaneseq
  %v160 = vshrl.u32 %v159, 7
  %v161 = vsub.s32 %v158, %v160
  %v162 = vrot.slane %v41, %v161
  %v164 = vunpack.c.l.s4 1983009808
  %v165 = vunpack.c.0.s8 %v164
  %v166 = vlaneseq
  %v167 = vshrl.u32 %v166, 7
  %v168 = vsub.s32 %v165, %v167
  %v169 = vrot.slane %v155, %v168
  %v170 = vcombine.high %v162, %v162
  %v171 = vcombine.high %v169, %v169
  %v172 = vcombine.high %v42, %v42
  %v174 = vunpack.c.l.s4 1983009808
  %v175 = vunpack.c.0.s8 %v174
  %v176 = vlaneseq
  %v177 = vshrl.u32 %v176, 7
  %v178 = vsub.s32 %v175, %v177
  %v179 = vrot.slane %v42, %v178
  %v181 = vunpack.c.l.s4 1983009808
  %v182 = vunpack.c.0.s8 %v181
  %v183 = vlaneseq
  %v184 = vshrl.u32 %v183, 7
  %v185 = vsub.s32 %v182, %v184
  %v186 = vrot.slane %v172, %v185
  %v187 = vcombine.high %v179, %v179
  %v188 = vcombine.high %v186, %v186
  %v189 = vcombine.high %v43, %v43
  %v191 = vunpack.c.l.s4 1983009808
  %v192 = vunpack.c.0.s8 %v191
  %v193 = vlaneseq
  %v194 = vshrl.u32 %v193, 7
  %v195 = vsub.s32 %v192, %v194
  %v196 = vrot.slane %v43, %v195
  %v198 = vunpack.c.l.s4 1983009808
  %v199 = vunpack.c.0.s8 %v198
  %v200 = vlaneseq
  %v201 = vshrl.u32 %v200, 7
  %v202 = vsub.s32 %v199, %v201
  %v203 = vrot.slane %v189, %v202
  %v204 = vcombine.high %v196, %v196
  %v205 = vcombine.high %v203, %v203
  %v206 = vcombine.high %v44, %v44
  %v208 = vunpack.c.l.s4 1983009808
  %v209 = vunpack.c.0.s8 %v208
  %v210 = vlaneseq
  %v211 = vshrl.u32 %v210, 7
  %v212 = vsub.s32 %v209, %v211
  %v213 = vrot.slane %v44, %v212
  %v215 = vunpack.c.l.s4 1983009808
  %v216 = vunpack.c.0.s8 %v215
  %v217 = vlaneseq
  %v218 = vshrl.u32 %v217, 7
  %v219 = vsub.s32 %v216, %v218
  %v220 = vrot.slane %v206, %v219
  %v221 = vcombine.high %v213, %v213
  %v222 = vcombine.high %v220, %v220
  %vm223 = vcmask 31744
  %v225 = vsel %vm223, %v77, 0
  %v228 = vsel %vm223, %v78, 0
  %vm230 = vcmask 1041408
  %v232 = vsel %vm230, %v94, 0
  %v235 = vsel %vm230, %v102, 0
  %v238 = vsel %vm230, %v101, 0
  %v241 = vsel %vm230, %v103, 0
  %v244 = vsel %vm230, %v111, 0
  %v247 = vsel %vm230, %v119, 0
  %v250 = vsel %vm230, %v118, 0
  %v253 = vsel %vm230, %v120, 0
  %v256 = vsel %vm230, %v128, 0
  %v259 = vsel %vm230, %v136, 0
  %v262 = vsel %vm230, %v135, 0
  %v265 = vsel %vm230, %v137, 0
  %v268 = vsel %vm230, %v145, 0
  %v271 = vsel %vm230, %v153, 0
  %v274 = vsel %vm230, %v152, 0
  %v277 = vsel %vm230, %v154, 0
  %v280 = vsel %vm230, %v162, 0
  %v283 = vsel %vm230, %v170, 0
  %v286 = vsel %vm230, %v169, 0
  %v289 = vsel %vm230, %v171, 0
  %v292 = vsel %vm230, %v179, 0
  %v295 = vsel %vm230, %v187, 0
  %v298 = vsel %vm230, %v186, 0
  %v301 = vsel %vm230, %v188, 0
  %v304 = vsel %vm230, %v196, 0
  %v307 = vsel %vm230, %v204, 0
  %v310 = vsel %vm230, %v203, 0
  %v313 = vsel %vm230, %v205, 0
  %v316 = vsel %vm230, %v213, 0
  %v319 = vsel %vm230, %v221, 0
  %v322 = vsel %vm230, %v220, 0
  %v325 = vsel %vm230, %v222, 0
  %327 = vmatprep.subr.bf16.mxu0 0
  %328 = vmatpush1.bf16.msra.mxu0 0
  %329 = vmatprep.subr.bf16.mxu0 0
  %330 = vmatpush1.bf16.msra.mxu0 0
  %331 = vmatprep.subr.bf16.mxu0 0
  %332 = vmatpush1.bf16.msra.mxu0 0
  %333 = vmatprep.subr.bf16.mxu0 0
  %334 = vmatpush1.bf16.msra.mxu0 0
  %335 = vmatprep.subr.bf16.mxu0 0
  %336 = vmatpush1.bf16.msra.mxu0 0
  %337 = vmatprep.subr.bf16.mxu0 0
  %338 = vmatpush1.bf16.msra.mxu0 0
  %339 = vmatprep.subr.bf16.mxu0 0
  %340 = vmatpush1.bf16.msra.mxu0 0
  %341 = vmatprep.subr.bf16.mxu0 %v235
  %342 = vmatpush1.bf16.msra.mxu0 %v232
  %343 = vmatprep.subr.bf16.mxu0 0
  %344 = vmatpush2.bf16.msra.mxu0 0
  %345 = vmatprep.subr.bf16.mxu0 0
  %346 = vmatpush2.bf16.msra.mxu0 0
  %347 = vmatprep.subr.bf16.mxu0 0
  %348 = vmatpush2.bf16.msra.mxu0 0
  %349 = vmatprep.subr.bf16.mxu0 0
  %350 = vmatpush2.bf16.msra.mxu0 0
  %351 = vmatprep.subr.bf16.mxu0 0
  %352 = vmatpush2.bf16.msra.mxu0 0
  %353 = vmatprep.subr.bf16.mxu0 0
  %354 = vmatpush2.bf16.msra.mxu0 0
  %355 = vmatprep.subr.bf16.mxu0 0
  %356 = vmatpush2.bf16.msra.mxu0 0
  %357 = vmatprep.subr.bf16.mxu0 0
  %358 = vmatpush2.bf16.msra.mxu0 0
  %359 = vmatprep.mubr.bf16.mxu0 0
  %360 = vmatmul.mubr.bf16.gmra.mxu0 %v225
  %v361 = vpop.f32.mrf.mxu0
  %v362 = vadd.f32 %v52, %v361
  %v363 = vpop.f32.mrf.mxu0
  %v364 = vadd.f32 %v52, %v363
  %v365 = vpop.f32.mrf.mxu0
  %v366 = vadd.f32 %v57, %v365
  %v367 = vpop.f32.mrf.mxu0
  %v368 = vadd.f32 %v57, %v367
  %369 = vmatprep.mubr.bf16.mxu0 0
  %370 = vmatmul.mubr.bf16.gmra.mxu0 %v228
  %v371 = vpop.f32.mrf.mxu0
  %v372 = vadd.f32 %v62, %v371
  %v373 = vpop.f32.mrf.mxu0
  %v374 = vadd.f32 %v62, %v373
  %v375 = vpop.f32.mrf.mxu0
  %v376 = vadd.f32 %v67, %v375
  %v377 = vpop.f32.mrf.mxu0
  %v378 = vadd.f32 %v67, %v377
  %379 = vdwg.mxu0
  %380 = vmatprep.subr.bf16.mxu0 0
  %381 = vmatpush1.bf16.msra.mxu0 0
  %382 = vmatprep.subr.bf16.mxu0 0
  %383 = vmatpush1.bf16.msra.mxu0 0
  %384 = vmatprep.subr.bf16.mxu0 0
  %385 = vmatpush1.bf16.msra.mxu0 0
  %386 = vmatprep.subr.bf16.mxu0 0
  %387 = vmatpush1.bf16.msra.mxu0 0
  %388 = vmatprep.subr.bf16.mxu0 0
  %389 = vmatpush1.bf16.msra.mxu0 0
  %390 = vmatprep.subr.bf16.mxu0 0
  %391 = vmatpush1.bf16.msra.mxu0 0
  %392 = vmatprep.subr.bf16.mxu0 0
  %393 = vmatpush1.bf16.msra.mxu0 0
  %394 = vmatprep.subr.bf16.mxu0 %v241
  %395 = vmatpush1.bf16.msra.mxu0 %v238
  %396 = vmatprep.subr.bf16.mxu0 0
  %397 = vmatpush2.bf16.msra.mxu0 0
  %398 = vmatprep.subr.bf16.mxu0 0
  %399 = vmatpush2.bf16.msra.mxu0 0
  %400 = vmatprep.subr.bf16.mxu0 0
  %401 = vmatpush2.bf16.msra.mxu0 0
  %402 = vmatprep.subr.bf16.mxu0 0
  %403 = vmatpush2.bf16.msra.mxu0 0
  %404 = vmatprep.subr.bf16.mxu0 0
  %405 = vmatpush2.bf16.msra.mxu0 0
  %406 = vmatprep.subr.bf16.mxu0 0
  %407 = vmatpush2.bf16.msra.mxu0 0
  %408 = vmatprep.subr.bf16.mxu0 0
  %409 = vmatpush2.bf16.msra.mxu0 0
  %410 = vmatprep.subr.bf16.mxu0 0
  %411 = vmatpush2.bf16.msra.mxu0 0
  %412 = vmatprep.mubr.bf16.mxu0 0
  %413 = vmatmul.mubr.bf16.gmra.mxu0 %v225
  %v414 = vpop.f32.mrf.mxu0
  %v415 = vadd.f32 %v52, %v414
  %v416 = vpop.f32.mrf.mxu0
  %v417 = vadd.f32 %v52, %v416
  %v418 = vpop.f32.mrf.mxu0
  %v419 = vadd.f32 %v57, %v418
  %v420 = vpop.f32.mrf.mxu0
  %v421 = vadd.f32 %v57, %v420
  %422 = vmatprep.mubr.bf16.mxu0 0
  %423 = vmatmul.mubr.bf16.gmra.mxu0 %v228
  %v424 = vpop.f32.mrf.mxu0
  %v425 = vadd.f32 %v62, %v424
  %v426 = vpop.f32.mrf.mxu0
  %v427 = vadd.f32 %v62, %v426
  %v428 = vpop.f32.mrf.mxu0
  %v429 = vadd.f32 %v67, %v428
  %v430 = vpop.f32.mrf.mxu0
  %v431 = vadd.f32 %v67, %v430
  %432 = vdwg.mxu0
  %433 = vmatprep.subr.bf16.mxu0 0
  %434 = vmatpush1.bf16.msra.mxu0 0
  %435 = vmatprep.subr.bf16.mxu0 0
  %436 = vmatpush1.bf16.msra.mxu0 0
  %437 = vmatprep.subr.bf16.mxu0 0
  %438 = vmatpush1.bf16.msra.mxu0 0
  %439 = vmatprep.subr.bf16.mxu0 0
  %440 = vmatpush1.bf16.msra.mxu0 0
  %441 = vmatprep.subr.bf16.mxu0 0
  %442 = vmatpush1.bf16.msra.mxu0 0
  %443 = vmatprep.subr.bf16.mxu0 0
  %444 = vmatpush1.bf16.msra.mxu0 0
  %445 = vmatprep.subr.bf16.mxu0 0
  %446 = vmatpush1.bf16.msra.mxu0 0
  %447 = vmatprep.subr.bf16.mxu0 %v247
  %448 = vmatpush1.bf16.msra.mxu0 %v244
  %449 = vmatprep.subr.bf16.mxu0 0
  %450 = vmatpush2.bf16.msra.mxu0 0
  %451 = vmatprep.subr.bf16.mxu0 0
  %452 = vmatpush2.bf16.msra.mxu0 0
  %453 = vmatprep.subr.bf16.mxu0 0
  %454 = vmatpush2.bf16.msra.mxu0 0
  %455 = vmatprep.subr.bf16.mxu0 0
  %456 = vmatpush2.bf16.msra.mxu0 0
  %457 = vmatprep.subr.bf16.mxu0 0
  %458 = vmatpush2.bf16.msra.mxu0 0
  %459 = vmatprep.subr.bf16.mxu0 0
  %460 = vmatpush2.bf16.msra.mxu0 0
  %461 = vmatprep.subr.bf16.mxu0 0
  %462 = vmatpush2.bf16.msra.mxu0 0
  %463 = vmatprep.subr.bf16.mxu0 0
  %464 = vmatpush2.bf16.msra.mxu0 0
  %465 = vmatprep.mubr.bf16.mxu0 0
  %466 = vmatmul.mubr.bf16.gmra.mxu0 %v225
  %v467 = vpop.f32.mrf.mxu0
  %v468 = vadd.f32 %v52, %v467
  %v469 = vpop.f32.mrf.mxu0
  %v470 = vadd.f32 %v52, %v469
  %v471 = vpop.f32.mrf.mxu0
  %v472 = vadd.f32 %v57, %v471
  %v473 = vpop.f32.mrf.mxu0
  %v474 = vadd.f32 %v57, %v473
  %475 = vmatprep.mubr.bf16.mxu0 0
  %476 = vmatmul.mubr.bf16.gmra.mxu0 %v228
  %v477 = vpop.f32.mrf.mxu0
  %v478 = vadd.f32 %v62, %v477
  %v479 = vpop.f32.mrf.mxu0
  %v480 = vadd.f32 %v62, %v479
  %v481 = vpop.f32.mrf.mxu0
  %v482 = vadd.f32 %v67, %v481
  %v483 = vpop.f32.mrf.mxu0
  %v484 = vadd.f32 %v67, %v483
  %485 = vdwg.mxu0
  %486 = vmatprep.subr.bf16.mxu0 0
  %487 = vmatpush1.bf16.msra.mxu0 0
  %488 = vmatprep.subr.bf16.mxu0 0
  %489 = vmatpush1.bf16.msra.mxu0 0
  %490 = vmatprep.subr.bf16.mxu0 0
  %491 = vmatpush1.bf16.msra.mxu0 0
  %492 = vmatprep.subr.bf16.mxu0 0
  %493 = vmatpush1.bf16.msra.mxu0 0
  %494 = vmatprep.subr.bf16.mxu0 0
  %495 = vmatpush1.bf16.msra.mxu0 0
  %496 = vmatprep.subr.bf16.mxu0 0
  %497 = vmatpush1.bf16.msra.mxu0 0
  %498 = vmatprep.subr.bf16.mxu0 0
  %499 = vmatpush1.bf16.msra.mxu0 0
  %500 = vmatprep.subr.bf16.mxu0 %v253
  %501 = vmatpush1.bf16.msra.mxu0 %v250
  %502 = vmatprep.subr.bf16.mxu0 0
  %503 = vmatpush2.bf16.msra.mxu0 0
  %504 = vmatprep.subr.bf16.mxu0 0
  %505 = vmatpush2.bf16.msra.mxu0 0
  %506 = vmatprep.subr.bf16.mxu0 0
  %507 = vmatpush2.bf16.msra.mxu0 0
  %508 = vmatprep.subr.bf16.mxu0 0
  %509 = vmatpush2.bf16.msra.mxu0 0
  %510 = vmatprep.subr.bf16.mxu0 0
  %511 = vmatpush2.bf16.msra.mxu0 0
  %512 = vmatprep.subr.bf16.mxu0 0
  %513 = vmatpush2.bf16.msra.mxu0 0
  %514 = vmatprep.subr.bf16.mxu0 0
  %515 = vmatpush2.bf16.msra.mxu0 0
  %516 = vmatprep.subr.bf16.mxu0 0
  %517 = vmatpush2.bf16.msra.mxu0 0
  %518 = vmatprep.mubr.bf16.mxu0 0
  %519 = vmatmul.mubr.bf16.gmra.mxu0 %v225
  %v520 = vpop.f32.mrf.mxu0
  %v521 = vadd.f32 %v52, %v520
  %v522 = vpop.f32.mrf.mxu0
  %v523 = vadd.f32 %v52, %v522
  %v524 = vpop.f32.mrf.mxu0
  %v525 = vadd.f32 %v57, %v524
  %v526 = vpop.f32.mrf.mxu0
  %v527 = vadd.f32 %v57, %v526
  %528 = vmatprep.mubr.bf16.mxu0 0
  %529 = vmatmul.mubr.bf16.gmra.mxu0 %v228
  %v530 = vpop.f32.mrf.mxu0
  %v531 = vadd.f32 %v62, %v530
  %v532 = vpop.f32.mrf.mxu0
  %v533 = vadd.f32 %v62, %v532
  %v534 = vpop.f32.mrf.mxu0
  %v535 = vadd.f32 %v67, %v534
  %v536 = vpop.f32.mrf.mxu0
  %v537 = vadd.f32 %v67, %v536
  %538 = vdwg.mxu0
  %539 = vmatprep.subr.bf16.mxu0 0
  %540 = vmatpush1.bf16.msra.mxu0 0
  %541 = vmatprep.subr.bf16.mxu0 0
  %542 = vmatpush1.bf16.msra.mxu0 0
  %543 = vmatprep.subr.bf16.mxu0 0
  %544 = vmatpush1.bf16.msra.mxu0 0
  %545 = vmatprep.subr.bf16.mxu0 0
  %546 = vmatpush1.bf16.msra.mxu0 0
  %547 = vmatprep.subr.bf16.mxu0 0
  %548 = vmatpush1.bf16.msra.mxu0 0
  %549 = vmatprep.subr.bf16.mxu0 0
  %550 = vmatpush1.bf16.msra.mxu0 0
  %551 = vmatprep.subr.bf16.mxu0 0
  %552 = vmatpush1.bf16.msra.mxu0 0
  %553 = vmatprep.subr.bf16.mxu0 %v259
  %554 = vmatpush1.bf16.msra.mxu0 %v256
  %555 = vmatprep.subr.bf16.mxu0 0
  %556 = vmatpush2.bf16.msra.mxu0 0
  %557 = vmatprep.subr.bf16.mxu0 0
  %558 = vmatpush2.bf16.msra.mxu0 0
  %559 = vmatprep.subr.bf16.mxu0 0
  %560 = vmatpush2.bf16.msra.mxu0 0
  %561 = vmatprep.subr.bf16.mxu0 0
  %562 = vmatpush2.bf16.msra.mxu0 0
  %563 = vmatprep.subr.bf16.mxu0 0
  %564 = vmatpush2.bf16.msra.mxu0 0
  %565 = vmatprep.subr.bf16.mxu0 0
  %566 = vmatpush2.bf16.msra.mxu0 0
  %567 = vmatprep.subr.bf16.mxu0 0
  %568 = vmatpush2.bf16.msra.mxu0 0
  %569 = vmatprep.subr.bf16.mxu0 0
  %570 = vmatpush2.bf16.msra.mxu0 0
  %571 = vmatprep.mubr.bf16.mxu0 0
  %572 = vmatmul.mubr.bf16.gmra.mxu0 %v225
  %v573 = vpop.f32.mrf.mxu0
  %v574 = vadd.f32 %v52, %v573
  %v575 = vpop.f32.mrf.mxu0
  %v576 = vadd.f32 %v52, %v575
  %v577 = vpop.f32.mrf.mxu0
  %v578 = vadd.f32 %v57, %v577
  %v579 = vpop.f32.mrf.mxu0
  %v580 = vadd.f32 %v57, %v579
  %581 = vmatprep.mubr.bf16.mxu0 0
  %582 = vmatmul.mubr.bf16.gmra.mxu0 %v228
  %v583 = vpop.f32.mrf.mxu0
  %v584 = vadd.f32 %v62, %v583
  %v585 = vpop.f32.mrf.mxu0
  %v586 = vadd.f32 %v62, %v585
  %v587 = vpop.f32.mrf.mxu0
  %v588 = vadd.f32 %v67, %v587
  %v589 = vpop.f32.mrf.mxu0
  %v590 = vadd.f32 %v67, %v589
  %591 = vdwg.mxu0
  %592 = vmatprep.subr.bf16.mxu0 0
  %593 = vmatpush1.bf16.msra.mxu0 0
  %594 = vmatprep.subr.bf16.mxu0 0
  %595 = vmatpush1.bf16.msra.mxu0 0
  %596 = vmatprep.subr.bf16.mxu0 0
  %597 = vmatpush1.bf16.msra.mxu0 0
  %598 = vmatprep.subr.bf16.mxu0 0
  %599 = vmatpush1.bf16.msra.mxu0 0
  %600 = vmatprep.subr.bf16.mxu0 0
  %601 = vmatpush1.bf16.msra.mxu0 0
  %602 = vmatprep.subr.bf16.mxu0 0
  %603 = vmatpush1.bf16.msra.mxu0 0
  %604 = vmatprep.subr.bf16.mxu0 0
  %605 = vmatpush1.bf16.msra.mxu0 0
  %606 = vmatprep.subr.bf16.mxu0 %v265
  %607 = vmatpush1.bf16.msra.mxu0 %v262
  %608 = vmatprep.subr.bf16.mxu0 0
  %609 = vmatpush2.bf16.msra.mxu0 0
  %610 = vmatprep.subr.bf16.mxu0 0
  %611 = vmatpush2.bf16.msra.mxu0 0
  %612 = vmatprep.subr.bf16.mxu0 0
  %613 = vmatpush2.bf16.msra.mxu0 0
  %614 = vmatprep.subr.bf16.mxu0 0
  %615 = vmatpush2.bf16.msra.mxu0 0
  %616 = vmatprep.subr.bf16.mxu0 0
  %617 = vmatpush2.bf16.msra.mxu0 0
  %618 = vmatprep.subr.bf16.mxu0 0
  %619 = vmatpush2.bf16.msra.mxu0 0
  %620 = vmatprep.subr.bf16.mxu0 0
  %621 = vmatpush2.bf16.msra.mxu0 0
  %622 = vmatprep.subr.bf16.mxu0 0
  %623 = vmatpush2.bf16.msra.mxu0 0
  %624 = vmatprep.mubr.bf16.mxu0 0
  %625 = vmatmul.mubr.bf16.gmra.mxu0 %v225
  %v626 = vpop.f32.mrf.mxu0
  %v627 = vadd.f32 %v52, %v626
  %v628 = vpop.f32.mrf.mxu0
  %v629 = vadd.f32 %v52, %v628
  %v630 = vpop.f32.mrf.mxu0
  %v631 = vadd.f32 %v57, %v630
  %v632 = vpop.f32.mrf.mxu0
  %v633 = vadd.f32 %v57, %v632
  %634 = vmatprep.mubr.bf16.mxu0 0
  %635 = vmatmul.mubr.bf16.gmra.mxu0 %v228
  %v636 = vpop.f32.mrf.mxu0
  %v637 = vadd.f32 %v62, %v636
  %v638 = vpop.f32.mrf.mxu0
  %v639 = vadd.f32 %v62, %v638
  %v640 = vpop.f32.mrf.mxu0
  %v641 = vadd.f32 %v67, %v640
  %v642 = vpop.f32.mrf.mxu0
  %v643 = vadd.f32 %v67, %v642
  %644 = vdwg.mxu0
  %645 = vmatprep.subr.bf16.mxu0 0
  %646 = vmatpush1.bf16.msra.mxu0 0
  %647 = vmatprep.subr.bf16.mxu0 0
  %648 = vmatpush1.bf16.msra.mxu0 0
  %649 = vmatprep.subr.bf16.mxu0 0
  %650 = vmatpush1.bf16.msra.mxu0 0
  %651 = vmatprep.subr.bf16.mxu0 0
  %652 = vmatpush1.bf16.msra.mxu0 0
  %653 = vmatprep.subr.bf16.mxu0 0
  %654 = vmatpush1.bf16.msra.mxu0 0
  %655 = vmatprep.subr.bf16.mxu0 0
  %656 = vmatpush1.bf16.msra.mxu0 0
  %657 = vmatprep.subr.bf16.mxu0 0
  %658 = vmatpush1.bf16.msra.mxu0 0
  %659 = vmatprep.subr.bf16.mxu0 %v271
  %660 = vmatpush1.bf16.msra.mxu0 %v268
  %661 = vmatprep.subr.bf16.mxu0 0
  %662 = vmatpush2.bf16.msra.mxu0 0
  %663 = vmatprep.subr.bf16.mxu0 0
  %664 = vmatpush2.bf16.msra.mxu0 0
  %665 = vmatprep.subr.bf16.mxu0 0
  %666 = vmatpush2.bf16.msra.mxu0 0
  %667 = vmatprep.subr.bf16.mxu0 0
  %668 = vmatpush2.bf16.msra.mxu0 0
  %669 = vmatprep.subr.bf16.mxu0 0
  %670 = vmatpush2.bf16.msra.mxu0 0
  %671 = vmatprep.subr.bf16.mxu0 0
  %672 = vmatpush2.bf16.msra.mxu0 0
  %673 = vmatprep.subr.bf16.mxu0 0
  %674 = vmatpush2.bf16.msra.mxu0 0
  %675 = vmatprep.subr.bf16.mxu0 0
  %676 = vmatpush2.bf16.msra.mxu0 0
  %677 = vmatprep.mubr.bf16.mxu0 0
  %678 = vmatmul.mubr.bf16.gmra.mxu0 %v225
  %v679 = vpop.f32.mrf.mxu0
  %v680 = vadd.f32 %v52, %v679
  %v681 = vpop.f32.mrf.mxu0
  %v682 = vadd.f32 %v52, %v681
  %v683 = vpop.f32.mrf.mxu0
  %v684 = vadd.f32 %v57, %v683
  %v685 = vpop.f32.mrf.mxu0
  %v686 = vadd.f32 %v57, %v685
  %687 = vmatprep.mubr.bf16.mxu0 0
  %688 = vmatmul.mubr.bf16.gmra.mxu0 %v228
  %v689 = vpop.f32.mrf.mxu0
  %v690 = vadd.f32 %v62, %v689
  %v691 = vpop.f32.mrf.mxu0
  %v692 = vadd.f32 %v62, %v691
  %v693 = vpop.f32.mrf.mxu0
  %v694 = vadd.f32 %v67, %v693
  %v695 = vpop.f32.mrf.mxu0
  %v696 = vadd.f32 %v67, %v695
  %697 = vdwg.mxu0
  %698 = vmatprep.subr.bf16.mxu0 0
  %699 = vmatpush1.bf16.msra.mxu0 0
  %700 = vmatprep.subr.bf16.mxu0 0
  %701 = vmatpush1.bf16.msra.mxu0 0
  %702 = vmatprep.subr.bf16.mxu0 0
  %703 = vmatpush1.bf16.msra.mxu0 0
  %704 = vmatprep.subr.bf16.mxu0 0
  %705 = vmatpush1.bf16.msra.mxu0 0
  %706 = vmatprep.subr.bf16.mxu0 0
  %707 = vmatpush1.bf16.msra.mxu0 0
  %708 = vmatprep.subr.bf16.mxu0 0
  %709 = vmatpush1.bf16.msra.mxu0 0
  %710 = vmatprep.subr.bf16.mxu0 0
  %711 = vmatpush1.bf16.msra.mxu0 0
  %712 = vmatprep.subr.bf16.mxu0 %v277
  %713 = vmatpush1.bf16.msra.mxu0 %v274
  %714 = vmatprep.subr.bf16.mxu0 0
  %715 = vmatpush2.bf16.msra.mxu0 0
  %716 = vmatprep.subr.bf16.mxu0 0
  %717 = vmatpush2.bf16.msra.mxu0 0
  %718 = vmatprep.subr.bf16.mxu0 0
  %719 = vmatpush2.bf16.msra.mxu0 0
  %720 = vmatprep.subr.bf16.mxu0 0
  %721 = vmatpush2.bf16.msra.mxu0 0
  %722 = vmatprep.subr.bf16.mxu0 0
  %723 = vmatpush2.bf16.msra.mxu0 0
  %724 = vmatprep.subr.bf16.mxu0 0
  %725 = vmatpush2.bf16.msra.mxu0 0
  %726 = vmatprep.subr.bf16.mxu0 0
  %727 = vmatpush2.bf16.msra.mxu0 0
  %728 = vmatprep.subr.bf16.mxu0 0
  %729 = vmatpush2.bf16.msra.mxu0 0
  %730 = vmatprep.mubr.bf16.mxu0 0
  %731 = vmatmul.mubr.bf16.gmra.mxu0 %v225
  %v732 = vpop.f32.mrf.mxu0
  %v733 = vadd.f32 %v52, %v732
  %v734 = vpop.f32.mrf.mxu0
  %v735 = vadd.f32 %v52, %v734
  %v736 = vpop.f32.mrf.mxu0
  %v737 = vadd.f32 %v57, %v736
  %v738 = vpop.f32.mrf.mxu0
  %v739 = vadd.f32 %v57, %v738
  %740 = vmatprep.mubr.bf16.mxu0 0
  %741 = vmatmul.mubr.bf16.gmra.mxu0 %v228
  %v742 = vpop.f32.mrf.mxu0
  %v743 = vadd.f32 %v62, %v742
  %v744 = vpop.f32.mrf.mxu0
  %v745 = vadd.f32 %v62, %v744
  %v746 = vpop.f32.mrf.mxu0
  %v747 = vadd.f32 %v67, %v746
  %v748 = vpop.f32.mrf.mxu0
  %v749 = vadd.f32 %v67, %v748
  %750 = vdwg.mxu0
  %751 = vmatprep.subr.bf16.mxu0 0
  %752 = vmatpush1.bf16.msra.mxu0 0
  %753 = vmatprep.subr.bf16.mxu0 0
  %754 = vmatpush1.bf16.msra.mxu0 0
  %755 = vmatprep.subr.bf16.mxu0 0
  %756 = vmatpush1.bf16.msra.mxu0 0
  %757 = vmatprep.subr.bf16.mxu0 0
  %758 = vmatpush1.bf16.msra.mxu0 0
  %759 = vmatprep.subr.bf16.mxu0 0
  %760 = vmatpush1.bf16.msra.mxu0 0
  %761 = vmatprep.subr.bf16.mxu0 0
  %762 = vmatpush1.bf16.msra.mxu0 0
  %763 = vmatprep.subr.bf16.mxu0 0
  %764 = vmatpush1.bf16.msra.mxu0 0
  %765 = vmatprep.subr.bf16.mxu0 %v283
  %766 = vmatpush1.bf16.msra.mxu0 %v280
  %767 = vmatprep.subr.bf16.mxu0 0
  %768 = vmatpush2.bf16.msra.mxu0 0
  %769 = vmatprep.subr.bf16.mxu0 0
  %770 = vmatpush2.bf16.msra.mxu0 0
  %771 = vmatprep.subr.bf16.mxu0 0
  %772 = vmatpush2.bf16.msra.mxu0 0
  %773 = vmatprep.subr.bf16.mxu0 0
  %774 = vmatpush2.bf16.msra.mxu0 0
  %775 = vmatprep.subr.bf16.mxu0 0
  %776 = vmatpush2.bf16.msra.mxu0 0
  %777 = vmatprep.subr.bf16.mxu0 0
  %778 = vmatpush2.bf16.msra.mxu0 0
  %779 = vmatprep.subr.bf16.mxu0 0
  %780 = vmatpush2.bf16.msra.mxu0 0
  %781 = vmatprep.subr.bf16.mxu0 0
  %782 = vmatpush2.bf16.msra.mxu0 0
  %783 = vmatprep.mubr.bf16.mxu0 0
  %784 = vmatmul.mubr.bf16.gmra.mxu0 %v225
  %v785 = vpop.f32.mrf.mxu0
  %v786 = vadd.f32 %v52, %v785
  %v787 = vpop.f32.mrf.mxu0
  %v788 = vadd.f32 %v52, %v787
  %v789 = vpop.f32.mrf.mxu0
  %v790 = vadd.f32 %v57, %v789
  %v791 = vpop.f32.mrf.mxu0
  %v792 = vadd.f32 %v57, %v791
  %793 = vmatprep.mubr.bf16.mxu0 0
  %794 = vmatmul.mubr.bf16.gmra.mxu0 %v228
  %v795 = vpop.f32.mrf.mxu0
  %v796 = vadd.f32 %v62, %v795
  %v797 = vpop.f32.mrf.mxu0
  %v798 = vadd.f32 %v62, %v797
  %v799 = vpop.f32.mrf.mxu0
  %v800 = vadd.f32 %v67, %v799
  %v801 = vpop.f32.mrf.mxu0
  %v802 = vadd.f32 %v67, %v801
  %803 = vdwg.mxu0
  %804 = vmatprep.subr.bf16.mxu0 0
  %805 = vmatpush1.bf16.msra.mxu0 0
  %806 = vmatprep.subr.bf16.mxu0 0
  %807 = vmatpush1.bf16.msra.mxu0 0
  %808 = vmatprep.subr.bf16.mxu0 0
  %809 = vmatpush1.bf16.msra.mxu0 0
  %810 = vmatprep.subr.bf16.mxu0 0
  %811 = vmatpush1.bf16.msra.mxu0 0
  %812 = vmatprep.subr.bf16.mxu0 0
  %813 = vmatpush1.bf16.msra.mxu0 0
  %814 = vmatprep.subr.bf16.mxu0 0
  %815 = vmatpush1.bf16.msra.mxu0 0
  %816 = vmatprep.subr.bf16.mxu0 0
  %817 = vmatpush1.bf16.msra.mxu0 0
  %818 = vmatprep.subr.bf16.mxu0 %v289
  %819 = vmatpush1.bf16.msra.mxu0 %v286
  %820 = vmatprep.subr.bf16.mxu0 0
  %821 = vmatpush2.bf16.msra.mxu0 0
  %822 = vmatprep.subr.bf16.mxu0 0
  %823 = vmatpush2.bf16.msra.mxu0 0
  %824 = vmatprep.subr.bf16.mxu0 0
  %825 = vmatpush2.bf16.msra.mxu0 0
  %826 = vmatprep.subr.bf16.mxu0 0
  %827 = vmatpush2.bf16.msra.mxu0 0
  %828 = vmatprep.subr.bf16.mxu0 0
  %829 = vmatpush2.bf16.msra.mxu0 0
  %830 = vmatprep.subr.bf16.mxu0 0
  %831 = vmatpush2.bf16.msra.mxu0 0
  %832 = vmatprep.subr.bf16.mxu0 0
  %833 = vmatpush2.bf16.msra.mxu0 0
  %834 = vmatprep.subr.bf16.mxu0 0
  %835 = vmatpush2.bf16.msra.mxu0 0
  %836 = vmatprep.mubr.bf16.mxu0 0
  %837 = vmatmul.mubr.bf16.gmra.mxu0 %v225
  %v838 = vpop.f32.mrf.mxu0
  %v839 = vadd.f32 %v52, %v838
  %v840 = vpop.f32.mrf.mxu0
  %v841 = vadd.f32 %v52, %v840
  %v842 = vpop.f32.mrf.mxu0
  %v843 = vadd.f32 %v57, %v842
  %v844 = vpop.f32.mrf.mxu0
  %v845 = vadd.f32 %v57, %v844
  %846 = vmatprep.mubr.bf16.mxu0 0
  %847 = vmatmul.mubr.bf16.gmra.mxu0 %v228
  %v848 = vpop.f32.mrf.mxu0
  %v849 = vadd.f32 %v62, %v848
  %v850 = vpop.f32.mrf.mxu0
  %v851 = vadd.f32 %v62, %v850
  %v852 = vpop.f32.mrf.mxu0
  %v853 = vadd.f32 %v67, %v852
  %v854 = vpop.f32.mrf.mxu0
  %v855 = vadd.f32 %v67, %v854
  %856 = vdwg.mxu0
  %857 = vmatprep.subr.bf16.mxu0 0
  %858 = vmatpush1.bf16.msra.mxu0 0
  %859 = vmatprep.subr.bf16.mxu0 0
  %860 = vmatpush1.bf16.msra.mxu0 0
  %861 = vmatprep.subr.bf16.mxu0 0
  %862 = vmatpush1.bf16.msra.mxu0 0
  %863 = vmatprep.subr.bf16.mxu0 0
  %864 = vmatpush1.bf16.msra.mxu0 0
  %865 = vmatprep.subr.bf16.mxu0 0
  %866 = vmatpush1.bf16.msra.mxu0 0
  %867 = vmatprep.subr.bf16.mxu0 0
  %868 = vmatpush1.bf16.msra.mxu0 0
  %869 = vmatprep.subr.bf16.mxu0 0
  %870 = vmatpush1.bf16.msra.mxu0 0
  %871 = vmatprep.subr.bf16.mxu0 %v295
  %872 = vmatpush1.bf16.msra.mxu0 %v292
  %873 = vmatprep.subr.bf16.mxu0 0
  %874 = vmatpush2.bf16.msra.mxu0 0
  %875 = vmatprep.subr.bf16.mxu0 0
  %876 = vmatpush2.bf16.msra.mxu0 0
  %877 = vmatprep.subr.bf16.mxu0 0
  %878 = vmatpush2.bf16.msra.mxu0 0
  %879 = vmatprep.subr.bf16.mxu0 0
  %880 = vmatpush2.bf16.msra.mxu0 0
  %881 = vmatprep.subr.bf16.mxu0 0
  %882 = vmatpush2.bf16.msra.mxu0 0
  %883 = vmatprep.subr.bf16.mxu0 0
  %884 = vmatpush2.bf16.msra.mxu0 0
  %885 = vmatprep.subr.bf16.mxu0 0
  %886 = vmatpush2.bf16.msra.mxu0 0
  %887 = vmatprep.subr.bf16.mxu0 0
  %888 = vmatpush2.bf16.msra.mxu0 0
  %889 = vmatprep.mubr.bf16.mxu0 0
  %890 = vmatmul.mubr.bf16.gmra.mxu0 %v225
  %v891 = vpop.f32.mrf.mxu0
  %v892 = vadd.f32 %v52, %v891
  %v893 = vpop.f32.mrf.mxu0
  %v894 = vadd.f32 %v52, %v893
  %v895 = vpop.f32.mrf.mxu0
  %v896 = vadd.f32 %v57, %v895
  %v897 = vpop.f32.mrf.mxu0
  %v898 = vadd.f32 %v57, %v897
  %899 = vmatprep.mubr.bf16.mxu0 0
  %900 = vmatmul.mubr.bf16.gmra.mxu0 %v228
  %v901 = vpop.f32.mrf.mxu0
  %v902 = vadd.f32 %v62, %v901
  %v903 = vpop.f32.mrf.mxu0
  %v904 = vadd.f32 %v62, %v903
  %v905 = vpop.f32.mrf.mxu0
  %v906 = vadd.f32 %v67, %v905
  %v907 = vpop.f32.mrf.mxu0
  %v908 = vadd.f32 %v67, %v907
  %909 = vdwg.mxu0
  %910 = vmatprep.subr.bf16.mxu0 0
  %911 = vmatpush1.bf16.msra.mxu0 0
  %912 = vmatprep.subr.bf16.mxu0 0
  %913 = vmatpush1.bf16.msra.mxu0 0
  %914 = vmatprep.subr.bf16.mxu0 0
  %915 = vmatpush1.bf16.msra.mxu0 0
  %916 = vmatprep.subr.bf16.mxu0 0
  %917 = vmatpush1.bf16.msra.mxu0 0
  %918 = vmatprep.subr.bf16.mxu0 0
  %919 = vmatpush1.bf16.msra.mxu0 0
  %920 = vmatprep.subr.bf16.mxu0 0
  %921 = vmatpush1.bf16.msra.mxu0 0
  %922 = vmatprep.subr.bf16.mxu0 0
  %923 = vmatpush1.bf16.msra.mxu0 0
  %924 = vmatprep.subr.bf16.mxu0 %v301
  %925 = vmatpush1.bf16.msra.mxu0 %v298
  %926 = vmatprep.subr.bf16.mxu0 0
  %927 = vmatpush2.bf16.msra.mxu0 0
  %928 = vmatprep.subr.bf16.mxu0 0
  %929 = vmatpush2.bf16.msra.mxu0 0
  %930 = vmatprep.subr.bf16.mxu0 0
  %931 = vmatpush2.bf16.msra.mxu0 0
  %932 = vmatprep.subr.bf16.mxu0 0
  %933 = vmatpush2.bf16.msra.mxu0 0
  %934 = vmatprep.subr.bf16.mxu0 0
  %935 = vmatpush2.bf16.msra.mxu0 0
  %936 = vmatprep.subr.bf16.mxu0 0
  %937 = vmatpush2.bf16.msra.mxu0 0
  %938 = vmatprep.subr.bf16.mxu0 0
  %939 = vmatpush2.bf16.msra.mxu0 0
  %940 = vmatprep.subr.bf16.mxu0 0
  %941 = vmatpush2.bf16.msra.mxu0 0
  %942 = vmatprep.mubr.bf16.mxu0 0
  %943 = vmatmul.mubr.bf16.gmra.mxu0 %v225
  %v944 = vpop.f32.mrf.mxu0
  %v945 = vadd.f32 %v52, %v944
  %v946 = vpop.f32.mrf.mxu0
  %v947 = vadd.f32 %v52, %v946
  %v948 = vpop.f32.mrf.mxu0
  %v949 = vadd.f32 %v57, %v948
  %v950 = vpop.f32.mrf.mxu0
  %v951 = vadd.f32 %v57, %v950
  %952 = vmatprep.mubr.bf16.mxu0 0
  %953 = vmatmul.mubr.bf16.gmra.mxu0 %v228
  %v954 = vpop.f32.mrf.mxu0
  %v955 = vadd.f32 %v62, %v954
  %v956 = vpop.f32.mrf.mxu0
  %v957 = vadd.f32 %v62, %v956
  %v958 = vpop.f32.mrf.mxu0
  %v959 = vadd.f32 %v67, %v958
  %v960 = vpop.f32.mrf.mxu0
  %v961 = vadd.f32 %v67, %v960
  %962 = vdwg.mxu0
  %963 = vmatprep.subr.bf16.mxu0 0
  %964 = vmatpush1.bf16.msra.mxu0 0
  %965 = vmatprep.subr.bf16.mxu0 0
  %966 = vmatpush1.bf16.msra.mxu0 0
  %967 = vmatprep.subr.bf16.mxu0 0
  %968 = vmatpush1.bf16.msra.mxu0 0
  %969 = vmatprep.subr.bf16.mxu0 0
  %970 = vmatpush1.bf16.msra.mxu0 0
  %971 = vmatprep.subr.bf16.mxu0 0
  %972 = vmatpush1.bf16.msra.mxu0 0
  %973 = vmatprep.subr.bf16.mxu0 0
  %974 = vmatpush1.bf16.msra.mxu0 0
  %975 = vmatprep.subr.bf16.mxu0 0
  %976 = vmatpush1.bf16.msra.mxu0 0
  %977 = vmatprep.subr.bf16.mxu0 %v307
  %978 = vmatpush1.bf16.msra.mxu0 %v304
  %979 = vmatprep.subr.bf16.mxu0 0
  %980 = vmatpush2.bf16.msra.mxu0 0
  %981 = vmatprep.subr.bf16.mxu0 0
  %982 = vmatpush2.bf16.msra.mxu0 0
  %983 = vmatprep.subr.bf16.mxu0 0
  %984 = vmatpush2.bf16.msra.mxu0 0
  %985 = vmatprep.subr.bf16.mxu0 0
  %986 = vmatpush2.bf16.msra.mxu0 0
  %987 = vmatprep.subr.bf16.mxu0 0
  %988 = vmatpush2.bf16.msra.mxu0 0
  %989 = vmatprep.subr.bf16.mxu0 0
  %990 = vmatpush2.bf16.msra.mxu0 0
  %991 = vmatprep.subr.bf16.mxu0 0
  %992 = vmatpush2.bf16.msra.mxu0 0
  %993 = vmatprep.subr.bf16.mxu0 0
  %994 = vmatpush2.bf16.msra.mxu0 0
  %995 = vmatprep.mubr.bf16.mxu0 0
  %996 = vmatmul.mubr.bf16.gmra.mxu0 %v225
  %v997 = vpop.f32.mrf.mxu0
  %v998 = vadd.f32 %v52, %v997
  %v999 = vpop.f32.mrf.mxu0
  %v1000 = vadd.f32 %v52, %v999
  %v1001 = vpop.f32.mrf.mxu0
  %v1002 = vadd.f32 %v57, %v1001
  %v1003 = vpop.f32.mrf.mxu0
  %v1004 = vadd.f32 %v57, %v1003
  %1005 = vmatprep.mubr.bf16.mxu0 0
  %1006 = vmatmul.mubr.bf16.gmra.mxu0 %v228
  %v1007 = vpop.f32.mrf.mxu0
  %v1008 = vadd.f32 %v62, %v1007
  %v1009 = vpop.f32.mrf.mxu0
  %v1010 = vadd.f32 %v62, %v1009
  %v1011 = vpop.f32.mrf.mxu0
  %v1012 = vadd.f32 %v67, %v1011
  %v1013 = vpop.f32.mrf.mxu0
  %v1014 = vadd.f32 %v67, %v1013
  %1015 = vdwg.mxu0
  %1016 = vmatprep.subr.bf16.mxu0 0
  %1017 = vmatpush1.bf16.msra.mxu0 0
  %1018 = vmatprep.subr.bf16.mxu0 0
  %1019 = vmatpush1.bf16.msra.mxu0 0
  %1020 = vmatprep.subr.bf16.mxu0 0
  %1021 = vmatpush1.bf16.msra.mxu0 0
  %1022 = vmatprep.subr.bf16.mxu0 0
  %1023 = vmatpush1.bf16.msra.mxu0 0
  %1024 = vmatprep.subr.bf16.mxu0 0
  %1025 = vmatpush1.bf16.msra.mxu0 0
  %1026 = vmatprep.subr.bf16.mxu0 0
  %1027 = vmatpush1.bf16.msra.mxu0 0
  %1028 = vmatprep.subr.bf16.mxu0 0
  %1029 = vmatpush1.bf16.msra.mxu0 0
  %1030 = vmatprep.subr.bf16.mxu0 %v313
  %1031 = vmatpush1.bf16.msra.mxu0 %v310
  %1032 = vmatprep.subr.bf16.mxu0 0
  %1033 = vmatpush2.bf16.msra.mxu0 0
  %1034 = vmatprep.subr.bf16.mxu0 0
  %1035 = vmatpush2.bf16.msra.mxu0 0
  %1036 = vmatprep.subr.bf16.mxu0 0
  %1037 = vmatpush2.bf16.msra.mxu0 0
  %1038 = vmatprep.subr.bf16.mxu0 0
  %1039 = vmatpush2.bf16.msra.mxu0 0
  %1040 = vmatprep.subr.bf16.mxu0 0
  %1041 = vmatpush2.bf16.msra.mxu0 0
  %1042 = vmatprep.subr.bf16.mxu0 0
  %1043 = vmatpush2.bf16.msra.mxu0 0
  %1044 = vmatprep.subr.bf16.mxu0 0
  %1045 = vmatpush2.bf16.msra.mxu0 0
  %1046 = vmatprep.subr.bf16.mxu0 0
  %1047 = vmatpush2.bf16.msra.mxu0 0
  %1048 = vmatprep.mubr.bf16.mxu0 0
  %1049 = vmatmul.mubr.bf16.gmra.mxu0 %v225
  %v1050 = vpop.f32.mrf.mxu0
  %v1051 = vadd.f32 %v52, %v1050
  %v1052 = vpop.f32.mrf.mxu0
  %v1053 = vadd.f32 %v52, %v1052
  %v1054 = vpop.f32.mrf.mxu0
  %v1055 = vadd.f32 %v57, %v1054
  %v1056 = vpop.f32.mrf.mxu0
  %v1057 = vadd.f32 %v57, %v1056
  %1058 = vmatprep.mubr.bf16.mxu0 0
  %1059 = vmatmul.mubr.bf16.gmra.mxu0 %v228
  %v1060 = vpop.f32.mrf.mxu0
  %v1061 = vadd.f32 %v62, %v1060
  %v1062 = vpop.f32.mrf.mxu0
  %v1063 = vadd.f32 %v62, %v1062
  %v1064 = vpop.f32.mrf.mxu0
  %v1065 = vadd.f32 %v67, %v1064
  %v1066 = vpop.f32.mrf.mxu0
  %v1067 = vadd.f32 %v67, %v1066
  %1068 = vdwg.mxu0
  %1069 = vmatprep.subr.bf16.mxu0 0
  %1070 = vmatpush1.bf16.msra.mxu0 0
  %1071 = vmatprep.subr.bf16.mxu0 0
  %1072 = vmatpush1.bf16.msra.mxu0 0
  %1073 = vmatprep.subr.bf16.mxu0 0
  %1074 = vmatpush1.bf16.msra.mxu0 0
  %1075 = vmatprep.subr.bf16.mxu0 0
  %1076 = vmatpush1.bf16.msra.mxu0 0
  %1077 = vmatprep.subr.bf16.mxu0 0
  %1078 = vmatpush1.bf16.msra.mxu0 0
  %1079 = vmatprep.subr.bf16.mxu0 0
  %1080 = vmatpush1.bf16.msra.mxu0 0
  %1081 = vmatprep.subr.bf16.mxu0 0
  %1082 = vmatpush1.bf16.msra.mxu0 0
  %1083 = vmatprep.subr.bf16.mxu0 %v319
  %1084 = vmatpush1.bf16.msra.mxu0 %v316
  %1085 = vmatprep.subr.bf16.mxu0 0
  %1086 = vmatpush2.bf16.msra.mxu0 0
  %1087 = vmatprep.subr.bf16.mxu0 0
  %1088 = vmatpush2.bf16.msra.mxu0 0
  %1089 = vmatprep.subr.bf16.mxu0 0
  %1090 = vmatpush2.bf16.msra.mxu0 0
  %1091 = vmatprep.subr.bf16.mxu0 0
  %1092 = vmatpush2.bf16.msra.mxu0 0
  %1093 = vmatprep.subr.bf16.mxu0 0
  %1094 = vmatpush2.bf16.msra.mxu0 0
  %1095 = vmatprep.subr.bf16.mxu0 0
  %1096 = vmatpush2.bf16.msra.mxu0 0
  %1097 = vmatprep.subr.bf16.mxu0 0
  %1098 = vmatpush2.bf16.msra.mxu0 0
  %1099 = vmatprep.subr.bf16.mxu0 0
  %1100 = vmatpush2.bf16.msra.mxu0 0
  %1101 = vmatprep.mubr.bf16.mxu0 0
  %1102 = vmatmul.mubr.bf16.gmra.mxu0 %v225
  %v1103 = vpop.f32.mrf.mxu0
  %v1104 = vadd.f32 %v52, %v1103
  %v1105 = vpop.f32.mrf.mxu0
  %v1106 = vadd.f32 %v52, %v1105
  %v1107 = vpop.f32.mrf.mxu0
  %v1108 = vadd.f32 %v57, %v1107
  %v1109 = vpop.f32.mrf.mxu0
  %v1110 = vadd.f32 %v57, %v1109
  %1111 = vmatprep.mubr.bf16.mxu0 0
  %1112 = vmatmul.mubr.bf16.gmra.mxu0 %v228
  %v1113 = vpop.f32.mrf.mxu0
  %v1114 = vadd.f32 %v62, %v1113
  %v1115 = vpop.f32.mrf.mxu0
  %v1116 = vadd.f32 %v62, %v1115
  %v1117 = vpop.f32.mrf.mxu0
  %v1118 = vadd.f32 %v67, %v1117
  %v1119 = vpop.f32.mrf.mxu0
  %v1120 = vadd.f32 %v67, %v1119
  %1121 = vdwg.mxu0
  %1122 = vmatprep.subr.bf16.mxu0 0
  %1123 = vmatpush1.bf16.msra.mxu0 0
  %1124 = vmatprep.subr.bf16.mxu0 0
  %1125 = vmatpush1.bf16.msra.mxu0 0
  %1126 = vmatprep.subr.bf16.mxu0 0
  %1127 = vmatpush1.bf16.msra.mxu0 0
  %1128 = vmatprep.subr.bf16.mxu0 0
  %1129 = vmatpush1.bf16.msra.mxu0 0
  %1130 = vmatprep.subr.bf16.mxu0 0
  %1131 = vmatpush1.bf16.msra.mxu0 0
  %1132 = vmatprep.subr.bf16.mxu0 0
  %1133 = vmatpush1.bf16.msra.mxu0 0
  %1134 = vmatprep.subr.bf16.mxu0 0
  %1135 = vmatpush1.bf16.msra.mxu0 0
  %1136 = vmatprep.subr.bf16.mxu0 %v325
  %1137 = vmatpush1.bf16.msra.mxu0 %v322
  %1138 = vmatprep.subr.bf16.mxu0 0
  %1139 = vmatpush2.bf16.msra.mxu0 0
  %1140 = vmatprep.subr.bf16.mxu0 0
  %1141 = vmatpush2.bf16.msra.mxu0 0
  %1142 = vmatprep.subr.bf16.mxu0 0
  %1143 = vmatpush2.bf16.msra.mxu0 0
  %1144 = vmatprep.subr.bf16.mxu0 0
  %1145 = vmatpush2.bf16.msra.mxu0 0
  %1146 = vmatprep.subr.bf16.mxu0 0
  %1147 = vmatpush2.bf16.msra.mxu0 0
  %1148 = vmatprep.subr.bf16.mxu0 0
  %1149 = vmatpush2.bf16.msra.mxu0 0
  %1150 = vmatprep.subr.bf16.mxu0 0
  %1151 = vmatpush2.bf16.msra.mxu0 0
  %1152 = vmatprep.subr.bf16.mxu0 0
  %1153 = vmatpush2.bf16.msra.mxu0 0
  %1154 = vmatprep.mubr.bf16.mxu0 0
  %1155 = vmatmul.mubr.bf16.gmra.mxu0 %v225
  %v1156 = vpop.f32.mrf.mxu0
  %v1157 = vadd.f32 %v52, %v1156
  %v1158 = vpop.f32.mrf.mxu0
  %v1159 = vadd.f32 %v52, %v1158
  %v1160 = vpop.f32.mrf.mxu0
  %v1161 = vadd.f32 %v57, %v1160
  %v1162 = vpop.f32.mrf.mxu0
  %v1163 = vadd.f32 %v57, %v1162
  %1164 = vmatprep.mubr.bf16.mxu0 0
  %1165 = vmatmul.mubr.bf16.gmra.mxu0 %v228
  %v1166 = vpop.f32.mrf.mxu0
  %v1167 = vadd.f32 %v62, %v1166
  %v1168 = vpop.f32.mrf.mxu0
  %v1169 = vadd.f32 %v62, %v1168
  %v1170 = vpop.f32.mrf.mxu0
  %v1171 = vadd.f32 %v67, %v1170
  %v1172 = vpop.f32.mrf.mxu0
  %v1173 = vadd.f32 %v67, %v1172
  %1174 = vdwg.mxu0
  %v1175 = vmax.f32 %v362, 0.0
  %v1176 = vmax.f32 %v364, 0.0
  %v1177 = vmax.f32 %v415, 0.0
  %v1178 = vmax.f32 %v417, 0.0
  %v1179 = vmax.f32 %v468, 0.0
  %v1180 = vmax.f32 %v470, 0.0
  %v1181 = vmax.f32 %v521, 0.0
  %v1182 = vmax.f32 %v523, 0.0
  %v1183 = vmax.f32 %v574, 0.0
  %v1184 = vmax.f32 %v576, 0.0
  %v1185 = vmax.f32 %v627, 0.0
  %v1186 = vmax.f32 %v629, 0.0
  %v1187 = vmax.f32 %v680, 0.0
  %v1188 = vmax.f32 %v682, 0.0
  %v1189 = vmax.f32 %v733, 0.0
  %v1190 = vmax.f32 %v735, 0.0
  %v1191 = vmax.f32 %v786, 0.0
  %v1192 = vmax.f32 %v788, 0.0
  %v1193 = vmax.f32 %v839, 0.0
  %v1194 = vmax.f32 %v841, 0.0
  %v1195 = vmax.f32 %v892, 0.0
  %v1196 = vmax.f32 %v894, 0.0
  %v1197 = vmax.f32 %v945, 0.0
  %v1198 = vmax.f32 %v947, 0.0
  %v1199 = vmax.f32 %v998, 0.0
  %v1200 = vmax.f32 %v1000, 0.0
  %v1201 = vmax.f32 %v1051, 0.0
  %v1202 = vmax.f32 %v1053, 0.0
  %v1203 = vmax.f32 %v1104, 0.0
  %v1204 = vmax.f32 %v1106, 0.0
  %v1205 = vmax.f32 %v1157, 0.0
  %v1206 = vmax.f32 %v1159, 0.0
  %v1207 = vmax.f32 %v366, 0.0
  %v1208 = vmax.f32 %v368, 0.0
  %v1209 = vmax.f32 %v419, 0.0
  %v1210 = vmax.f32 %v421, 0.0
  %v1211 = vmax.f32 %v472, 0.0
  %v1212 = vmax.f32 %v474, 0.0
  %v1213 = vmax.f32 %v525, 0.0
  %v1214 = vmax.f32 %v527, 0.0
  %v1215 = vmax.f32 %v578, 0.0
  %v1216 = vmax.f32 %v580, 0.0
  %v1217 = vmax.f32 %v631, 0.0
  %v1218 = vmax.f32 %v633, 0.0
  %v1219 = vmax.f32 %v684, 0.0
  %v1220 = vmax.f32 %v686, 0.0
  %v1221 = vmax.f32 %v737, 0.0
  %v1222 = vmax.f32 %v739, 0.0
  %v1223 = vmax.f32 %v790, 0.0
  %v1224 = vmax.f32 %v792, 0.0
  %v1225 = vmax.f32 %v843, 0.0
  %v1226 = vmax.f32 %v845, 0.0
  %v1227 = vmax.f32 %v896, 0.0
  %v1228 = vmax.f32 %v898, 0.0
  %v1229 = vmax.f32 %v949, 0.0
  %v1230 = vmax.f32 %v951, 0.0
  %v1231 = vmax.f32 %v1002, 0.0
  %v1232 = vmax.f32 %v1004, 0.0
  %v1233 = vmax.f32 %v1055, 0.0
  %v1234 = vmax.f32 %v1057, 0.0
  %v1235 = vmax.f32 %v1108, 0.0
  %v1236 = vmax.f32 %v1110, 0.0
  %v1237 = vmax.f32 %v1161, 0.0
  %v1238 = vmax.f32 %v1163, 0.0
  %v1239 = vmax.f32 %v372, 0.0
  %v1240 = vmax.f32 %v374, 0.0
  %v1241 = vmax.f32 %v425, 0.0
  %v1242 = vmax.f32 %v427, 0.0
  %v1243 = vmax.f32 %v478, 0.0
  %v1244 = vmax.f32 %v480, 0.0
  %v1245 = vmax.f32 %v531, 0.0
  %v1246 = vmax.f32 %v533, 0.0
  %v1247 = vmax.f32 %v584, 0.0
  %v1248 = vmax.f32 %v586, 0.0
  %v1249 = vmax.f32 %v637, 0.0
  %v1250 = vmax.f32 %v639, 0.0
  %v1251 = vmax.f32 %v690, 0.0
  %v1252 = vmax.f32 %v692, 0.0
  %v1253 = vmax.f32 %v743, 0.0
  %v1254 = vmax.f32 %v745, 0.0
  %v1255 = vmax.f32 %v796, 0.0
  %v1256 = vmax.f32 %v798, 0.0
  %v1257 = vmax.f32 %v849, 0.0
  %v1258 = vmax.f32 %v851, 0.0
  %v1259 = vmax.f32 %v902, 0.0
  %v1260 = vmax.f32 %v904, 0.0
  %v1261 = vmax.f32 %v955, 0.0
  %v1262 = vmax.f32 %v957, 0.0
  %v1263 = vmax.f32 %v1008, 0.0
  %v1264 = vmax.f32 %v1010, 0.0
  %v1265 = vmax.f32 %v1061, 0.0
  %v1266 = vmax.f32 %v1063, 0.0
  %v1267 = vmax.f32 %v1114, 0.0
  %v1268 = vmax.f32 %v1116, 0.0
  %v1269 = vmax.f32 %v1167, 0.0
  %v1270 = vmax.f32 %v1169, 0.0
  %v1271 = vmax.f32 %v376, 0.0
  %v1272 = vmax.f32 %v378, 0.0
  %v1273 = vmax.f32 %v429, 0.0
  %v1274 = vmax.f32 %v431, 0.0
  %v1275 = vmax.f32 %v482, 0.0
  %v1276 = vmax.f32 %v484, 0.0
  %v1277 = vmax.f32 %v535, 0.0
  %v1278 = vmax.f32 %v537, 0.0
  %v1279 = vmax.f32 %v588, 0.0
  %v1280 = vmax.f32 %v590, 0.0
  %v1281 = vmax.f32 %v641, 0.0
  %v1282 = vmax.f32 %v643, 0.0
  %v1283 = vmax.f32 %v694, 0.0
  %v1284 = vmax.f32 %v696, 0.0
  %v1285 = vmax.f32 %v747, 0.0
  %v1286 = vmax.f32 %v749, 0.0
  %v1287 = vmax.f32 %v800, 0.0
  %v1288 = vmax.f32 %v802, 0.0
  %v1289 = vmax.f32 %v853, 0.0
  %v1290 = vmax.f32 %v855, 0.0
  %v1291 = vmax.f32 %v906, 0.0
  %v1292 = vmax.f32 %v908, 0.0
  %v1293 = vmax.f32 %v959, 0.0
  %v1294 = vmax.f32 %v961, 0.0
  %v1295 = vmax.f32 %v1012, 0.0
  %v1296 = vmax.f32 %v1014, 0.0
  %v1297 = vmax.f32 %v1065, 0.0
  %v1298 = vmax.f32 %v1067, 0.0
  %v1299 = vmax.f32 %v1118, 0.0
  %v1300 = vmax.f32 %v1120, 0.0
  %v1301 = vmax.f32 %v1171, 0.0
  %v1302 = vmax.f32 %v1173, 0.0
  %v1303 = vadd.f32 %v1175, %v1176
  %1304 = vadd.xlane.f32.xlu0 %v1303
  %v1305 = vpop.xlane.xlu0 %1304
  %v1306 = vadd.f32 %v1207, %v1208
  %1307 = vadd.xlane.f32.xlu0 %v1306
  %v1308 = vpop.xlane.xlu0 %1307
  %v1309 = vadd.f32 %v1239, %v1240
  %1310 = vadd.xlane.f32.xlu0 %v1309
  %v1311 = vpop.xlane.xlu0 %1310
  %v1312 = vadd.f32 %v1271, %v1272
  %1313 = vadd.xlane.f32.xlu0 %v1312
  %v1314 = vpop.xlane.xlu0 %1313
  %vm1315 = vcmask 7168
  %1316 = vst.msk [vmem:[#allocation2] sm:$0xff] %vm1315, %v1305
  %1317 = vst.msk [vmem:[#allocation2 + $0x8] sm:$0xff] %vm1315, %v1308
  %1318 = vst.msk [vmem:[#allocation2 + $0x10] sm:$0xff] %vm1315, %v1311
  %1319 = vst.msk [vmem:[#allocation2 + $0x18] sm:$0xff] %vm1315, %v1314
  %v1320 = vadd.f32 %v1177, %v1178
  %1321 = vadd.xlane.f32.xlu0 %v1320
  %v1322 = vpop.xlane.xlu0 %1321
  %v1323 = vadd.f32 %v1209, %v1210
  %1324 = vadd.xlane.f32.xlu0 %v1323
  %v1325 = vpop.xlane.xlu0 %1324
  %v1326 = vadd.f32 %v1241, %v1242
  %1327 = vadd.xlane.f32.xlu0 %v1326
  %v1328 = vpop.xlane.xlu0 %1327
  %v1329 = vadd.f32 %v1273, %v1274
  %1330 = vadd.xlane.f32.xlu0 %v1329
  %v1331 = vpop.xlane.xlu0 %1330
  %vm1332 = vcmask 23568
  %1333 = vst.msk [vmem:[#allocation2] sm:$0xff] %vm1332, %v1322
  %1334 = vst.msk [vmem:[#allocation2 + $0x8] sm:$0xff] %vm1332, %v1325
  %1335 = vst.msk [vmem:[#allocation2 + $0x10] sm:$0xff] %vm1332, %v1328
  %1336 = vst.msk [vmem:[#allocation2 + $0x18] sm:$0xff] %vm1332, %v1331
  %v1337 = vadd.f32 %v1179, %v1180
  %1338 = vadd.xlane.f32.xlu0 %v1337
  %v1339 = vpop.xlane.xlu0 %1338
  %v1340 = vadd.f32 %v1211, %v1212
  %1341 = vadd.xlane.f32.xlu0 %v1340
  %v1342 = vpop.xlane.xlu0 %1341
  %v1343 = vadd.f32 %v1243, %v1244
  %1344 = vadd.xlane.f32.xlu0 %v1343
  %v1345 = vpop.xlane.xlu0 %1344
  %v1346 = vadd.f32 %v1275, %v1276
  %1347 = vadd.xlane.f32.xlu0 %v1346
  %v1348 = vpop.xlane.xlu0 %1347
  %vm1349 = vcmask 39968
  %1350 = vst.msk [vmem:[#allocation2] sm:$0xff] %vm1349, %v1339
  %1351 = vst.msk [vmem:[#allocation2 + $0x8] sm:$0xff] %vm1349, %v1342
  %1352 = vst.msk [vmem:[#allocation2 + $0x10] sm:$0xff] %vm1349, %v1345
  %1353 = vst.msk [vmem:[#allocation2 + $0x18] sm:$0xff] %vm1349, %v1348
  %v1354 = vadd.f32 %v1181, %v1182
  %1355 = vadd.xlane.f32.xlu0 %v1354
  %v1356 = vpop.xlane.xlu0 %1355
  %v1357 = vadd.f32 %v1213, %v1214
  %1358 = vadd.xlane.f32.xlu0 %v1357
  %v1359 = vpop.xlane.xlu0 %1358
  %v1360 = vadd.f32 %v1245, %v1246
  %1361 = vadd.xlane.f32.xlu0 %v1360
  %v1362 = vpop.xlane.xlu0 %1361
  %v1363 = vadd.f32 %v1277, %v1278
  %1364 = vadd.xlane.f32.xlu0 %v1363
  %v1365 = vpop.xlane.xlu0 %1364
  %vm1366 = vcmask 56368
  %1367 = vst.msk [vmem:[#allocation2] sm:$0xff] %vm1366, %v1356
  %1368 = vst.msk [vmem:[#allocation2 + $0x8] sm:$0xff] %vm1366, %v1359
  %1369 = vst.msk [vmem:[#allocation2 + $0x10] sm:$0xff] %vm1366, %v1362
  %1370 = vst.msk [vmem:[#allocation2 + $0x18] sm:$0xff] %vm1366, %v1365
  %v1371 = vadd.f32 %v1183, %v1184
  %1372 = vadd.xlane.f32.xlu0 %v1371
  %v1373 = vpop.xlane.xlu0 %1372
  %v1374 = vadd.f32 %v1215, %v1216
  %1375 = vadd.xlane.f32.xlu0 %v1374
  %v1376 = vpop.xlane.xlu0 %1375
  %v1377 = vadd.f32 %v1247, %v1248
  %1378 = vadd.xlane.f32.xlu0 %v1377
  %v1379 = vpop.xlane.xlu0 %1378
  %v1380 = vadd.f32 %v1279, %v1280
  %1381 = vadd.xlane.f32.xlu0 %v1380
  %v1382 = vpop.xlane.xlu0 %1381
  %vm1383 = vcmask 72768
  %1384 = vst.msk [vmem:[#allocation2] sm:$0xff] %vm1383, %v1373
  %1385 = vst.msk [vmem:[#allocation2 + $0x8] sm:$0xff] %vm1383, %v1376
  %1386 = vst.msk [vmem:[#allocation2 + $0x10] sm:$0xff] %vm1383, %v1379
  %1387 = vst.msk [vmem:[#allocation2 + $0x18] sm:$0xff] %vm1383, %v1382
  %v1388 = vadd.f32 %v1185, %v1186
  %1389 = vadd.xlane.f32.xlu0 %v1388
  %v1390 = vpop.xlane.xlu0 %1389
  %v1391 = vadd.f32 %v1217, %v1218
  %1392 = vadd.xlane.f32.xlu0 %v1391
  %v1393 = vpop.xlane.xlu0 %1392
  %v1394 = vadd.f32 %v1249, %v1250
  %1395 = vadd.xlane.f32.xlu0 %v1394
  %v1396 = vpop.xlane.xlu0 %1395
  %v1397 = vadd.f32 %v1281, %v1282
  %1398 = vadd.xlane.f32.xlu0 %v1397
  %v1399 = vpop.xlane.xlu0 %1398
  %vm1400 = vcmask 89168
  %1401 = vst.msk [vmem:[#allocation2] sm:$0xff] %vm1400, %v1390
  %1402 = vst.msk [vmem:[#allocation2 + $0x8] sm:$0xff] %vm1400, %v1393
  %1403 = vst.msk [vmem:[#allocation2 + $0x10] sm:$0xff] %vm1400, %v1396
  %1404 = vst.msk [vmem:[#allocation2 + $0x18] sm:$0xff] %vm1400, %v1399
  %v1405 = vadd.f32 %v1187, %v1188
  %1406 = vadd.xlane.f32.xlu0 %v1405
  %v1407 = vpop.xlane.xlu0 %1406
  %v1408 = vadd.f32 %v1219, %v1220
  %1409 = vadd.xlane.f32.xlu0 %v1408
  %v1410 = vpop.xlane.xlu0 %1409
  %v1411 = vadd.f32 %v1251, %v1252
  %1412 = vadd.xlane.f32.xlu0 %v1411
  %v1413 = vpop.xlane.xlu0 %1412
  %v1414 = vadd.f32 %v1283, %v1284
  %1415 = vadd.xlane.f32.xlu0 %v1414
  %v1416 = vpop.xlane.xlu0 %1415
  %vm1417 = vcmask 105568
  %1418 = vst.msk [vmem:[#allocation2] sm:$0xff] %vm1417, %v1407
  %1419 = vst.msk [vmem:[#allocation2 + $0x8] sm:$0xff] %vm1417, %v1410
  %1420 = vst.msk [vmem:[#allocation2 + $0x10] sm:$0xff] %vm1417, %v1413
  %1421 = vst.msk [vmem:[#allocation2 + $0x18] sm:$0xff] %vm1417, %v1416
  %v1422 = vadd.f32 %v1189, %v1190
  %1423 = vadd.xlane.f32.xlu0 %v1422
  %v1424 = vpop.xlane.xlu0 %1423
  %v1425 = vadd.f32 %v1221, %v1222
  %1426 = vadd.xlane.f32.xlu0 %v1425
  %v1427 = vpop.xlane.xlu0 %1426
  %v1428 = vadd.f32 %v1253, %v1254
  %1429 = vadd.xlane.f32.xlu0 %v1428
  %v1430 = vpop.xlane.xlu0 %1429
  %v1431 = vadd.f32 %v1285, %v1286
  %1432 = vadd.xlane.f32.xlu0 %v1431
  %v1433 = vpop.xlane.xlu0 %1432
  %vm1434 = vcmask 121968
  %1435 = vst.msk [vmem:[#allocation2] sm:$0xff] %vm1434, %v1424
  %1436 = vst.msk [vmem:[#allocation2 + $0x8] sm:$0xff] %vm1434, %v1427
  %1437 = vst.msk [vmem:[#allocation2 + $0x10] sm:$0xff] %vm1434, %v1430
  %1438 = vst.msk [vmem:[#allocation2 + $0x18] sm:$0xff] %vm1434, %v1433
  %v1439 = vadd.f32 %v1191, %v1192
  %1440 = vadd.xlane.f32.xlu0 %v1439
  %v1441 = vpop.xlane.xlu0 %1440
  %v1442 = vadd.f32 %v1223, %v1224
  %1443 = vadd.xlane.f32.xlu0 %v1442
  %v1444 = vpop.xlane.xlu0 %1443
  %v1445 = vadd.f32 %v1255, %v1256
  %1446 = vadd.xlane.f32.xlu0 %v1445
  %v1447 = vpop.xlane.xlu0 %1446
  %v1448 = vadd.f32 %v1287, %v1288
  %1449 = vadd.xlane.f32.xlu0 %v1448
  %v1450 = vpop.xlane.xlu0 %1449
  %vm1451 = vcmask 15368
  %1452 = vst.msk [vmem:[#allocation2] sm:$0xff] %vm1451, %v1441
  %1453 = vst.msk [vmem:[#allocation2 + $0x8] sm:$0xff] %vm1451, %v1444
  %1454 = vst.msk [vmem:[#allocation2 + $0x10] sm:$0xff] %vm1451, %v1447
  %1455 = vst.msk [vmem:[#allocation2 + $0x18] sm:$0xff] %vm1451, %v1450
  %v1456 = vadd.f32 %v1193, %v1194
  %1457 = vadd.xlane.f32.xlu0 %v1456
  %v1458 = vpop.xlane.xlu0 %1457
  %v1459 = vadd.f32 %v1225, %v1226
  %1460 = vadd.xlane.f32.xlu0 %v1459
  %v1461 = vpop.xlane.xlu0 %1460
  %v1462 = vadd.f32 %v1257, %v1258
  %1463 = vadd.xlane.f32.xlu0 %v1462
  %v1464 = vpop.xlane.xlu0 %1463
  %v1465 = vadd.f32 %v1289, %v1290
  %1466 = vadd.xlane.f32.xlu0 %v1465
  %v1467 = vpop.xlane.xlu0 %1466
  %vm1468 = vcmask 31768
  %1469 = vst.msk [vmem:[#allocation2] sm:$0xff] %vm1468, %v1458
  %1470 = vst.msk [vmem:[#allocation2 + $0x8] sm:$0xff] %vm1468, %v1461
  %1471 = vst.msk [vmem:[#allocation2 + $0x10] sm:$0xff] %vm1468, %v1464
  %1472 = vst.msk [vmem:[#allocation2 + $0x18] sm:$0xff] %vm1468, %v1467
  %v1473 = vadd.f32 %v1195, %v1196
  %1474 = vadd.xlane.f32.xlu0 %v1473
  %v1475 = vpop.xlane.xlu0 %1474
  %v1476 = vadd.f32 %v1227, %v1228
  %1477 = vadd.xlane.f32.xlu0 %v1476
  %v1478 = vpop.xlane.xlu0 %1477
  %v1479 = vadd.f32 %v1259, %v1260
  %1480 = vadd.xlane.f32.xlu0 %v1479
  %v1481 = vpop.xlane.xlu0 %1480
  %v1482 = vadd.f32 %v1291, %v1292
  %1483 = vadd.xlane.f32.xlu0 %v1482
  %v1484 = vpop.xlane.xlu0 %1483
  %vm1485 = vcmask 48168
  %1486 = vst.msk [vmem:[#allocation2] sm:$0xff] %vm1485, %v1475
  %1487 = vst.msk [vmem:[#allocation2 + $0x8] sm:$0xff] %vm1485, %v1478
  %1488 = vst.msk [vmem:[#allocation2 + $0x10] sm:$0xff] %vm1485, %v1481
  %1489 = vst.msk [vmem:[#allocation2 + $0x18] sm:$0xff] %vm1485, %v1484
  %v1490 = vadd.f32 %v1197, %v1198
  %1491 = vadd.xlane.f32.xlu0 %v1490
  %v1492 = vpop.xlane.xlu0 %1491
  %v1493 = vadd.f32 %v1229, %v1230
  %1494 = vadd.xlane.f32.xlu0 %v1493
  %v1495 = vpop.xlane.xlu0 %1494
  %v1496 = vadd.f32 %v1261, %v1262
  %1497 = vadd.xlane.f32.xlu0 %v1496
  %v1498 = vpop.xlane.xlu0 %1497
  %v1499 = vadd.f32 %v1293, %v1294
  %1500 = vadd.xlane.f32.xlu0 %v1499
  %v1501 = vpop.xlane.xlu0 %1500
  %vm1502 = vcmask 64568
  %1503 = vst.msk [vmem:[#allocation2] sm:$0xff] %vm1502, %v1492
  %1504 = vst.msk [vmem:[#allocation2 + $0x8] sm:$0xff] %vm1502, %v1495
  %1505 = vst.msk [vmem:[#allocation2 + $0x10] sm:$0xff] %vm1502, %v1498
  %1506 = vst.msk [vmem:[#allocation2 + $0x18] sm:$0xff] %vm1502, %v1501
  %v1507 = vadd.f32 %v1199, %v1200
  %1508 = vadd.xlane.f32.xlu0 %v1507
  %v1509 = vpop.xlane.xlu0 %1508
  %v1510 = vadd.f32 %v1231, %v1232
  %1511 = vadd.xlane.f32.xlu0 %v1510
  %v1512 = vpop.xlane.xlu0 %1511
  %v1513 = vadd.f32 %v1263, %v1264
  %1514 = vadd.xlane.f32.xlu0 %v1513
  %v1515 = vpop.xlane.xlu0 %1514
  %v1516 = vadd.f32 %v1295, %v1296
  %1517 = vadd.xlane.f32.xlu0 %v1516
  %v1518 = vpop.xlane.xlu0 %1517
  %vm1519 = vcmask 80968
  %1520 = vst.msk [vmem:[#allocation2] sm:$0xff] %vm1519, %v1509
  %1521 = vst.msk [vmem:[#allocation2 + $0x8] sm:$0xff] %vm1519, %v1512
  %1522 = vst.msk [vmem:[#allocation2 + $0x10] sm:$0xff] %vm1519, %v1515
  %1523 = vst.msk [vmem:[#allocation2 + $0x18] sm:$0xff] %vm1519, %v1518
  %v1524 = vadd.f32 %v1201, %v1202
  %1525 = vadd.xlane.f32.xlu0 %v1524
  %v1526 = vpop.xlane.xlu0 %1525
  %v1527 = vadd.f32 %v1233, %v1234
  %1528 = vadd.xlane.f32.xlu0 %v1527
  %v1529 = vpop.xlane.xlu0 %1528
  %v1530 = vadd.f32 %v1265, %v1266
  %1531 = vadd.xlane.f32.xlu0 %v1530
  %v1532 = vpop.xlane.xlu0 %1531
  %v1533 = vadd.f32 %v1297, %v1298
  %1534 = vadd.xlane.f32.xlu0 %v1533
  %v1535 = vpop.xlane.xlu0 %1534
  %vm1536 = vcmask 97368
  %1537 = vst.msk [vmem:[#allocation2] sm:$0xff] %vm1536, %v1526
  %1538 = vst.msk [vmem:[#allocation2 + $0x8] sm:$0xff] %vm1536, %v1529
  %1539 = vst.msk [vmem:[#allocation2 + $0x10] sm:$0xff] %vm1536, %v1532
  %1540 = vst.msk [vmem:[#allocation2 + $0x18] sm:$0xff] %vm1536, %v1535
  %v1541 = vadd.f32 %v1203, %v1204
  %1542 = vadd.xlane.f32.xlu0 %v1541
  %v1543 = vpop.xlane.xlu0 %1542
  %v1544 = vadd.f32 %v1235, %v1236
  %1545 = vadd.xlane.f32.xlu0 %v1544
  %v1546 = vpop.xlane.xlu0 %1545
  %v1547 = vadd.f32 %v1267, %v1268
  %1548 = vadd.xlane.f32.xlu0 %v1547
  %v1549 = vpop.xlane.xlu0 %1548
  %v1550 = vadd.f32 %v1299, %v1300
  %1551 = vadd.xlane.f32.xlu0 %v1550
  %v1552 = vpop.xlane.xlu0 %1551
  %vm1553 = vcmask 113768
  %1554 = vst.msk [vmem:[#allocation2] sm:$0xff] %vm1553, %v1543
  %1555 = vst.msk [vmem:[#allocation2 + $0x8] sm:$0xff] %vm1553, %v1546
  %1556 = vst.msk [vmem:[#allocation2 + $0x10] sm:$0xff] %vm1553, %v1549
  %1557 = vst.msk [vmem:[#allocation2 + $0x18] sm:$0xff] %vm1553, %v1552
  %v1558 = vadd.f32 %v1205, %v1206
  %1559 = vadd.xlane.f32.xlu0 %v1558
  %v1560 = vpop.xlane.xlu0 %1559
  %v1561 = vadd.f32 %v1237, %v1238
  %1562 = vadd.xlane.f32.xlu0 %v1561
  %v1563 = vpop.xlane.xlu0 %1562
  %v1564 = vadd.f32 %v1269, %v1270
  %1565 = vadd.xlane.f32.xlu0 %v1564
  %v1566 = vpop.xlane.xlu0 %1565
  %v1567 = vadd.f32 %v1301, %v1302
  %1568 = vadd.xlane.f32.xlu0 %v1567
  %v1569 = vpop.xlane.xlu0 %1568
  %vm1570 = vcmask 130168
  %1571 = vst.msk [vmem:[#allocation2] sm:$0xff] %vm1570, %v1560
  %1572 = vst.msk [vmem:[#allocation2 + $0x8] sm:$0xff] %vm1570, %v1563
  %1573 = vst.msk [vmem:[#allocation2 + $0x10] sm:$0xff] %vm1570, %v1566
  %1574 = vst.msk [vmem:[#allocation2 + $0x18] sm:$0xff] %vm1570, %v1569
  %v1575 = vld [vmem:[#allocation2] sm:$0xff]
  %v1576 = vld [vmem:[#allocation2 + $0x8] sm:$0xff]
  %v1577 = vld [vmem:[#allocation2 + $0x10] sm:$0xff]
  %v1578 = vld [vmem:[#allocation2 + $0x18] sm:$0xff]
  %v1579 = vmul.f32 %v1575, 0.00390625
  %v1580 = vmul.f32 %v1576, 0.00390625
  %v1581 = vmul.f32 %v1577, 0.00390625
  %v1582 = vmul.f32 %v1578, 0.00390625
  %v1583 = vld [vmem:[%s3] sm:$0xf]
  %v1584 = vld [vmem:[%s3 + $0x4] sm:$0xf]
  %v1585 = vld [vmem:[%s3 + $0x8] sm:$0xf]
  %v1586 = vld [vmem:[%s3 + $0xc] sm:$0xf]
  %v1587 = vld [vmem:[%s3 + $0x10] sm:$0xf]
  %v1588 = vld [vmem:[%s3 + $0x14] sm:$0xf]
  %v1589 = vld [vmem:[%s3 + $0x18] sm:$0xf]
  %v1590 = vld [vmem:[%s3 + $0x1c] sm:$0xf]
  %v1591 = vld [vmem:[%s3 + $0x20] sm:$0xf]
  %v1592 = vld [vmem:[%s3 + $0x24] sm:$0xf]
  %v1593 = vld [vmem:[%s3 + $0x28] sm:$0xf]
  %v1594 = vld [vmem:[%s3 + $0x2c] sm:$0xf]
  %v1595 = vpack.c.bf16 %v1580, %v1579
  %v1596 = vpack.c.bf16 %v1582, %v1581
  %v1597 = vld [vmem:[%s5] sm:$0xff]
  %v1598 = vld [vmem:[%s5 + $0x8] sm:$0xff]
  %v1599 = vld [vmem:[%s5 + $0x10] sm:$0xff]
  %v1600 = vld [vmem:[%s5 + $0x18] sm:$0xff]
  %v1601 = vld [vmem:[%s5 + $0x20] sm:$0xff]
  %v1602 = vld [vmem:[%s5 + $0x28] sm:$0xff]
  %v1603 = vld [vmem:[%s5 + $0x30] sm:$0xff]
  %v1604 = vld [vmem:[%s5 + $0x38] sm:$0xff]
  %v1605 = vld [vmem:[%s5 + $0x40] sm:$0xff]
  %v1606 = vld [vmem:[%s5 + $0x48] sm:$0xff]
  %v1607 = vld [vmem:[%s5 + $0x50] sm:$0xff]
  %v1608 = vld [vmem:[%s5 + $0x58] sm:$0xff]
  %1610 = vset.pattern.permute.xlu0 0
  %1611 = vperm.xlu0 %1610, %v1597
  %v1612 = vpop.permute.xlu0 %1611
  %1615 = vset.pattern.permute.xlu0 0
  %1616 = vperm.xlu0 %1615, %v1598
  %v1617 = vpop.permute.xlu0 %1616
  %1620 = vset.pattern.permute.xlu0 0
  %1621 = vperm.xlu0 %1620, %v1599
  %v1622 = vpop.permute.xlu0 %1621
  %1625 = vset.pattern.permute.xlu0 0
  %1626 = vperm.xlu0 %1625, %v1600
  %v1627 = vpop.permute.xlu0 %1626
  %1630 = vset.pattern.permute.xlu0 0
  %1631 = vperm.xlu0 %1630, %v1601
  %v1632 = vpop.permute.xlu0 %1631
  %1635 = vset.pattern.permute.xlu0 0
  %1636 = vperm.xlu0 %1635, %v1602
  %v1637 = vpop.permute.xlu0 %1636
  %1640 = vset.pattern.permute.xlu0 0
  %1641 = vperm.xlu0 %1640, %v1603
  %v1642 = vpop.permute.xlu0 %1641
  %1645 = vset.pattern.permute.xlu0 0
  %1646 = vperm.xlu0 %1645, %v1604
  %v1647 = vpop.permute.xlu0 %1646
  %1650 = vset.pattern.permute.xlu0 0
  %1651 = vperm.xlu0 %1650, %v1605
  %v1652 = vpop.permute.xlu0 %1651
  %1655 = vset.pattern.permute.xlu0 0
  %1656 = vperm.xlu0 %1655, %v1606
  %v1657 = vpop.permute.xlu0 %1656
  %1660 = vset.pattern.permute.xlu0 0
  %1661 = vperm.xlu0 %1660, %v1607
  %v1662 = vpop.permute.xlu0 %1661
  %1665 = vset.pattern.permute.xlu0 0
  %1666 = vperm.xlu0 %1665, %v1608
  %v1667 = vpop.permute.xlu0 %1666
  %v1681 = vunpack.c.l.b16 %v1583
  %v1682 = vunpack.c.l.b16 %v1584
  %v1683 = vunpack.c.l.b16 %v1585
  %v1684 = vunpack.c.l.b16 %v1586
  %v1685 = vunpack.c.l.b16 %v1587
  %v1686 = vunpack.c.l.b16 %v1588
  %v1687 = vunpack.c.l.b16 %v1589
  %v1688 = vunpack.c.l.b16 %v1590
  %v1689 = vunpack.c.l.b16 %v1591
  %v1690 = vunpack.c.l.b16 %v1592
  %v1691 = vunpack.c.l.b16 %v1593
  %v1692 = vunpack.c.l.b16 %v1594
  %v1693 = vpack.c.b16 %v1682, %v1681
  %v1694 = vpack.c.b16 %v1684, %v1683
  %v1695 = vpack.c.b16 %v1686, %v1685
  %v1696 = vpack.c.b16 %v1688, %v1687
  %v1697 = vpack.c.b16 %v1690, %v1689
  %v1698 = vpack.c.b16 %v1692, %v1691
  %vm1699 = vcmask 261120
  %v1701 = vsel %vm1699, %v1693, 0
  %v1704 = vsel %vm1699, %v1694, 0
  %v1707 = vsel %vm1699, %v1695, 0
  %v1710 = vsel %vm1699, %v1696, 0
  %v1713 = vsel %vm1699, %v1697, 0
  %v1716 = vsel %vm1699, %v1698, 0
  %1718 = vmatprep.subr.bf16.mxu0 0
  %1719 = vmatpush1.bf16.msra.mxu0 0
  %1720 = vmatprep.subr.bf16.mxu0 0
  %1721 = vmatpush1.bf16.msra.mxu0 0
  %1722 = vmatprep.subr.bf16.mxu0 0
  %1723 = vmatpush1.bf16.msra.mxu0 0
  %1724 = vmatprep.subr.bf16.mxu0 0
  %1725 = vmatpush1.bf16.msra.mxu0 0
  %1726 = vmatprep.subr.bf16.mxu0 0
  %1727 = vmatpush1.bf16.msra.mxu0 0
  %1728 = vmatprep.subr.bf16.mxu0 0
  %1729 = vmatpush1.bf16.msra.mxu0 0
  %1730 = vmatprep.subr.bf16.mxu0 0
  %1731 = vmatpush1.bf16.msra.mxu0 %v1596
  %1732 = vmatprep.subr.bf16.mxu0 0
  %1733 = vmatpush1.bf16.msra.mxu0 %v1595
  %1734 = vmatprep.subr.bf16.mxu0 0
  %1735 = vmatpush2.bf16.msra.mxu0 0
  %1736 = vmatprep.subr.bf16.mxu0 0
  %1737 = vmatpush2.bf16.msra.mxu0 0
  %1738 = vmatprep.subr.bf16.mxu0 0
  %1739 = vmatpush2.bf16.msra.mxu0 0
  %1740 = vmatprep.subr.bf16.mxu0 0
  %1741 = vmatpush2.bf16.msra.mxu0 0
  %1742 = vmatprep.subr.bf16.mxu0 0
  %1743 = vmatpush2.bf16.msra.mxu0 0
  %1744 = vmatprep.subr.bf16.mxu0 0
  %1745 = vmatpush2.bf16.msra.mxu0 0
  %1746 = vmatprep.subr.bf16.mxu0 0
  %1747 = vmatpush2.bf16.msra.mxu0 0
  %1748 = vmatprep.subr.bf16.mxu0 0
  %1749 = vmatpush2.bf16.msra.mxu0 0
  %1750 = vmatprep.mubr.bf16.mxu0 0
  %1751 = vmatmul.mubr.bf16.gmra.mxu0 %v1701
  %v1752 = vpop.f32.mrf.mxu0
  %v1753 = vadd.f32 %v1612, %v1752
  %v1754 = vpop.f32.mrf.mxu0
  %v1755 = vpop.f32.mrf.mxu0
  %v1756 = vadd.f32 %v1617, %v1755
  %v1757 = vpop.f32.mrf.mxu0
  %1758 = vmatprep.mubr.bf16.mxu0 0
  %1759 = vmatmul.mubr.bf16.gmra.mxu0 %v1704
  %v1760 = vpop.f32.mrf.mxu0
  %v1761 = vadd.f32 %v1622, %v1760
  %v1762 = vpop.f32.mrf.mxu0
  %v1763 = vpop.f32.mrf.mxu0
  %v1764 = vadd.f32 %v1627, %v1763
  %v1765 = vpop.f32.mrf.mxu0
  %1766 = vmatprep.mubr.bf16.mxu0 0
  %1767 = vmatmul.mubr.bf16.gmra.mxu0 %v1707
  %v1768 = vpop.f32.mrf.mxu0
  %v1769 = vadd.f32 %v1632, %v1768
  %v1770 = vpop.f32.mrf.mxu0
  %v1771 = vpop.f32.mrf.mxu0
  %v1772 = vadd.f32 %v1637, %v1771
  %v1773 = vpop.f32.mrf.mxu0
  %1774 = vmatprep.mubr.bf16.mxu0 0
  %1775 = vmatmul.mubr.bf16.gmra.mxu0 %v1710
  %v1776 = vpop.f32.mrf.mxu0
  %v1777 = vadd.f32 %v1642, %v1776
  %v1778 = vpop.f32.mrf.mxu0
  %v1779 = vpop.f32.mrf.mxu0
  %v1780 = vadd.f32 %v1647, %v1779
  %v1781 = vpop.f32.mrf.mxu0
  %1782 = vmatprep.mubr.bf16.mxu0 0
  %1783 = vmatmul.mubr.bf16.gmra.mxu0 %v1713
  %v1784 = vpop.f32.mrf.mxu0
  %v1785 = vadd.f32 %v1652, %v1784
  %v1786 = vpop.f32.mrf.mxu0
  %v1787 = vpop.f32.mrf.mxu0
  %v1788 = vadd.f32 %v1657, %v1787
  %v1789 = vpop.f32.mrf.mxu0
  %1790 = vmatprep.mubr.bf16.mxu0 0
  %1791 = vmatmul.mubr.bf16.gmra.mxu0 %v1716
  %v1792 = vpop.f32.mrf.mxu0
  %v1793 = vadd.f32 %v1662, %v1792
  %v1794 = vpop.f32.mrf.mxu0
  %v1795 = vpop.f32.mrf.mxu0
  %v1796 = vadd.f32 %v1667, %v1795
  %v1797 = vpop.f32.mrf.mxu0
  %1798 = vdwg.mxu0
  %v1799 = vld [vmem:[%s4] sm:$0xf]
  %v1800 = vld [vmem:[%s4 + $0x4] sm:$0xf]
  %v1801 = vld [vmem:[%s4 + $0x8] sm:$0xf]
  %v1802 = vld [vmem:[%s4 + $0xc] sm:$0xf]
  %v1803 = vld [vmem:[%s4 + $0x10] sm:$0xf]
  %v1804 = vld [vmem:[%s4 + $0x14] sm:$0xf]
  %v1805 = vld [vmem:[%s4 + $0x18] sm:$0xf]
  %v1806 = vld [vmem:[%s4 + $0x1c] sm:$0xf]
  %v1807 = vld [vmem:[%s4 + $0x20] sm:$0xf]
  %v1808 = vld [vmem:[%s4 + $0x24] sm:$0xf]
  %v1809 = vld [vmem:[%s4 + $0x28] sm:$0xf]
  %v1810 = vld [vmem:[%s4 + $0x2c] sm:$0xf]
  %v1811 = vld [vmem:[%s6] sm:$0xff]
  %v1812 = vld [vmem:[%s6 + $0x8] sm:$0xff]
  %v1813 = vld [vmem:[%s6 + $0x10] sm:$0xff]
  %v1814 = vld [vmem:[%s6 + $0x18] sm:$0xff]
  %v1815 = vld [vmem:[%s6 + $0x20] sm:$0xff]
  %v1816 = vld [vmem:[%s6 + $0x28] sm:$0xff]
  %v1817 = vld [vmem:[%s6 + $0x30] sm:$0xff]
  %v1818 = vld [vmem:[%s6 + $0x38] sm:$0xff]
  %v1819 = vld [vmem:[%s6 + $0x40] sm:$0xff]
  %v1820 = vld [vmem:[%s6 + $0x48] sm:$0xff]
  %v1821 = vld [vmem:[%s6 + $0x50] sm:$0xff]
  %v1822 = vld [vmem:[%s6 + $0x58] sm:$0xff]
  %1824 = vset.pattern.permute.xlu0 0
  %1825 = vperm.xlu0 %1824, %v1811
  %v1826 = vpop.permute.xlu0 %1825
  %1829 = vset.pattern.permute.xlu0 0
  %1830 = vperm.xlu0 %1829, %v1812
  %v1831 = vpop.permute.xlu0 %1830
  %1834 = vset.pattern.permute.xlu0 0
  %1835 = vperm.xlu0 %1834, %v1813
  %v1836 = vpop.permute.xlu0 %1835
  %1839 = vset.pattern.permute.xlu0 0
  %1840 = vperm.xlu0 %1839, %v1814
  %v1841 = vpop.permute.xlu0 %1840
  %1844 = vset.pattern.permute.xlu0 0
  %1845 = vperm.xlu0 %1844, %v1815
  %v1846 = vpop.permute.xlu0 %1845
  %1849 = vset.pattern.permute.xlu0 0
  %1850 = vperm.xlu0 %1849, %v1816
  %v1851 = vpop.permute.xlu0 %1850
  %1854 = vset.pattern.permute.xlu0 0
  %1855 = vperm.xlu0 %1854, %v1817
  %v1856 = vpop.permute.xlu0 %1855
  %1859 = vset.pattern.permute.xlu0 0
  %1860 = vperm.xlu0 %1859, %v1818
  %v1861 = vpop.permute.xlu0 %1860
  %1864 = vset.pattern.permute.xlu0 0
  %1865 = vperm.xlu0 %1864, %v1819
  %v1866 = vpop.permute.xlu0 %1865
  %1869 = vset.pattern.permute.xlu0 0
  %1870 = vperm.xlu0 %1869, %v1820
  %v1871 = vpop.permute.xlu0 %1870
  %1874 = vset.pattern.permute.xlu0 0
  %1875 = vperm.xlu0 %1874, %v1821
  %v1876 = vpop.permute.xlu0 %1875
  %1879 = vset.pattern.permute.xlu0 0
  %1880 = vperm.xlu0 %1879, %v1822
  %v1881 = vpop.permute.xlu0 %1880
  %v1895 = vunpack.c.l.b16 %v1799
  %v1896 = vunpack.c.l.b16 %v1800
  %v1897 = vunpack.c.l.b16 %v1801
  %v1898 = vunpack.c.l.b16 %v1802
  %v1899 = vunpack.c.l.b16 %v1803
  %v1900 = vunpack.c.l.b16 %v1804
  %v1901 = vunpack.c.l.b16 %v1805
  %v1902 = vunpack.c.l.b16 %v1806
  %v1903 = vunpack.c.l.b16 %v1807
  %v1904 = vunpack.c.l.b16 %v1808
  %v1905 = vunpack.c.l.b16 %v1809
  %v1906 = vunpack.c.l.b16 %v1810
  %v1907 = vpack.c.b16 %v1896, %v1895
  %v1908 = vpack.c.b16 %v1898, %v1897
  %v1909 = vpack.c.b16 %v1900, %v1899
  %v1910 = vpack.c.b16 %v1902, %v1901
  %v1911 = vpack.c.b16 %v1904, %v1903
  %v1912 = vpack.c.b16 %v1906, %v1905
  %v1914 = vsel %vm1699, %v1907, 0
  %v1917 = vsel %vm1699, %v1908, 0
  %v1920 = vsel %vm1699, %v1909, 0
  %v1923 = vsel %vm1699, %v1910, 0
  %v1926 = vsel %vm1699, %v1911, 0
  %v1929 = vsel %vm1699, %v1912, 0
  %1931 = vmatprep.subr.bf16.mxu0 0
  %1932 = vmatpush1.bf16.msra.mxu0 0
  %1933 = vmatprep.subr.bf16.mxu0 0
  %1934 = vmatpush1.bf16.msra.mxu0 0
  %1935 = vmatprep.subr.bf16.mxu0 0
  %1936 = vmatpush1.bf16.msra.mxu0 0
  %1937 = vmatprep.subr.bf16.mxu0 0
  %1938 = vmatpush1.bf16.msra.mxu0 0
  %1939 = vmatprep.subr.bf16.mxu0 0
  %1940 = vmatpush1.bf16.msra.mxu0 0
  %1941 = vmatprep.subr.bf16.mxu0 0
  %1942 = vmatpush1.bf16.msra.mxu0 0
  %1943 = vmatprep.subr.bf16.mxu0 0
  %1944 = vmatpush1.bf16.msra.mxu0 0
  %1945 = vmatprep.subr.bf16.mxu0 0
  %1946 = vmatpush1.bf16.msra.mxu0 0
  %1947 = vmatprep.subr.bf16.mxu0 0
  %1948 = vmatpush2.bf16.msra.mxu0 0
  %1949 = vmatprep.subr.bf16.mxu0 0
  %1950 = vmatpush2.bf16.msra.mxu0 0
  %1951 = vmatprep.subr.bf16.mxu0 0
  %1952 = vmatpush2.bf16.msra.mxu0 0
  %1953 = vmatprep.subr.bf16.mxu0 0
  %1954 = vmatpush2.bf16.msra.mxu0 0
  %1955 = vmatprep.subr.bf16.mxu0 0
  %1956 = vmatpush2.bf16.msra.mxu0 0
  %1957 = vmatprep.subr.bf16.mxu0 0
  %1958 = vmatpush2.bf16.msra.mxu0 0
  %1959 = vmatprep.subr.bf16.mxu0 0
  %1960 = vmatpush2.bf16.msra.mxu0 0
  %1961 = vmatprep.subr.bf16.mxu0 0
  %1962 = vmatpush2.bf16.msra.mxu0 0
  %1963 = vmatprep.mubr.bf16.mxu0 0
  %1964 = vmatmul.mubr.bf16.gmra.mxu0 %v1914
  %v1965 = vpop.f32.mrf.mxu0
  %v1966 = vadd.f32 %v1826, %v1965
  %v1967 = vpop.f32.mrf.mxu0
  %v1968 = vpop.f32.mrf.mxu0
  %v1969 = vadd.f32 %v1831, %v1968
  %v1970 = vpop.f32.mrf.mxu0
  %1971 = vmatprep.mubr.bf16.mxu0 0
  %1972 = vmatmul.mubr.bf16.gmra.mxu0 %v1917
  %v1973 = vpop.f32.mrf.mxu0
  %v1974 = vadd.f32 %v1836, %v1973
  %v1975 = vpop.f32.mrf.mxu0
  %v1976 = vpop.f32.mrf.mxu0
  %v1977 = vadd.f32 %v1841, %v1976
  %v1978 = vpop.f32.mrf.mxu0
  %1979 = vmatprep.mubr.bf16.mxu0 0
  %1980 = vmatmul.mubr.bf16.gmra.mxu0 %v1920
  %v1981 = vpop.f32.mrf.mxu0
  %v1982 = vadd.f32 %v1846, %v1981
  %v1983 = vpop.f32.mrf.mxu0
  %v1984 = vpop.f32.mrf.mxu0
  %v1985 = vadd.f32 %v1851, %v1984
  %v1986 = vpop.f32.mrf.mxu0
  %1987 = vmatprep.mubr.bf16.mxu0 0
  %1988 = vmatmul.mubr.bf16.gmra.mxu0 %v1923
  %v1989 = vpop.f32.mrf.mxu0
  %v1990 = vadd.f32 %v1856, %v1989
  %v1991 = vpop.f32.mrf.mxu0
  %v1992 = vpop.f32.mrf.mxu0
  %v1993 = vadd.f32 %v1861, %v1992
  %v1994 = vpop.f32.mrf.mxu0
  %1995 = vmatprep.mubr.bf16.mxu0 0
  %1996 = vmatmul.mubr.bf16.gmra.mxu0 %v1926
  %v1997 = vpop.f32.mrf.mxu0
  %v1998 = vadd.f32 %v1866, %v1997
  %v1999 = vpop.f32.mrf.mxu0
  %v2000 = vpop.f32.mrf.mxu0
  %v2001 = vadd.f32 %v1871, %v2000
  %v2002 = vpop.f32.mrf.mxu0
  %2003 = vmatprep.mubr.bf16.mxu0 0
  %2004 = vmatmul.mubr.bf16.gmra.mxu0 %v1929
  %v2005 = vpop.f32.mrf.mxu0
  %v2006 = vadd.f32 %v1876, %v2005
  %v2007 = vpop.f32.mrf.mxu0
  %v2008 = vpop.f32.mrf.mxu0
  %v2009 = vadd.f32 %v1881, %v2008
  %v2010 = vpop.f32.mrf.mxu0
  %2011 = vdwg.mxu0
  %v2012 = vadd.f32 %v1753, %v1966
  %v2013 = vadd.f32 %v1756, %v1969
  %v2014 = vadd.f32 %v1761, %v1974
  %v2015 = vadd.f32 %v1764, %v1977
  %v2016 = vxor.u32 %v2012, 2147483648
  %v2017 = vxor.u32 %v2013, 2147483648
  %v2018 = vxor.u32 %v2014, 2147483648
  %v2019 = vxor.u32 %v2015, 2147483648
  %v2020 = vmul.f32 %v2016, 1.442695
  %v2021 = vpow.pop %v2020
  %v2022 = vmul.f32 %v2017, 1.442695
  %v2023 = vpow.pop %v2022
  %v2024 = vmul.f32 %v2018, 1.442695
  %v2025 = vpow.pop %v2024
  %v2026 = vmul.f32 %v2019, 1.442695
  %v2027 = vpow.pop %v2026
  %v2028 = vadd.f32 %v2021, 1.0
  %v2029 = vadd.f32 %v2023, 1.0
  %v2030 = vadd.f32 %v2025, 1.0
  %v2031 = vadd.f32 %v2027, 1.0
  %v2032 = vrcp.pop %v2028
  %v2033 = vmul.f32 1.0, %v2032
  %v2034 = vrcp.pop %v2029
  %v2035 = vmul.f32 1.0, %v2034
  %v2036 = vrcp.pop %v2030
  %v2037 = vmul.f32 1.0, %v2036
  %v2038 = vrcp.pop %v2031
  %v2039 = vmul.f32 1.0, %v2038
  %v2040 = vadd.f32 %v1769, %v1982
  %v2041 = vadd.f32 %v1772, %v1985
  %v2042 = vadd.f32 %v1777, %v1990
  %v2043 = vadd.f32 %v1780, %v1993
  %v2044 = vxor.u32 %v2040, 2147483648
  %v2045 = vxor.u32 %v2041, 2147483648
  %v2046 = vxor.u32 %v2042, 2147483648
  %v2047 = vxor.u32 %v2043, 2147483648
  %v2048 = vmul.f32 %v2044, 1.442695
  %v2049 = vpow.pop %v2048
  %v2050 = vmul.f32 %v2045, 1.442695
  %v2051 = vpow.pop %v2050
  %v2052 = vmul.f32 %v2046, 1.442695
  %v2053 = vpow.pop %v2052
  %v2054 = vmul.f32 %v2047, 1.442695
  %v2055 = vpow.pop %v2054
  %v2056 = vadd.f32 %v2049, 1.0
  %v2057 = vadd.f32 %v2051, 1.0
  %v2058 = vadd.f32 %v2053, 1.0
  %v2059 = vadd.f32 %v2055, 1.0
  %v2060 = vrcp.pop %v2056
  %v2061 = vmul.f32 1.0, %v2060
  %v2062 = vrcp.pop %v2057
  %v2063 = vmul.f32 1.0, %v2062
  %v2064 = vrcp.pop %v2058
  %v2065 = vmul.f32 1.0, %v2064
  %v2066 = vrcp.pop %v2059
  %v2067 = vmul.f32 1.0, %v2066
  %v2068 = vmul.f32 %v2033, %v1998
  %v2069 = vmul.f32 %v2035, %v2001
  %v2070 = vmul.f32 %v2037, %v2006
  %v2071 = vmul.f32 %v2039, %v2009
  %v2072 = vadd.f32 %v1785, %v2068
  %v2073 = vadd.f32 %v1788, %v2069
  %v2074 = vadd.f32 %v1793, %v2070
  %v2075 = vadd.f32 %v1796, %v2071
  %v2076 = vtanh.pop %v2072
  %v2077 = vtanh.pop %v2073
  %v2078 = vtanh.pop %v2074
  %v2079 = vtanh.pop %v2075
  %v2080 = vsub.f32 1.0, %v2061
  %v2081 = vsub.f32 1.0, %v2063
  %v2082 = vsub.f32 1.0, %v2065
  %v2083 = vsub.f32 1.0, %v2067
  %v2084 = vmul.f32 %v2080, %v2076
  %v2085 = vmul.f32 %v2081, %v2077
  %v2086 = vmul.f32 %v2082, %v2078
  %v2087 = vmul.f32 %v2083, %v2079
  %v2088 = vmul.f32 %v2061, 0.0
  %v2089 = vmul.f32 %v2063, 0.0
  %v2090 = vmul.f32 %v2065, 0.0
  %v2091 = vmul.f32 %v2067, 0.0
  %v2092 = vadd.f32 %v2084, %v2088
  %v2093 = vadd.f32 %v2085, %v2089
  %v2094 = vadd.f32 %v2086, %v2090
  %v2095 = vadd.f32 %v2087, %v2091
  %v2096 = vpack.c.bf16 %v2093, %v2092
  %v2097 = vpack.c.bf16 %v2095, %v2094
  %2098 = vmatprep.subr.bf16.mxu0 0
  %2099 = vmatpush1.bf16.msra.mxu0 0
  %2100 = vmatprep.subr.bf16.mxu0 0
  %2101 = vmatpush1.bf16.msra.mxu0 0
  %2102 = vmatprep.subr.bf16.mxu0 0
  %2103 = vmatpush1.bf16.msra.mxu0 0
  %2104 = vmatprep.subr.bf16.mxu0 0
  %2105 = vmatpush1.bf16.msra.mxu0 0
  %2106 = vmatprep.subr.bf16.mxu0 0
  %2107 = vmatpush1.bf16.msra.mxu0 0
  %2108 = vmatprep.subr.bf16.mxu0 0
  %2109 = vmatpush1.bf16.msra.mxu0 0
  %2110 = vmatprep.subr.bf16.mxu0 0
  %2111 = vmatpush1.bf16.msra.mxu0 %v2097
  %2112 = vmatprep.subr.bf16.mxu0 0
  %2113 = vmatpush1.bf16.msra.mxu0 %v2096
  %2114 = vmatprep.subr.bf16.mxu0 0
  %2115 = vmatpush2.bf16.msra.mxu0 0
  %2116 = vmatprep.subr.bf16.mxu0 0
  %2117 = vmatpush2.bf16.msra.mxu0 0
  %2118 = vmatprep.subr.bf16.mxu0 0
  %2119 = vmatpush2.bf16.msra.mxu0 0
  %2120 = vmatprep.subr.bf16.mxu0 0
  %2121 = vmatpush2.bf16.msra.mxu0 0
  %2122 = vmatprep.subr.bf16.mxu0 0
  %2123 = vmatpush2.bf16.msra.mxu0 0
  %2124 = vmatprep.subr.bf16.mxu0 0
  %2125 = vmatpush2.bf16.msra.mxu0 0
  %2126 = vmatprep.subr.bf16.mxu0 0
  %2127 = vmatpush2.bf16.msra.mxu0 0
  %2128 = vmatprep.subr.bf16.mxu0 0
  %2129 = vmatpush2.bf16.msra.mxu0 0
  %2130 = vmatprep.mubr.bf16.mxu0 0
  %2131 = vmatmul.mubr.bf16.gmra.mxu0 %v1914
  %v2132 = vpop.f32.mrf.mxu0
  %v2133 = vadd.f32 %v1826, %v2132
  %v2134 = vpop.f32.mrf.mxu0
  %v2135 = vpop.f32.mrf.mxu0
  %v2136 = vadd.f32 %v1831, %v2135
  %v2137 = vpop.f32.mrf.mxu0
  %2138 = vmatprep.mubr.bf16.mxu0 0
  %2139 = vmatmul.mubr.bf16.gmra.mxu0 %v1917
  %v2140 = vpop.f32.mrf.mxu0
  %v2141 = vadd.f32 %v1836, %v2140
  %v2142 = vpop.f32.mrf.mxu0
  %v2143 = vpop.f32.mrf.mxu0
  %v2144 = vadd.f32 %v1841, %v2143
  %v2145 = vpop.f32.mrf.mxu0
  %2146 = vmatprep.mubr.bf16.mxu0 0
  %2147 = vmatmul.mubr.bf16.gmra.mxu0 %v1920
  %v2148 = vpop.f32.mrf.mxu0
  %v2149 = vadd.f32 %v1846, %v2148
  %v2150 = vpop.f32.mrf.mxu0
  %v2151 = vpop.f32.mrf.mxu0
  %v2152 = vadd.f32 %v1851, %v2151
  %v2153 = vpop.f32.mrf.mxu0
  %2154 = vmatprep.mubr.bf16.mxu0 0
  %2155 = vmatmul.mubr.bf16.gmra.mxu0 %v1923
  %v2156 = vpop.f32.mrf.mxu0
  %v2157 = vadd.f32 %v1856, %v2156
  %v2158 = vpop.f32.mrf.mxu0
  %v2159 = vpop.f32.mrf.mxu0
  %v2160 = vadd.f32 %v1861, %v2159
  %v2161 = vpop.f32.mrf.mxu0
  %2162 = vmatprep.mubr.bf16.mxu0 0
  %2163 = vmatmul.mubr.bf16.gmra.mxu0 %v1926
  %v2164 = vpop.f32.mrf.mxu0
  %v2165 = vadd.f32 %v1866, %v2164
  %v2166 = vpop.f32.mrf.mxu0
  %v2167 = vpop.f32.mrf.mxu0
  %v2168 = vadd.f32 %v1871, %v2167
  %v2169 = vpop.f32.mrf.mxu0
  %2170 = vmatprep.mubr.bf16.mxu0 0
  %2171 = vmatmul.mubr.bf16.gmra.mxu0 %v1929
  %v2172 = vpop.f32.mrf.mxu0
  %v2173 = vadd.f32 %v1876, %v2172
  %v2174 = vpop.f32.mrf.mxu0
  %v2175 = vpop.f32.mrf.mxu0
  %v2176 = vadd.f32 %v1881, %v2175
  %v2177 = vpop.f32.mrf.mxu0
  %2178 = vdwg.mxu0
  %2183 = vrot.lane.b32.xlu0 %v2133, 2
  %v2184 = vpop.permute.xlu0 %2183
  %2185 = vrot.lane.b32.xlu0 %v2136, 2
  %v2186 = vpop.permute.xlu0 %2185
  %2187 = vrot.lane.b32.xlu0 %v2141, 2
  %v2188 = vpop.permute.xlu0 %2187
  %2189 = vrot.lane.b32.xlu0 %v2144, 2
  %v2190 = vpop.permute.xlu0 %2189
  %v2195 = vadd.f32 %v1753, %v2184
  %v2196 = vadd.f32 %v1756, %v2186
  %v2197 = vadd.f32 %v1761, %v2188
  %v2198 = vadd.f32 %v1764, %v2190
  %v2199 = vxor.u32 %v2195, 2147483648
  %v2200 = vxor.u32 %v2196, 2147483648
  %v2201 = vxor.u32 %v2197, 2147483648
  %v2202 = vxor.u32 %v2198, 2147483648
  %v2203 = vmul.f32 %v2199, 1.442695
  %v2204 = vpow.pop %v2203
  %v2205 = vmul.f32 %v2200, 1.442695
  %v2206 = vpow.pop %v2205
  %v2207 = vmul.f32 %v2201, 1.442695
  %v2208 = vpow.pop %v2207
  %v2209 = vmul.f32 %v2202, 1.442695
  %v2210 = vpow.pop %v2209
  %v2211 = vadd.f32 %v2204, 1.0
  %v2212 = vadd.f32 %v2206, 1.0
  %v2213 = vadd.f32 %v2208, 1.0
  %v2214 = vadd.f32 %v2210, 1.0
  %v2215 = vrcp.pop %v2211
  %v2216 = vmul.f32 1.0, %v2215
  %v2217 = vrcp.pop %v2212
  %v2218 = vmul.f32 1.0, %v2217
  %v2219 = vrcp.pop %v2213
  %v2220 = vmul.f32 1.0, %v2219
  %v2221 = vrcp.pop %v2214
  %v2222 = vmul.f32 1.0, %v2221
  %2227 = vrot.lane.b32.xlu0 %v2149, 2
  %v2228 = vpop.permute.xlu0 %2227
  %2229 = vrot.lane.b32.xlu0 %v2152, 2
  %v2230 = vpop.permute.xlu0 %2229
  %2231 = vrot.lane.b32.xlu0 %v2157, 2
  %v2232 = vpop.permute.xlu0 %2231
  %2233 = vrot.lane.b32.xlu0 %v2160, 2
  %v2234 = vpop.permute.xlu0 %2233
  %v2239 = vadd.f32 %v1769, %v2228
  %v2240 = vadd.f32 %v1772, %v2230
  %v2241 = vadd.f32 %v1777, %v2232
  %v2242 = vadd.f32 %v1780, %v2234
  %v2243 = vxor.u32 %v2239, 2147483648
  %v2244 = vxor.u32 %v2240, 2147483648
  %v2245 = vxor.u32 %v2241, 2147483648
  %v2246 = vxor.u32 %v2242, 2147483648
  %v2247 = vmul.f32 %v2243, 1.442695
  %v2248 = vpow.pop %v2247
  %v2249 = vmul.f32 %v2244, 1.442695
  %v2250 = vpow.pop %v2249
  %v2251 = vmul.f32 %v2245, 1.442695
  %v2252 = vpow.pop %v2251
  %v2253 = vmul.f32 %v2246, 1.442695
  %v2254 = vpow.pop %v2253
  %v2255 = vadd.f32 %v2248, 1.0
  %v2256 = vadd.f32 %v2250, 1.0
  %v2257 = vadd.f32 %v2252, 1.0
  %v2258 = vadd.f32 %v2254, 1.0
  %v2259 = vrcp.pop %v2255
  %v2260 = vmul.f32 1.0, %v2259
  %v2261 = vrcp.pop %v2256
  %v2262 = vmul.f32 1.0, %v2261
  %v2263 = vrcp.pop %v2257
  %v2264 = vmul.f32 1.0, %v2263
  %v2265 = vrcp.pop %v2258
  %v2266 = vmul.f32 1.0, %v2265
  %2271 = vrot.lane.b32.xlu0 %v2165, 2
  %v2272 = vpop.permute.xlu0 %2271
  %2273 = vrot.lane.b32.xlu0 %v2168, 2
  %v2274 = vpop.permute.xlu0 %2273
  %2275 = vrot.lane.b32.xlu0 %v2173, 2
  %v2276 = vpop.permute.xlu0 %2275
  %2277 = vrot.lane.b32.xlu0 %v2176, 2
  %v2278 = vpop.permute.xlu0 %2277
  %v2283 = vmul.f32 %v2216, %v2272
  %v2284 = vmul.f32 %v2218, %v2274
  %v2285 = vmul.f32 %v2220, %v2276
  %v2286 = vmul.f32 %v2222, %v2278
  %v2287 = vadd.f32 %v1785, %v2283
  %v2288 = vadd.f32 %v1788, %v2284
  %v2289 = vadd.f32 %v1793, %v2285
  %v2290 = vadd.f32 %v1796, %v2286
  %v2291 = vtanh.pop %v2287
  %v2292 = vtanh.pop %v2288
  %v2293 = vtanh.pop %v2289
  %v2294 = vtanh.pop %v2290
  %v2295 = vsub.f32 1.0, %v2260
  %v2296 = vsub.f32 1.0, %v2262
  %v2297 = vsub.f32 1.0, %v2264
  %v2298 = vsub.f32 1.0, %v2266
  %v2299 = vmul.f32 %v2295, %v2291
  %v2300 = vmul.f32 %v2296, %v2292
  %v2301 = vmul.f32 %v2297, %v2293
  %v2302 = vmul.f32 %v2298, %v2294
  %2307 = vrot.lane.b32.xlu0 %v2092, 2
  %v2308 = vpop.permute.xlu0 %2307
  %2309 = vrot.lane.b32.xlu0 %v2093, 2
  %v2310 = vpop.permute.xlu0 %2309
  %2311 = vrot.lane.b32.xlu0 %v2094, 2
  %v2312 = vpop.permute.xlu0 %2311
  %2313 = vrot.lane.b32.xlu0 %v2095, 2
  %v2314 = vpop.permute.xlu0 %2313
  %v2319 = vmul.f32 %v2260, %v2308
  %v2320 = vmul.f32 %v2262, %v2310
  %v2321 = vmul.f32 %v2264, %v2312
  %v2322 = vmul.f32 %v2266, %v2314
  %v2323 = vadd.f32 %v2299, %v2319
  %v2324 = vadd.f32 %v2300, %v2320
  %v2325 = vadd.f32 %v2301, %v2321
  %v2326 = vadd.f32 %v2302, %v2322
  %v2327 = vpack.c.bf16 %v2324, %v2323
  %v2328 = vpack.c.bf16 %v2326, %v2325
  %2331 = vrot.lane.b32.xlu0 %v2327, 126
  %v2332 = vpop.permute.xlu0 %2331
  %2333 = vrot.lane.b32.xlu0 %v2328, 126
  %v2334 = vpop.permute.xlu0 %2333
  %2337 = vmatprep.subr.bf16.mxu0 0
  %2338 = vmatpush1.bf16.msra.mxu0 0
  %2339 = vmatprep.subr.bf16.mxu0 0
  %2340 = vmatpush1.bf16.msra.mxu0 0
  %2341 = vmatprep.subr.bf16.mxu0 0
  %2342 = vmatpush1.bf16.msra.mxu0 0
  %2343 = vmatprep.subr.bf16.mxu0 0
  %2344 = vmatpush1.bf16.msra.mxu0 0
  %2345 = vmatprep.subr.bf16.mxu0 0
  %2346 = vmatpush1.bf16.msra.mxu0 0
  %2347 = vmatprep.subr.bf16.mxu0 0
  %2348 = vmatpush1.bf16.msra.mxu0 0
  %2349 = vmatprep.subr.bf16.mxu0 0
  %2350 = vmatpush1.bf16.msra.mxu0 %v2334
  %2351 = vmatprep.subr.bf16.mxu0 0
  %2352 = vmatpush1.bf16.msra.mxu0 %v2332
  %2353 = vmatprep.subr.bf16.mxu0 0
  %2354 = vmatpush2.bf16.msra.mxu0 0
  %2355 = vmatprep.subr.bf16.mxu0 0
  %2356 = vmatpush2.bf16.msra.mxu0 0
  %2357 = vmatprep.subr.bf16.mxu0 0
  %2358 = vmatpush2.bf16.msra.mxu0 0
  %2359 = vmatprep.subr.bf16.mxu0 0
  %2360 = vmatpush2.bf16.msra.mxu0 0
  %2361 = vmatprep.subr.bf16.mxu0 0
  %2362 = vmatpush2.bf16.msra.mxu0 0
  %2363 = vmatprep.subr.bf16.mxu0 0
  %2364 = vmatpush2.bf16.msra.mxu0 0
  %2365 = vmatprep.subr.bf16.mxu0 0
  %2366 = vmatpush2.bf16.msra.mxu0 0
  %2367 = vmatprep.subr.bf16.mxu0 0
  %2368 = vmatpush2.bf16.msra.mxu0 0
  %2369 = vmatprep.mubr.bf16.mxu0 0
  %2370 = vmatmul.mubr.bf16.gmra.mxu0 %v1914
  %v2371 = vpop.f32.mrf.mxu0
  %v2372 = vadd.f32 %v1826, %v2371
  %v2373 = vpop.f32.mrf.mxu0
  %v2374 = vpop.f32.mrf.mxu0
  %v2375 = vadd.f32 %v1831, %v2374
  %v2376 = vpop.f32.mrf.mxu0
  %2377 = vmatprep.mubr.bf16.mxu0 0
  %2378 = vmatmul.mubr.bf16.gmra.mxu0 %v1917
  %v2379 = vpop.f32.mrf.mxu0
  %v2380 = vadd.f32 %v1836, %v2379
  %v2381 = vpop.f32.mrf.mxu0
  %v2382 = vpop.f32.mrf.mxu0
  %v2383 = vadd.f32 %v1841, %v2382
  %v2384 = vpop.f32.mrf.mxu0
  %2385 = vmatprep.mubr.bf16.mxu0 0
  %2386 = vmatmul.mubr.bf16.gmra.mxu0 %v1920
  %v2387 = vpop.f32.mrf.mxu0
  %v2388 = vadd.f32 %v1846, %v2387
  %v2389 = vpop.f32.mrf.mxu0
  %v2390 = vpop.f32.mrf.mxu0
  %v2391 = vadd.f32 %v1851, %v2390
  %v2392 = vpop.f32.mrf.mxu0
  %2393 = vmatprep.mubr.bf16.mxu0 0
  %2394 = vmatmul.mubr.bf16.gmra.mxu0 %v1923
  %v2395 = vpop.f32.mrf.mxu0
  %v2396 = vadd.f32 %v1856, %v2395
  %v2397 = vpop.f32.mrf.mxu0
  %v2398 = vpop.f32.mrf.mxu0
  %v2399 = vadd.f32 %v1861, %v2398
  %v2400 = vpop.f32.mrf.mxu0
  %2401 = vmatprep.mubr.bf16.mxu0 0
  %2402 = vmatmul.mubr.bf16.gmra.mxu0 %v1926
  %v2403 = vpop.f32.mrf.mxu0
  %v2404 = vadd.f32 %v1866, %v2403
  %v2405 = vpop.f32.mrf.mxu0
  %v2406 = vpop.f32.mrf.mxu0
  %v2407 = vadd.f32 %v1871, %v2406
  %v2408 = vpop.f32.mrf.mxu0
  %2409 = vmatprep.mubr.bf16.mxu0 0
  %2410 = vmatmul.mubr.bf16.gmra.mxu0 %v1929
  %v2411 = vpop.f32.mrf.mxu0
  %v2412 = vadd.f32 %v1876, %v2411
  %v2413 = vpop.f32.mrf.mxu0
  %v2414 = vpop.f32.mrf.mxu0
  %v2415 = vadd.f32 %v1881, %v2414
  %v2416 = vpop.f32.mrf.mxu0
  %2417 = vdwg.mxu0
  %2422 = vrot.lane.b32.xlu0 %v2372, 4
  %v2423 = vpop.permute.xlu0 %2422
  %2424 = vrot.lane.b32.xlu0 %v2375, 4
  %v2425 = vpop.permute.xlu0 %2424
  %2426 = vrot.lane.b32.xlu0 %v2380, 4
  %v2427 = vpop.permute.xlu0 %2426
  %2428 = vrot.lane.b32.xlu0 %v2383, 4
  %v2429 = vpop.permute.xlu0 %2428
  %v2434 = vadd.f32 %v1753, %v2423
  %v2435 = vadd.f32 %v1756, %v2425
  %v2436 = vadd.f32 %v1761, %v2427
  %v2437 = vadd.f32 %v1764, %v2429
  %v2438 = vxor.u32 %v2434, 2147483648
  %v2439 = vxor.u32 %v2435, 2147483648
  %v2440 = vxor.u32 %v2436, 2147483648
  %v2441 = vxor.u32 %v2437, 2147483648
  %v2442 = vmul.f32 %v2438, 1.442695
  %v2443 = vpow.pop %v2442
  %v2444 = vmul.f32 %v2439, 1.442695
  %v2445 = vpow.pop %v2444
  %v2446 = vmul.f32 %v2440, 1.442695
  %v2447 = vpow.pop %v2446
  %v2448 = vmul.f32 %v2441, 1.442695
  %v2449 = vpow.pop %v2448
  %v2450 = vadd.f32 %v2443, 1.0
  %v2451 = vadd.f32 %v2445, 1.0
  %v2452 = vadd.f32 %v2447, 1.0
  %v2453 = vadd.f32 %v2449, 1.0
  %v2454 = vrcp.pop %v2450
  %v2455 = vmul.f32 1.0, %v2454
  %v2456 = vrcp.pop %v2451
  %v2457 = vmul.f32 1.0, %v2456
  %v2458 = vrcp.pop %v2452
  %v2459 = vmul.f32 1.0, %v2458
  %v2460 = vrcp.pop %v2453
  %v2461 = vmul.f32 1.0, %v2460
  %2466 = vrot.lane.b32.xlu0 %v2388, 4
  %v2467 = vpop.permute.xlu0 %2466
  %2468 = vrot.lane.b32.xlu0 %v2391, 4
  %v2469 = vpop.permute.xlu0 %2468
  %2470 = vrot.lane.b32.xlu0 %v2396, 4
  %v2471 = vpop.permute.xlu0 %2470
  %2472 = vrot.lane.b32.xlu0 %v2399, 4
  %v2473 = vpop.permute.xlu0 %2472
  %v2478 = vadd.f32 %v1769, %v2467
  %v2479 = vadd.f32 %v1772, %v2469
  %v2480 = vadd.f32 %v1777, %v2471
  %v2481 = vadd.f32 %v1780, %v2473
  %v2482 = vxor.u32 %v2478, 2147483648
  %v2483 = vxor.u32 %v2479, 2147483648
  %v2484 = vxor.u32 %v2480, 2147483648
  %v2485 = vxor.u32 %v2481, 2147483648
  %v2486 = vmul.f32 %v2482, 1.442695
  %v2487 = vpow.pop %v2486
  %v2488 = vmul.f32 %v2483, 1.442695
  %v2489 = vpow.pop %v2488
  %v2490 = vmul.f32 %v2484, 1.442695
  %v2491 = vpow.pop %v2490
  %v2492 = vmul.f32 %v2485, 1.442695
  %v2493 = vpow.pop %v2492
  %v2494 = vadd.f32 %v2487, 1.0
  %v2495 = vadd.f32 %v2489, 1.0
  %v2496 = vadd.f32 %v2491, 1.0
  %v2497 = vadd.f32 %v2493, 1.0
  %v2498 = vrcp.pop %v2494
  %v2499 = vmul.f32 1.0, %v2498
  %v2500 = vrcp.pop %v2495
  %v2501 = vmul.f32 1.0, %v2500
  %v2502 = vrcp.pop %v2496
  %v2503 = vmul.f32 1.0, %v2502
  %v2504 = vrcp.pop %v2497
  %v2505 = vmul.f32 1.0, %v2504
  %2510 = vrot.lane.b32.xlu0 %v2404, 4
  %v2511 = vpop.permute.xlu0 %2510
  %2512 = vrot.lane.b32.xlu0 %v2407, 4
  %v2513 = vpop.permute.xlu0 %2512
  %2514 = vrot.lane.b32.xlu0 %v2412, 4
  %v2515 = vpop.permute.xlu0 %2514
  %2516 = vrot.lane.b32.xlu0 %v2415, 4
  %v2517 = vpop.permute.xlu0 %2516
  %v2522 = vmul.f32 %v2455, %v2511
  %v2523 = vmul.f32 %v2457, %v2513
  %v2524 = vmul.f32 %v2459, %v2515
  %v2525 = vmul.f32 %v2461, %v2517
  %v2526 = vadd.f32 %v1785, %v2522
  %v2527 = vadd.f32 %v1788, %v2523
  %v2528 = vadd.f32 %v1793, %v2524
  %v2529 = vadd.f32 %v1796, %v2525
  %v2530 = vtanh.pop %v2526
  %v2531 = vtanh.pop %v2527
  %v2532 = vtanh.pop %v2528
  %v2533 = vtanh.pop %v2529
  %v2534 = vsub.f32 1.0, %v2499
  %v2535 = vsub.f32 1.0, %v2501
  %v2536 = vsub.f32 1.0, %v2503
  %v2537 = vsub.f32 1.0, %v2505
  %v2538 = vmul.f32 %v2534, %v2530
  %v2539 = vmul.f32 %v2535, %v2531
  %v2540 = vmul.f32 %v2536, %v2532
  %v2541 = vmul.f32 %v2537, %v2533
  %2546 = vrot.lane.b32.xlu0 %v2323, 2
  %v2547 = vpop.permute.xlu0 %2546
  %2548 = vrot.lane.b32.xlu0 %v2324, 2
  %v2549 = vpop.permute.xlu0 %2548
  %2550 = vrot.lane.b32.xlu0 %v2325, 2
  %v2551 = vpop.permute.xlu0 %2550
  %2552 = vrot.lane.b32.xlu0 %v2326, 2
  %v2553 = vpop.permute.xlu0 %2552
  %v2558 = vmul.f32 %v2499, %v2547
  %v2559 = vmul.f32 %v2501, %v2549
  %v2560 = vmul.f32 %v2503, %v2551
  %v2561 = vmul.f32 %v2505, %v2553
  %v2562 = vadd.f32 %v2538, %v2558
  %v2563 = vadd.f32 %v2539, %v2559
  %v2564 = vadd.f32 %v2540, %v2560
  %v2565 = vadd.f32 %v2541, %v2561
  %v2566 = vpack.c.bf16 %v2563, %v2562
  %v2567 = vpack.c.bf16 %v2565, %v2564
  %2570 = vrot.lane.b32.xlu0 %v2566, 124
  %v2571 = vpop.permute.xlu0 %2570
  %2572 = vrot.lane.b32.xlu0 %v2567, 124
  %v2573 = vpop.permute.xlu0 %2572
  %2576 = vmatprep.subr.bf16.mxu0 0
  %2577 = vmatpush1.bf16.msra.mxu0 0
  %2578 = vmatprep.subr.bf16.mxu0 0
  %2579 = vmatpush1.bf16.msra.mxu0 0
  %2580 = vmatprep.subr.bf16.mxu0 0
  %2581 = vmatpush1.bf16.msra.mxu0 0
  %2582 = vmatprep.subr.bf16.mxu0 0
  %2583 = vmatpush1.bf16.msra.mxu0 0
  %2584 = vmatprep.subr.bf16.mxu0 0
  %2585 = vmatpush1.bf16.msra.mxu0 0
  %2586 = vmatprep.subr.bf16.mxu0 0
  %2587 = vmatpush1.bf16.msra.mxu0 0
  %2588 = vmatprep.subr.bf16.mxu0 0
  %2589 = vmatpush1.bf16.msra.mxu0 %v2573
  %2590 = vmatprep.subr.bf16.mxu0 0
  %2591 = vmatpush1.bf16.msra.mxu0 %v2571
  %2592 = vmatprep.subr.bf16.mxu0 0
  %2593 = vmatpush2.bf16.msra.mxu0 0
  %2594 = vmatprep.subr.bf16.mxu0 0
  %2595 = vmatpush2.bf16.msra.mxu0 0
  %2596 = vmatprep.subr.bf16.mxu0 0
  %2597 = vmatpush2.bf16.msra.mxu0 0
  %2598 = vmatprep.subr.bf16.mxu0 0
  %2599 = vmatpush2.bf16.msra.mxu0 0
  %2600 = vmatprep.subr.bf16.mxu0 0
  %2601 = vmatpush2.bf16.msra.mxu0 0
  %2602 = vmatprep.subr.bf16.mxu0 0
  %2603 = vmatpush2.bf16.msra.mxu0 0
  %2604 = vmatprep.subr.bf16.mxu0 0
  %2605 = vmatpush2.bf16.msra.mxu0 0
  %2606 = vmatprep.subr.bf16.mxu0 0
  %2607 = vmatpush2.bf16.msra.mxu0 0
  %2608 = vmatprep.mubr.bf16.mxu0 0
  %2609 = vmatmul.mubr.bf16.gmra.mxu0 %v1914
  %v2610 = vpop.f32.mrf.mxu0
  %v2611 = vadd.f32 %v1826, %v2610
  %v2612 = vpop.f32.mrf.mxu0
  %v2613 = vpop.f32.mrf.mxu0
  %v2614 = vadd.f32 %v1831, %v2613
  %v2615 = vpop.f32.mrf.mxu0
  %2616 = vmatprep.mubr.bf16.mxu0 0
  %2617 = vmatmul.mubr.bf16.gmra.mxu0 %v1917
  %v2618 = vpop.f32.mrf.mxu0
  %v2619 = vadd.f32 %v1836, %v2618
  %v2620 = vpop.f32.mrf.mxu0
  %v2621 = vpop.f32.mrf.mxu0
  %v2622 = vadd.f32 %v1841, %v2621
  %v2623 = vpop.f32.mrf.mxu0
  %2624 = vmatprep.mubr.bf16.mxu0 0
  %2625 = vmatmul.mubr.bf16.gmra.mxu0 %v1920
  %v2626 = vpop.f32.mrf.mxu0
  %v2627 = vadd.f32 %v1846, %v2626
  %v2628 = vpop.f32.mrf.mxu0
  %v2629 = vpop.f32.mrf.mxu0
  %v2630 = vadd.f32 %v1851, %v2629
  %v2631 = vpop.f32.mrf.mxu0
  %2632 = vmatprep.mubr.bf16.mxu0 0
  %2633 = vmatmul.mubr.bf16.gmra.mxu0 %v1923
  %v2634 = vpop.f32.mrf.mxu0
  %v2635 = vadd.f32 %v1856, %v2634
  %v2636 = vpop.f32.mrf.mxu0
  %v2637 = vpop.f32.mrf.mxu0
  %v2638 = vadd.f32 %v1861, %v2637
  %v2639 = vpop.f32.mrf.mxu0
  %2640 = vmatprep.mubr.bf16.mxu0 0
  %2641 = vmatmul.mubr.bf16.gmra.mxu0 %v1926
  %v2642 = vpop.f32.mrf.mxu0
  %v2643 = vadd.f32 %v1866, %v2642
  %v2644 = vpop.f32.mrf.mxu0
  %v2645 = vpop.f32.mrf.mxu0
  %v2646 = vadd.f32 %v1871, %v2645
  %v2647 = vpop.f32.mrf.mxu0
  %2648 = vmatprep.mubr.bf16.mxu0 0
  %2649 = vmatmul.mubr.bf16.gmra.mxu0 %v1929
  %v2650 = vpop.f32.mrf.mxu0
  %v2651 = vadd.f32 %v1876, %v2650
  %v2652 = vpop.f32.mrf.mxu0
  %v2653 = vpop.f32.mrf.mxu0
  %v2654 = vadd.f32 %v1881, %v2653
  %v2655 = vpop.f32.mrf.mxu0
  %2656 = vdwg.mxu0
  %2661 = vrot.lane.b32.xlu0 %v2611, 6
  %v2662 = vpop.permute.xlu0 %2661
  %2663 = vrot.lane.b32.xlu0 %v2614, 6
  %v2664 = vpop.permute.xlu0 %2663
  %2665 = vrot.lane.b32.xlu0 %v2619, 6
  %v2666 = vpop.permute.xlu0 %2665
  %2667 = vrot.lane.b32.xlu0 %v2622, 6
  %v2668 = vpop.permute.xlu0 %2667
  %v2673 = vadd.f32 %v1753, %v2662
  %v2674 = vadd.f32 %v1756, %v2664
  %v2675 = vadd.f32 %v1761, %v2666
  %v2676 = vadd.f32 %v1764, %v2668
  %v2677 = vxor.u32 %v2673, 2147483648
  %v2678 = vxor.u32 %v2674, 2147483648
  %v2679 = vxor.u32 %v2675, 2147483648
  %v2680 = vxor.u32 %v2676, 2147483648
  %v2681 = vmul.f32 %v2677, 1.442695
  %v2682 = vpow.pop %v2681
  %v2683 = vmul.f32 %v2678, 1.442695
  %v2684 = vpow.pop %v2683
  %v2685 = vmul.f32 %v2679, 1.442695
  %v2686 = vpow.pop %v2685
  %v2687 = vmul.f32 %v2680, 1.442695
  %v2688 = vpow.pop %v2687
  %v2689 = vadd.f32 %v2682, 1.0
  %v2690 = vadd.f32 %v2684, 1.0
  %v2691 = vadd.f32 %v2686, 1.0
  %v2692 = vadd.f32 %v2688, 1.0
  %v2693 = vrcp.pop %v2689
  %v2694 = vmul.f32 1.0, %v2693
  %v2695 = vrcp.pop %v2690
  %v2696 = vmul.f32 1.0, %v2695
  %v2697 = vrcp.pop %v2691
  %v2698 = vmul.f32 1.0, %v2697
  %v2699 = vrcp.pop %v2692
  %v2700 = vmul.f32 1.0, %v2699
  %2705 = vrot.lane.b32.xlu0 %v2627, 6
  %v2706 = vpop.permute.xlu0 %2705
  %2707 = vrot.lane.b32.xlu0 %v2630, 6
  %v2708 = vpop.permute.xlu0 %2707
  %2709 = vrot.lane.b32.xlu0 %v2635, 6
  %v2710 = vpop.permute.xlu0 %2709
  %2711 = vrot.lane.b32.xlu0 %v2638, 6
  %v2712 = vpop.permute.xlu0 %2711
  %v2717 = vadd.f32 %v1769, %v2706
  %v2718 = vadd.f32 %v1772, %v2708
  %v2719 = vadd.f32 %v1777, %v2710
  %v2720 = vadd.f32 %v1780, %v2712
  %v2721 = vxor.u32 %v2717, 2147483648
  %v2722 = vxor.u32 %v2718, 2147483648
  %v2723 = vxor.u32 %v2719, 2147483648
  %v2724 = vxor.u32 %v2720, 2147483648
  %v2725 = vmul.f32 %v2721, 1.442695
  %v2726 = vpow.pop %v2725
  %v2727 = vmul.f32 %v2722, 1.442695
  %v2728 = vpow.pop %v2727
  %v2729 = vmul.f32 %v2723, 1.442695
  %v2730 = vpow.pop %v2729
  %v2731 = vmul.f32 %v2724, 1.442695
  %v2732 = vpow.pop %v2731
  %v2733 = vadd.f32 %v2726, 1.0
  %v2734 = vadd.f32 %v2728, 1.0
  %v2735 = vadd.f32 %v2730, 1.0
  %v2736 = vadd.f32 %v2732, 1.0
  %v2737 = vrcp.pop %v2733
  %v2738 = vmul.f32 1.0, %v2737
  %v2739 = vrcp.pop %v2734
  %v2740 = vmul.f32 1.0, %v2739
  %v2741 = vrcp.pop %v2735
  %v2742 = vmul.f32 1.0, %v2741
  %v2743 = vrcp.pop %v2736
  %v2744 = vmul.f32 1.0, %v2743
  %2749 = vrot.lane.b32.xlu0 %v2643, 6
  %v2750 = vpop.permute.xlu0 %2749
  %2751 = vrot.lane.b32.xlu0 %v2646, 6
  %v2752 = vpop.permute.xlu0 %2751
  %2753 = vrot.lane.b32.xlu0 %v2651, 6
  %v2754 = vpop.permute.xlu0 %2753
  %2755 = vrot.lane.b32.xlu0 %v2654, 6
  %v2756 = vpop.permute.xlu0 %2755
  %v2761 = vmul.f32 %v2694, %v2750
  %v2762 = vmul.f32 %v2696, %v2752
  %v2763 = vmul.f32 %v2698, %v2754
  %v2764 = vmul.f32 %v2700, %v2756
  %v2765 = vadd.f32 %v1785, %v2761
  %v2766 = vadd.f32 %v1788, %v2762
  %v2767 = vadd.f32 %v1793, %v2763
  %v2768 = vadd.f32 %v1796, %v2764
  %v2769 = vtanh.pop %v2765
  %v2770 = vtanh.pop %v2766
  %v2771 = vtanh.pop %v2767
  %v2772 = vtanh.pop %v2768
  %v2773 = vsub.f32 1.0, %v2738
  %v2774 = vsub.f32 1.0, %v2740
  %v2775 = vsub.f32 1.0, %v2742
  %v2776 = vsub.f32 1.0, %v2744
  %v2777 = vmul.f32 %v2773, %v2769
  %v2778 = vmul.f32 %v2774, %v2770
  %v2779 = vmul.f32 %v2775, %v2771
  %v2780 = vmul.f32 %v2776, %v2772
  %2785 = vrot.lane.b32.xlu0 %v2562, 2
  %v2786 = vpop.permute.xlu0 %2785
  %2787 = vrot.lane.b32.xlu0 %v2563, 2
  %v2788 = vpop.permute.xlu0 %2787
  %2789 = vrot.lane.b32.xlu0 %v2564, 2
  %v2790 = vpop.permute.xlu0 %2789
  %2791 = vrot.lane.b32.xlu0 %v2565, 2
  %v2792 = vpop.permute.xlu0 %2791
  %v2797 = vmul.f32 %v2738, %v2786
  %v2798 = vmul.f32 %v2740, %v2788
  %v2799 = vmul.f32 %v2742, %v2790
  %v2800 = vmul.f32 %v2744, %v2792
  %v2801 = vadd.f32 %v2777, %v2797
  %v2802 = vadd.f32 %v2778, %v2798
  %v2803 = vadd.f32 %v2779, %v2799
  %v2804 = vadd.f32 %v2780, %v2800
  %v2805 = vpack.c.bf16 %v2802, %v2801
  %v2806 = vpack.c.bf16 %v2804, %v2803
  %2809 = vrot.lane.b32.xlu0 %v2805, 122
  %v2810 = vpop.permute.xlu0 %2809
  %2811 = vrot.lane.b32.xlu0 %v2806, 122
  %v2812 = vpop.permute.xlu0 %2811
  %2815 = vmatprep.subr.bf16.mxu0 0
  %2816 = vmatpush1.bf16.msra.mxu0 0
  %2817 = vmatprep.subr.bf16.mxu0 0
  %2818 = vmatpush1.bf16.msra.mxu0 0
  %2819 = vmatprep.subr.bf16.mxu0 0
  %2820 = vmatpush1.bf16.msra.mxu0 0
  %2821 = vmatprep.subr.bf16.mxu0 0
  %2822 = vmatpush1.bf16.msra.mxu0 0
  %2823 = vmatprep.subr.bf16.mxu0 0
  %2824 = vmatpush1.bf16.msra.mxu0 0
  %2825 = vmatprep.subr.bf16.mxu0 0
  %2826 = vmatpush1.bf16.msra.mxu0 0
  %2827 = vmatprep.subr.bf16.mxu0 0
  %2828 = vmatpush1.bf16.msra.mxu0 %v2812
  %2829 = vmatprep.subr.bf16.mxu0 0
  %2830 = vmatpush1.bf16.msra.mxu0 %v2810
  %2831 = vmatprep.subr.bf16.mxu0 0
  %2832 = vmatpush2.bf16.msra.mxu0 0
  %2833 = vmatprep.subr.bf16.mxu0 0
  %2834 = vmatpush2.bf16.msra.mxu0 0
  %2835 = vmatprep.subr.bf16.mxu0 0
  %2836 = vmatpush2.bf16.msra.mxu0 0
  %2837 = vmatprep.subr.bf16.mxu0 0
  %2838 = vmatpush2.bf16.msra.mxu0 0
  %2839 = vmatprep.subr.bf16.mxu0 0
  %2840 = vmatpush2.bf16.msra.mxu0 0
  %2841 = vmatprep.subr.bf16.mxu0 0
  %2842 = vmatpush2.bf16.msra.mxu0 0
  %2843 = vmatprep.subr.bf16.mxu0 0
  %2844 = vmatpush2.bf16.msra.mxu0 0
  %2845 = vmatprep.subr.bf16.mxu0 0
  %2846 = vmatpush2.bf16.msra.mxu0 0
  %2847 = vmatprep.mubr.bf16.mxu0 0
  %2848 = vmatmul.mubr.bf16.gmra.mxu0 %v1914
  %v2849 = vpop.f32.mrf.mxu0
  %v2850 = vadd.f32 %v1826, %v2849
  %v2851 = vpop.f32.mrf.mxu0
  %v2852 = vpop.f32.mrf.mxu0
  %v2853 = vadd.f32 %v1831, %v2852
  %v2854 = vpop.f32.mrf.mxu0
  %2855 = vmatprep.mubr.bf16.mxu0 0
  %2856 = vmatmul.mubr.bf16.gmra.mxu0 %v1917
  %v2857 = vpop.f32.mrf.mxu0
  %v2858 = vadd.f32 %v1836, %v2857
  %v2859 = vpop.f32.mrf.mxu0
  %v2860 = vpop.f32.mrf.mxu0
  %v2861 = vadd.f32 %v1841, %v2860
  %v2862 = vpop.f32.mrf.mxu0
  %2863 = vmatprep.mubr.bf16.mxu0 0
  %2864 = vmatmul.mubr.bf16.gmra.mxu0 %v1920
  %v2865 = vpop.f32.mrf.mxu0
  %v2866 = vadd.f32 %v1846, %v2865
  %v2867 = vpop.f32.mrf.mxu0
  %v2868 = vpop.f32.mrf.mxu0
  %v2869 = vadd.f32 %v1851, %v2868
  %v2870 = vpop.f32.mrf.mxu0
  %2871 = vmatprep.mubr.bf16.mxu0 0
  %2872 = vmatmul.mubr.bf16.gmra.mxu0 %v1923
  %v2873 = vpop.f32.mrf.mxu0
  %v2874 = vadd.f32 %v1856, %v2873
  %v2875 = vpop.f32.mrf.mxu0
  %v2876 = vpop.f32.mrf.mxu0
  %v2877 = vadd.f32 %v1861, %v2876
  %v2878 = vpop.f32.mrf.mxu0
  %2879 = vmatprep.mubr.bf16.mxu0 0
  %2880 = vmatmul.mubr.bf16.gmra.mxu0 %v1926
  %v2881 = vpop.f32.mrf.mxu0
  %v2882 = vadd.f32 %v1866, %v2881
  %v2883 = vpop.f32.mrf.mxu0
  %v2884 = vpop.f32.mrf.mxu0
  %v2885 = vadd.f32 %v1871, %v2884
  %v2886 = vpop.f32.mrf.mxu0
  %2887 = vmatprep.mubr.bf16.mxu0 0
  %2888 = vmatmul.mubr.bf16.gmra.mxu0 %v1929
  %v2889 = vpop.f32.mrf.mxu0
  %v2890 = vadd.f32 %v1876, %v2889
  %v2891 = vpop.f32.mrf.mxu0
  %v2892 = vpop.f32.mrf.mxu0
  %v2893 = vadd.f32 %v1881, %v2892
  %v2894 = vpop.f32.mrf.mxu0
  %2895 = vdwg.mxu0
  %2900 = vrot.lane.b32.xlu0 %v2850, 8
  %v2901 = vpop.permute.xlu0 %2900
  %2902 = vrot.lane.b32.xlu0 %v2853, 8
  %v2903 = vpop.permute.xlu0 %2902
  %2904 = vrot.lane.b32.xlu0 %v2858, 8
  %v2905 = vpop.permute.xlu0 %2904
  %2906 = vrot.lane.b32.xlu0 %v2861, 8
  %v2907 = vpop.permute.xlu0 %2906
  %v2912 = vadd.f32 %v1753, %v2901
  %v2913 = vadd.f32 %v1756, %v2903
  %v2914 = vadd.f32 %v1761, %v2905
  %v2915 = vadd.f32 %v1764, %v2907
  %v2916 = vxor.u32 %v2912, 2147483648
  %v2917 = vxor.u32 %v2913, 2147483648
  %v2918 = vxor.u32 %v2914, 2147483648
  %v2919 = vxor.u32 %v2915, 2147483648
  %v2920 = vmul.f32 %v2916, 1.442695
  %v2921 = vpow.pop %v2920
  %v2922 = vmul.f32 %v2917, 1.442695
  %v2923 = vpow.pop %v2922
  %v2924 = vmul.f32 %v2918, 1.442695
  %v2925 = vpow.pop %v2924
  %v2926 = vmul.f32 %v2919, 1.442695
  %v2927 = vpow.pop %v2926
  %v2928 = vadd.f32 %v2921, 1.0
  %v2929 = vadd.f32 %v2923, 1.0
  %v2930 = vadd.f32 %v2925, 1.0
  %v2931 = vadd.f32 %v2927, 1.0
  %v2932 = vrcp.pop %v2928
  %v2933 = vmul.f32 1.0, %v2932
  %v2934 = vrcp.pop %v2929
  %v2935 = vmul.f32 1.0, %v2934
  %v2936 = vrcp.pop %v2930
  %v2937 = vmul.f32 1.0, %v2936
  %v2938 = vrcp.pop %v2931
  %v2939 = vmul.f32 1.0, %v2938
  %2944 = vrot.lane.b32.xlu0 %v2866, 8
  %v2945 = vpop.permute.xlu0 %2944
  %2946 = vrot.lane.b32.xlu0 %v2869, 8
  %v2947 = vpop.permute.xlu0 %2946
  %2948 = vrot.lane.b32.xlu0 %v2874, 8
  %v2949 = vpop.permute.xlu0 %2948
  %2950 = vrot.lane.b32.xlu0 %v2877, 8
  %v2951 = vpop.permute.xlu0 %2950
  %v2956 = vadd.f32 %v1769, %v2945
  %v2957 = vadd.f32 %v1772, %v2947
  %v2958 = vadd.f32 %v1777, %v2949
  %v2959 = vadd.f32 %v1780, %v2951
  %v2960 = vxor.u32 %v2956, 2147483648
  %v2961 = vxor.u32 %v2957, 2147483648
  %v2962 = vxor.u32 %v2958, 2147483648
  %v2963 = vxor.u32 %v2959, 2147483648
  %v2964 = vmul.f32 %v2960, 1.442695
  %v2965 = vpow.pop %v2964
  %v2966 = vmul.f32 %v2961, 1.442695
  %v2967 = vpow.pop %v2966
  %v2968 = vmul.f32 %v2962, 1.442695
  %v2969 = vpow.pop %v2968
  %v2970 = vmul.f32 %v2963, 1.442695
  %v2971 = vpow.pop %v2970
  %v2972 = vadd.f32 %v2965, 1.0
  %v2973 = vadd.f32 %v2967, 1.0
  %v2974 = vadd.f32 %v2969, 1.0
  %v2975 = vadd.f32 %v2971, 1.0
  %v2976 = vrcp.pop %v2972
  %v2977 = vmul.f32 1.0, %v2976
  %v2978 = vrcp.pop %v2973
  %v2979 = vmul.f32 1.0, %v2978
  %v2980 = vrcp.pop %v2974
  %v2981 = vmul.f32 1.0, %v2980
  %v2982 = vrcp.pop %v2975
  %v2983 = vmul.f32 1.0, %v2982
  %2988 = vrot.lane.b32.xlu0 %v2882, 8
  %v2989 = vpop.permute.xlu0 %2988
  %2990 = vrot.lane.b32.xlu0 %v2885, 8
  %v2991 = vpop.permute.xlu0 %2990
  %2992 = vrot.lane.b32.xlu0 %v2890, 8
  %v2993 = vpop.permute.xlu0 %2992
  %2994 = vrot.lane.b32.xlu0 %v2893, 8
  %v2995 = vpop.permute.xlu0 %2994
  %v3000 = vmul.f32 %v2933, %v2989
  %v3001 = vmul.f32 %v2935, %v2991
  %v3002 = vmul.f32 %v2937, %v2993
  %v3003 = vmul.f32 %v2939, %v2995
  %v3004 = vadd.f32 %v1785, %v3000
  %v3005 = vadd.f32 %v1788, %v3001
  %v3006 = vadd.f32 %v1793, %v3002
  %v3007 = vadd.f32 %v1796, %v3003
  %v3008 = vtanh.pop %v3004
  %v3009 = vtanh.pop %v3005
  %v3010 = vtanh.pop %v3006
  %v3011 = vtanh.pop %v3007
  %v3012 = vsub.f32 1.0, %v2977
  %v3013 = vsub.f32 1.0, %v2979
  %v3014 = vsub.f32 1.0, %v2981
  %v3015 = vsub.f32 1.0, %v2983
  %v3016 = vmul.f32 %v3012, %v3008
  %v3017 = vmul.f32 %v3013, %v3009
  %v3018 = vmul.f32 %v3014, %v3010
  %v3019 = vmul.f32 %v3015, %v3011
  %3024 = vrot.lane.b32.xlu0 %v2801, 2
  %v3025 = vpop.permute.xlu0 %3024
  %3026 = vrot.lane.b32.xlu0 %v2802, 2
  %v3027 = vpop.permute.xlu0 %3026
  %3028 = vrot.lane.b32.xlu0 %v2803, 2
  %v3029 = vpop.permute.xlu0 %3028
  %3030 = vrot.lane.b32.xlu0 %v2804, 2
  %v3031 = vpop.permute.xlu0 %3030
  %v3036 = vmul.f32 %v2977, %v3025
  %v3037 = vmul.f32 %v2979, %v3027
  %v3038 = vmul.f32 %v2981, %v3029
  %v3039 = vmul.f32 %v2983, %v3031
  %v3040 = vadd.f32 %v3016, %v3036
  %v3041 = vadd.f32 %v3017, %v3037
  %v3042 = vadd.f32 %v3018, %v3038
  %v3043 = vadd.f32 %v3019, %v3039
  %v3044 = vpack.c.bf16 %v3041, %v3040
  %v3045 = vpack.c.bf16 %v3043, %v3042
  %3048 = vrot.lane.b32.xlu0 %v3044, 120
  %v3049 = vpop.permute.xlu0 %3048
  %3050 = vrot.lane.b32.xlu0 %v3045, 120
  %v3051 = vpop.permute.xlu0 %3050
  %3054 = vmatprep.subr.bf16.mxu0 0
  %3055 = vmatpush1.bf16.msra.mxu0 0
  %3056 = vmatprep.subr.bf16.mxu0 0
  %3057 = vmatpush1.bf16.msra.mxu0 0
  %3058 = vmatprep.subr.bf16.mxu0 0
  %3059 = vmatpush1.bf16.msra.mxu0 0
  %3060 = vmatprep.subr.bf16.mxu0 0
  %3061 = vmatpush1.bf16.msra.mxu0 0
  %3062 = vmatprep.subr.bf16.mxu0 0
  %3063 = vmatpush1.bf16.msra.mxu0 0
  %3064 = vmatprep.subr.bf16.mxu0 0
  %3065 = vmatpush1.bf16.msra.mxu0 0
  %3066 = vmatprep.subr.bf16.mxu0 0
  %3067 = vmatpush1.bf16.msra.mxu0 %v3051
  %3068 = vmatprep.subr.bf16.mxu0 0
  %3069 = vmatpush1.bf16.msra.mxu0 %v3049
  %3070 = vmatprep.subr.bf16.mxu0 0
  %3071 = vmatpush2.bf16.msra.mxu0 0
  %3072 = vmatprep.subr.bf16.mxu0 0
  %3073 = vmatpush2.bf16.msra.mxu0 0
  %3074 = vmatprep.subr.bf16.mxu0 0
  %3075 = vmatpush2.bf16.msra.mxu0 0
  %3076 = vmatprep.subr.bf16.mxu0 0
  %3077 = vmatpush2.bf16.msra.mxu0 0
  %3078 = vmatprep.subr.bf16.mxu0 0
  %3079 = vmatpush2.bf16.msra.mxu0 0
  %3080 = vmatprep.subr.bf16.mxu0 0
  %3081 = vmatpush2.bf16.msra.mxu0 0
  %3082 = vmatprep.subr.bf16.mxu0 0
  %3083 = vmatpush2.bf16.msra.mxu0 0
  %3084 = vmatprep.subr.bf16.mxu0 0
  %3085 = vmatpush2.bf16.msra.mxu0 0
  %3086 = vmatprep.mubr.bf16.mxu0 0
  %3087 = vmatmul.mubr.bf16.gmra.mxu0 %v1914
  %v3088 = vpop.f32.mrf.mxu0
  %v3089 = vadd.f32 %v1826, %v3088
  %v3090 = vpop.f32.mrf.mxu0
  %v3091 = vpop.f32.mrf.mxu0
  %v3092 = vadd.f32 %v1831, %v3091
  %v3093 = vpop.f32.mrf.mxu0
  %3094 = vmatprep.mubr.bf16.mxu0 0
  %3095 = vmatmul.mubr.bf16.gmra.mxu0 %v1917
  %v3096 = vpop.f32.mrf.mxu0
  %v3097 = vadd.f32 %v1836, %v3096
  %v3098 = vpop.f32.mrf.mxu0
  %v3099 = vpop.f32.mrf.mxu0
  %v3100 = vadd.f32 %v1841, %v3099
  %v3101 = vpop.f32.mrf.mxu0
  %3102 = vmatprep.mubr.bf16.mxu0 0
  %3103 = vmatmul.mubr.bf16.gmra.mxu0 %v1920
  %v3104 = vpop.f32.mrf.mxu0
  %v3105 = vadd.f32 %v1846, %v3104
  %v3106 = vpop.f32.mrf.mxu0
  %v3107 = vpop.f32.mrf.mxu0
  %v3108 = vadd.f32 %v1851, %v3107
  %v3109 = vpop.f32.mrf.mxu0
  %3110 = vmatprep.mubr.bf16.mxu0 0
  %3111 = vmatmul.mubr.bf16.gmra.mxu0 %v1923
  %v3112 = vpop.f32.mrf.mxu0
  %v3113 = vadd.f32 %v1856, %v3112
  %v3114 = vpop.f32.mrf.mxu0
  %v3115 = vpop.f32.mrf.mxu0
  %v3116 = vadd.f32 %v1861, %v3115
  %v3117 = vpop.f32.mrf.mxu0
  %3118 = vmatprep.mubr.bf16.mxu0 0
  %3119 = vmatmul.mubr.bf16.gmra.mxu0 %v1926
  %v3120 = vpop.f32.mrf.mxu0
  %v3121 = vadd.f32 %v1866, %v3120
  %v3122 = vpop.f32.mrf.mxu0
  %v3123 = vpop.f32.mrf.mxu0
  %v3124 = vadd.f32 %v1871, %v3123
  %v3125 = vpop.f32.mrf.mxu0
  %3126 = vmatprep.mubr.bf16.mxu0 0
  %3127 = vmatmul.mubr.bf16.gmra.mxu0 %v1929
  %v3128 = vpop.f32.mrf.mxu0
  %v3129 = vadd.f32 %v1876, %v3128
  %v3130 = vpop.f32.mrf.mxu0
  %v3131 = vpop.f32.mrf.mxu0
  %v3132 = vadd.f32 %v1881, %v3131
  %v3133 = vpop.f32.mrf.mxu0
  %3134 = vdwg.mxu0
  %3139 = vrot.lane.b32.xlu0 %v3089, 10
  %v3140 = vpop.permute.xlu0 %3139
  %3141 = vrot.lane.b32.xlu0 %v3092, 10
  %v3142 = vpop.permute.xlu0 %3141
  %3143 = vrot.lane.b32.xlu0 %v3097, 10
  %v3144 = vpop.permute.xlu0 %3143
  %3145 = vrot.lane.b32.xlu0 %v3100, 10
  %v3146 = vpop.permute.xlu0 %3145
  %v3151 = vadd.f32 %v1753, %v3140
  %v3152 = vadd.f32 %v1756, %v3142
  %v3153 = vadd.f32 %v1761, %v3144
  %v3154 = vadd.f32 %v1764, %v3146
  %v3155 = vxor.u32 %v3151, 2147483648
  %v3156 = vxor.u32 %v3152, 2147483648
  %v3157 = vxor.u32 %v3153, 2147483648
  %v3158 = vxor.u32 %v3154, 2147483648
  %v3159 = vmul.f32 %v3155, 1.442695
  %v3160 = vpow.pop %v3159
  %v3161 = vmul.f32 %v3156, 1.442695
  %v3162 = vpow.pop %v3161
  %v3163 = vmul.f32 %v3157, 1.442695
  %v3164 = vpow.pop %v3163
  %v3165 = vmul.f32 %v3158, 1.442695
  %v3166 = vpow.pop %v3165
  %v3167 = vadd.f32 %v3160, 1.0
  %v3168 = vadd.f32 %v3162, 1.0
  %v3169 = vadd.f32 %v3164, 1.0
  %v3170 = vadd.f32 %v3166, 1.0
  %v3171 = vrcp.pop %v3167
  %v3172 = vmul.f32 1.0, %v3171
  %v3173 = vrcp.pop %v3168
  %v3174 = vmul.f32 1.0, %v3173
  %v3175 = vrcp.pop %v3169
  %v3176 = vmul.f32 1.0, %v3175
  %v3177 = vrcp.pop %v3170
  %v3178 = vmul.f32 1.0, %v3177
  %3183 = vrot.lane.b32.xlu0 %v3105, 10
  %v3184 = vpop.permute.xlu0 %3183
  %3185 = vrot.lane.b32.xlu0 %v3108, 10
  %v3186 = vpop.permute.xlu0 %3185
  %3187 = vrot.lane.b32.xlu0 %v3113, 10
  %v3188 = vpop.permute.xlu0 %3187
  %3189 = vrot.lane.b32.xlu0 %v3116, 10
  %v3190 = vpop.permute.xlu0 %3189
  %v3195 = vadd.f32 %v1769, %v3184
  %v3196 = vadd.f32 %v1772, %v3186
  %v3197 = vadd.f32 %v1777, %v3188
  %v3198 = vadd.f32 %v1780, %v3190
  %v3199 = vxor.u32 %v3195, 2147483648
  %v3200 = vxor.u32 %v3196, 2147483648
  %v3201 = vxor.u32 %v3197, 2147483648
  %v3202 = vxor.u32 %v3198, 2147483648
  %v3203 = vmul.f32 %v3199, 1.442695
  %v3204 = vpow.pop %v3203
  %v3205 = vmul.f32 %v3200, 1.442695
  %v3206 = vpow.pop %v3205
  %v3207 = vmul.f32 %v3201, 1.442695
  %v3208 = vpow.pop %v3207
  %v3209 = vmul.f32 %v3202, 1.442695
  %v3210 = vpow.pop %v3209
  %v3211 = vadd.f32 %v3204, 1.0
  %v3212 = vadd.f32 %v3206, 1.0
  %v3213 = vadd.f32 %v3208, 1.0
  %v3214 = vadd.f32 %v3210, 1.0
  %v3215 = vrcp.pop %v3211
  %v3216 = vmul.f32 1.0, %v3215
  %v3217 = vrcp.pop %v3212
  %v3218 = vmul.f32 1.0, %v3217
  %v3219 = vrcp.pop %v3213
  %v3220 = vmul.f32 1.0, %v3219
  %v3221 = vrcp.pop %v3214
  %v3222 = vmul.f32 1.0, %v3221
  %3227 = vrot.lane.b32.xlu0 %v3121, 10
  %v3228 = vpop.permute.xlu0 %3227
  %3229 = vrot.lane.b32.xlu0 %v3124, 10
  %v3230 = vpop.permute.xlu0 %3229
  %3231 = vrot.lane.b32.xlu0 %v3129, 10
  %v3232 = vpop.permute.xlu0 %3231
  %3233 = vrot.lane.b32.xlu0 %v3132, 10
  %v3234 = vpop.permute.xlu0 %3233
  %v3239 = vmul.f32 %v3172, %v3228
  %v3240 = vmul.f32 %v3174, %v3230
  %v3241 = vmul.f32 %v3176, %v3232
  %v3242 = vmul.f32 %v3178, %v3234
  %v3243 = vadd.f32 %v1785, %v3239
  %v3244 = vadd.f32 %v1788, %v3240
  %v3245 = vadd.f32 %v1793, %v3241
  %v3246 = vadd.f32 %v1796, %v3242
  %v3247 = vtanh.pop %v3243
  %v3248 = vtanh.pop %v3244
  %v3249 = vtanh.pop %v3245
  %v3250 = vtanh.pop %v3246
  %v3251 = vsub.f32 1.0, %v3216
  %v3252 = vsub.f32 1.0, %v3218
  %v3253 = vsub.f32 1.0, %v3220
  %v3254 = vsub.f32 1.0, %v3222
  %v3255 = vmul.f32 %v3251, %v3247
  %v3256 = vmul.f32 %v3252, %v3248
  %v3257 = vmul.f32 %v3253, %v3249
  %v3258 = vmul.f32 %v3254, %v3250
  %3263 = vrot.lane.b32.xlu0 %v3040, 2
  %v3264 = vpop.permute.xlu0 %3263
  %3265 = vrot.lane.b32.xlu0 %v3041, 2
  %v3266 = vpop.permute.xlu0 %3265
  %3267 = vrot.lane.b32.xlu0 %v3042, 2
  %v3268 = vpop.permute.xlu0 %3267
  %3269 = vrot.lane.b32.xlu0 %v3043, 2
  %v3270 = vpop.permute.xlu0 %3269
  %v3275 = vmul.f32 %v3216, %v3264
  %v3276 = vmul.f32 %v3218, %v3266
  %v3277 = vmul.f32 %v3220, %v3268
  %v3278 = vmul.f32 %v3222, %v3270
  %v3279 = vadd.f32 %v3255, %v3275
  %v3280 = vadd.f32 %v3256, %v3276
  %v3281 = vadd.f32 %v3257, %v3277
  %v3282 = vadd.f32 %v3258, %v3278
  %v3283 = vpack.c.bf16 %v3280, %v3279
  %v3284 = vpack.c.bf16 %v3282, %v3281
  %3287 = vrot.lane.b32.xlu0 %v3283, 118
  %v3288 = vpop.permute.xlu0 %3287
  %3289 = vrot.lane.b32.xlu0 %v3284, 118
  %v3290 = vpop.permute.xlu0 %3289
  %3293 = vmatprep.subr.bf16.mxu0 0
  %3294 = vmatpush1.bf16.msra.mxu0 0
  %3295 = vmatprep.subr.bf16.mxu0 0
  %3296 = vmatpush1.bf16.msra.mxu0 0
  %3297 = vmatprep.subr.bf16.mxu0 0
  %3298 = vmatpush1.bf16.msra.mxu0 0
  %3299 = vmatprep.subr.bf16.mxu0 0
  %3300 = vmatpush1.bf16.msra.mxu0 0
  %3301 = vmatprep.subr.bf16.mxu0 0
  %3302 = vmatpush1.bf16.msra.mxu0 0
  %3303 = vmatprep.subr.bf16.mxu0 0
  %3304 = vmatpush1.bf16.msra.mxu0 0
  %3305 = vmatprep.subr.bf16.mxu0 0
  %3306 = vmatpush1.bf16.msra.mxu0 %v3290
  %3307 = vmatprep.subr.bf16.mxu0 0
  %3308 = vmatpush1.bf16.msra.mxu0 %v3288
  %3309 = vmatprep.subr.bf16.mxu0 0
  %3310 = vmatpush2.bf16.msra.mxu0 0
  %3311 = vmatprep.subr.bf16.mxu0 0
  %3312 = vmatpush2.bf16.msra.mxu0 0
  %3313 = vmatprep.subr.bf16.mxu0 0
  %3314 = vmatpush2.bf16.msra.mxu0 0
  %3315 = vmatprep.subr.bf16.mxu0 0
  %3316 = vmatpush2.bf16.msra.mxu0 0
  %3317 = vmatprep.subr.bf16.mxu0 0
  %3318 = vmatpush2.bf16.msra.mxu0 0
  %3319 = vmatprep.subr.bf16.mxu0 0
  %3320 = vmatpush2.bf16.msra.mxu0 0
  %3321 = vmatprep.subr.bf16.mxu0 0
  %3322 = vmatpush2.bf16.msra.mxu0 0
  %3323 = vmatprep.subr.bf16.mxu0 0
  %3324 = vmatpush2.bf16.msra.mxu0 0
  %3325 = vmatprep.mubr.bf16.mxu0 0
  %3326 = vmatmul.mubr.bf16.gmra.mxu0 %v1914
  %v3327 = vpop.f32.mrf.mxu0
  %v3328 = vadd.f32 %v1826, %v3327
  %v3329 = vpop.f32.mrf.mxu0
  %v3330 = vpop.f32.mrf.mxu0
  %v3331 = vadd.f32 %v1831, %v3330
  %v3332 = vpop.f32.mrf.mxu0
  %3333 = vmatprep.mubr.bf16.mxu0 0
  %3334 = vmatmul.mubr.bf16.gmra.mxu0 %v1917
  %v3335 = vpop.f32.mrf.mxu0
  %v3336 = vadd.f32 %v1836, %v3335
  %v3337 = vpop.f32.mrf.mxu0
  %v3338 = vpop.f32.mrf.mxu0
  %v3339 = vadd.f32 %v1841, %v3338
  %v3340 = vpop.f32.mrf.mxu0
  %3341 = vmatprep.mubr.bf16.mxu0 0
  %3342 = vmatmul.mubr.bf16.gmra.mxu0 %v1920
  %v3343 = vpop.f32.mrf.mxu0
  %v3344 = vadd.f32 %v1846, %v3343
  %v3345 = vpop.f32.mrf.mxu0
  %v3346 = vpop.f32.mrf.mxu0
  %v3347 = vadd.f32 %v1851, %v3346
  %v3348 = vpop.f32.mrf.mxu0
  %3349 = vmatprep.mubr.bf16.mxu0 0
  %3350 = vmatmul.mubr.bf16.gmra.mxu0 %v1923
  %v3351 = vpop.f32.mrf.mxu0
  %v3352 = vadd.f32 %v1856, %v3351
  %v3353 = vpop.f32.mrf.mxu0
  %v3354 = vpop.f32.mrf.mxu0
  %v3355 = vadd.f32 %v1861, %v3354
  %v3356 = vpop.f32.mrf.mxu0
  %3357 = vmatprep.mubr.bf16.mxu0 0
  %3358 = vmatmul.mubr.bf16.gmra.mxu0 %v1926
  %v3359 = vpop.f32.mrf.mxu0
  %v3360 = vadd.f32 %v1866, %v3359
  %v3361 = vpop.f32.mrf.mxu0
  %v3362 = vpop.f32.mrf.mxu0
  %v3363 = vadd.f32 %v1871, %v3362
  %v3364 = vpop.f32.mrf.mxu0
  %3365 = vmatprep.mubr.bf16.mxu0 0
  %3366 = vmatmul.mubr.bf16.gmra.mxu0 %v1929
  %v3367 = vpop.f32.mrf.mxu0
  %v3368 = vadd.f32 %v1876, %v3367
  %v3369 = vpop.f32.mrf.mxu0
  %v3370 = vpop.f32.mrf.mxu0
  %v3371 = vadd.f32 %v1881, %v3370
  %v3372 = vpop.f32.mrf.mxu0
  %3373 = vdwg.mxu0
  %3378 = vrot.lane.b32.xlu0 %v3328, 12
  %v3379 = vpop.permute.xlu0 %3378
  %3380 = vrot.lane.b32.xlu0 %v3331, 12
  %v3381 = vpop.permute.xlu0 %3380
  %3382 = vrot.lane.b32.xlu0 %v3336, 12
  %v3383 = vpop.permute.xlu0 %3382
  %3384 = vrot.lane.b32.xlu0 %v3339, 12
  %v3385 = vpop.permute.xlu0 %3384
  %v3390 = vadd.f32 %v1753, %v3379
  %v3391 = vadd.f32 %v1756, %v3381
  %v3392 = vadd.f32 %v1761, %v3383
  %v3393 = vadd.f32 %v1764, %v3385
  %v3394 = vxor.u32 %v3390, 2147483648
  %v3395 = vxor.u32 %v3391, 2147483648
  %v3396 = vxor.u32 %v3392, 2147483648
  %v3397 = vxor.u32 %v3393, 2147483648
  %v3398 = vmul.f32 %v3394, 1.442695
  %v3399 = vpow.pop %v3398
  %v3400 = vmul.f32 %v3395, 1.442695
  %v3401 = vpow.pop %v3400
  %v3402 = vmul.f32 %v3396, 1.442695
  %v3403 = vpow.pop %v3402
  %v3404 = vmul.f32 %v3397, 1.442695
  %v3405 = vpow.pop %v3404
  %v3406 = vadd.f32 %v3399, 1.0
  %v3407 = vadd.f32 %v3401, 1.0
  %v3408 = vadd.f32 %v3403, 1.0
  %v3409 = vadd.f32 %v3405, 1.0
  %v3410 = vrcp.pop %v3406
  %v3411 = vmul.f32 1.0, %v3410
  %v3412 = vrcp.pop %v3407
  %v3413 = vmul.f32 1.0, %v3412
  %v3414 = vrcp.pop %v3408
  %v3415 = vmul.f32 1.0, %v3414
  %v3416 = vrcp.pop %v3409
  %v3417 = vmul.f32 1.0, %v3416
  %3422 = vrot.lane.b32.xlu0 %v3344, 12
  %v3423 = vpop.permute.xlu0 %3422
  %3424 = vrot.lane.b32.xlu0 %v3347, 12
  %v3425 = vpop.permute.xlu0 %3424
  %3426 = vrot.lane.b32.xlu0 %v3352, 12
  %v3427 = vpop.permute.xlu0 %3426
  %3428 = vrot.lane.b32.xlu0 %v3355, 12
  %v3429 = vpop.permute.xlu0 %3428
  %v3434 = vadd.f32 %v1769, %v3423
  %v3435 = vadd.f32 %v1772, %v3425
  %v3436 = vadd.f32 %v1777, %v3427
  %v3437 = vadd.f32 %v1780, %v3429
  %v3438 = vxor.u32 %v3434, 2147483648
  %v3439 = vxor.u32 %v3435, 2147483648
  %v3440 = vxor.u32 %v3436, 2147483648
  %v3441 = vxor.u32 %v3437, 2147483648
  %v3442 = vmul.f32 %v3438, 1.442695
  %v3443 = vpow.pop %v3442
  %v3444 = vmul.f32 %v3439, 1.442695
  %v3445 = vpow.pop %v3444
  %v3446 = vmul.f32 %v3440, 1.442695
  %v3447 = vpow.pop %v3446
  %v3448 = vmul.f32 %v3441, 1.442695
  %v3449 = vpow.pop %v3448
  %v3450 = vadd.f32 %v3443, 1.0
  %v3451 = vadd.f32 %v3445, 1.0
  %v3452 = vadd.f32 %v3447, 1.0
  %v3453 = vadd.f32 %v3449, 1.0
  %v3454 = vrcp.pop %v3450
  %v3455 = vmul.f32 1.0, %v3454
  %v3456 = vrcp.pop %v3451
  %v3457 = vmul.f32 1.0, %v3456
  %v3458 = vrcp.pop %v3452
  %v3459 = vmul.f32 1.0, %v3458
  %v3460 = vrcp.pop %v3453
  %v3461 = vmul.f32 1.0, %v3460
  %3466 = vrot.lane.b32.xlu0 %v3360, 12
  %v3467 = vpop.permute.xlu0 %3466
  %3468 = vrot.lane.b32.xlu0 %v3363, 12
  %v3469 = vpop.permute.xlu0 %3468
  %3470 = vrot.lane.b32.xlu0 %v3368, 12
  %v3471 = vpop.permute.xlu0 %3470
  %3472 = vrot.lane.b32.xlu0 %v3371, 12
  %v3473 = vpop.permute.xlu0 %3472
  %v3478 = vmul.f32 %v3411, %v3467
  %v3479 = vmul.f32 %v3413, %v3469
  %v3480 = vmul.f32 %v3415, %v3471
  %v3481 = vmul.f32 %v3417, %v3473
  %v3482 = vadd.f32 %v1785, %v3478
  %v3483 = vadd.f32 %v1788, %v3479
  %v3484 = vadd.f32 %v1793, %v3480
  %v3485 = vadd.f32 %v1796, %v3481
  %v3486 = vtanh.pop %v3482
  %v3487 = vtanh.pop %v3483
  %v3488 = vtanh.pop %v3484
  %v3489 = vtanh.pop %v3485
  %v3490 = vsub.f32 1.0, %v3455
  %v3491 = vsub.f32 1.0, %v3457
  %v3492 = vsub.f32 1.0, %v3459
  %v3493 = vsub.f32 1.0, %v3461
  %v3494 = vmul.f32 %v3490, %v3486
  %v3495 = vmul.f32 %v3491, %v3487
  %v3496 = vmul.f32 %v3492, %v3488
  %v3497 = vmul.f32 %v3493, %v3489
  %3502 = vrot.lane.b32.xlu0 %v3279, 2
  %v3503 = vpop.permute.xlu0 %3502
  %3504 = vrot.lane.b32.xlu0 %v3280, 2
  %v3505 = vpop.permute.xlu0 %3504
  %3506 = vrot.lane.b32.xlu0 %v3281, 2
  %v3507 = vpop.permute.xlu0 %3506
  %3508 = vrot.lane.b32.xlu0 %v3282, 2
  %v3509 = vpop.permute.xlu0 %3508
  %v3514 = vmul.f32 %v3455, %v3503
  %v3515 = vmul.f32 %v3457, %v3505
  %v3516 = vmul.f32 %v3459, %v3507
  %v3517 = vmul.f32 %v3461, %v3509
  %v3518 = vadd.f32 %v3494, %v3514
  %v3519 = vadd.f32 %v3495, %v3515
  %v3520 = vadd.f32 %v3496, %v3516
  %v3521 = vadd.f32 %v3497, %v3517
  %v3522 = vpack.c.bf16 %v3519, %v3518
  %v3523 = vpack.c.bf16 %v3521, %v3520
  %3526 = vrot.lane.b32.xlu0 %v3522, 116
  %v3527 = vpop.permute.xlu0 %3526
  %3528 = vrot.lane.b32.xlu0 %v3523, 116
  %v3529 = vpop.permute.xlu0 %3528
  %3532 = vmatprep.subr.bf16.mxu0 0
  %3533 = vmatpush1.bf16.msra.mxu0 0
  %3534 = vmatprep.subr.bf16.mxu0 0
  %3535 = vmatpush1.bf16.msra.mxu0 0
  %3536 = vmatprep.subr.bf16.mxu0 0
  %3537 = vmatpush1.bf16.msra.mxu0 0
  %3538 = vmatprep.subr.bf16.mxu0 0
  %3539 = vmatpush1.bf16.msra.mxu0 0
  %3540 = vmatprep.subr.bf16.mxu0 0
  %3541 = vmatpush1.bf16.msra.mxu0 0
  %3542 = vmatprep.subr.bf16.mxu0 0
  %3543 = vmatpush1.bf16.msra.mxu0 0
  %3544 = vmatprep.subr.bf16.mxu0 0
  %3545 = vmatpush1.bf16.msra.mxu0 %v3529
  %3546 = vmatprep.subr.bf16.mxu0 0
  %3547 = vmatpush1.bf16.msra.mxu0 %v3527
  %3548 = vmatprep.subr.bf16.mxu0 0
  %3549 = vmatpush2.bf16.msra.mxu0 0
  %3550 = vmatprep.subr.bf16.mxu0 0
  %3551 = vmatpush2.bf16.msra.mxu0 0
  %3552 = vmatprep.subr.bf16.mxu0 0
  %3553 = vmatpush2.bf16.msra.mxu0 0
  %3554 = vmatprep.subr.bf16.mxu0 0
  %3555 = vmatpush2.bf16.msra.mxu0 0
  %3556 = vmatprep.subr.bf16.mxu0 0
  %3557 = vmatpush2.bf16.msra.mxu0 0
  %3558 = vmatprep.subr.bf16.mxu0 0
  %3559 = vmatpush2.bf16.msra.mxu0 0
  %3560 = vmatprep.subr.bf16.mxu0 0
  %3561 = vmatpush2.bf16.msra.mxu0 0
  %3562 = vmatprep.subr.bf16.mxu0 0
  %3563 = vmatpush2.bf16.msra.mxu0 0
  %3564 = vmatprep.mubr.bf16.mxu0 0
  %3565 = vmatmul.mubr.bf16.gmra.mxu0 %v1914
  %v3566 = vpop.f32.mrf.mxu0
  %v3567 = vadd.f32 %v1826, %v3566
  %v3568 = vpop.f32.mrf.mxu0
  %v3569 = vpop.f32.mrf.mxu0
  %v3570 = vadd.f32 %v1831, %v3569
  %v3571 = vpop.f32.mrf.mxu0
  %3572 = vmatprep.mubr.bf16.mxu0 0
  %3573 = vmatmul.mubr.bf16.gmra.mxu0 %v1917
  %v3574 = vpop.f32.mrf.mxu0
  %v3575 = vadd.f32 %v1836, %v3574
  %v3576 = vpop.f32.mrf.mxu0
  %v3577 = vpop.f32.mrf.mxu0
  %v3578 = vadd.f32 %v1841, %v3577
  %v3579 = vpop.f32.mrf.mxu0
  %3580 = vmatprep.mubr.bf16.mxu0 0
  %3581 = vmatmul.mubr.bf16.gmra.mxu0 %v1920
  %v3582 = vpop.f32.mrf.mxu0
  %v3583 = vadd.f32 %v1846, %v3582
  %v3584 = vpop.f32.mrf.mxu0
  %v3585 = vpop.f32.mrf.mxu0
  %v3586 = vadd.f32 %v1851, %v3585
  %v3587 = vpop.f32.mrf.mxu0
  %3588 = vmatprep.mubr.bf16.mxu0 0
  %3589 = vmatmul.mubr.bf16.gmra.mxu0 %v1923
  %v3590 = vpop.f32.mrf.mxu0
  %v3591 = vadd.f32 %v1856, %v3590
  %v3592 = vpop.f32.mrf.mxu0
  %v3593 = vpop.f32.mrf.mxu0
  %v3594 = vadd.f32 %v1861, %v3593
  %v3595 = vpop.f32.mrf.mxu0
  %3596 = vmatprep.mubr.bf16.mxu0 0
  %3597 = vmatmul.mubr.bf16.gmra.mxu0 %v1926
  %v3598 = vpop.f32.mrf.mxu0
  %v3599 = vadd.f32 %v1866, %v3598
  %v3600 = vpop.f32.mrf.mxu0
  %v3601 = vpop.f32.mrf.mxu0
  %v3602 = vadd.f32 %v1871, %v3601
  %v3603 = vpop.f32.mrf.mxu0
  %3604 = vmatprep.mubr.bf16.mxu0 0
  %3605 = vmatmul.mubr.bf16.gmra.mxu0 %v1929
  %v3606 = vpop.f32.mrf.mxu0
  %v3607 = vadd.f32 %v1876, %v3606
  %v3608 = vpop.f32.mrf.mxu0
  %v3609 = vpop.f32.mrf.mxu0
  %v3610 = vadd.f32 %v1881, %v3609
  %v3611 = vpop.f32.mrf.mxu0
  %3612 = vdwg.mxu0
  %3617 = vrot.lane.b32.xlu0 %v3567, 14
  %v3618 = vpop.permute.xlu0 %3617
  %3619 = vrot.lane.b32.xlu0 %v3570, 14
  %v3620 = vpop.permute.xlu0 %3619
  %3621 = vrot.lane.b32.xlu0 %v3575, 14
  %v3622 = vpop.permute.xlu0 %3621
  %3623 = vrot.lane.b32.xlu0 %v3578, 14
  %v3624 = vpop.permute.xlu0 %3623
  %v3629 = vadd.f32 %v1753, %v3618
  %v3630 = vadd.f32 %v1756, %v3620
  %v3631 = vadd.f32 %v1761, %v3622
  %v3632 = vadd.f32 %v1764, %v3624
  %v3633 = vxor.u32 %v3629, 2147483648
  %v3634 = vxor.u32 %v3630, 2147483648
  %v3635 = vxor.u32 %v3631, 2147483648
  %v3636 = vxor.u32 %v3632, 2147483648
  %v3637 = vmul.f32 %v3633, 1.442695
  %v3638 = vpow.pop %v3637
  %v3639 = vmul.f32 %v3634, 1.442695
  %v3640 = vpow.pop %v3639
  %v3641 = vmul.f32 %v3635, 1.442695
  %v3642 = vpow.pop %v3641
  %v3643 = vmul.f32 %v3636, 1.442695
  %v3644 = vpow.pop %v3643
  %v3645 = vadd.f32 %v3638, 1.0
  %v3646 = vadd.f32 %v3640, 1.0
  %v3647 = vadd.f32 %v3642, 1.0
  %v3648 = vadd.f32 %v3644, 1.0
  %v3649 = vrcp.pop %v3645
  %v3650 = vmul.f32 1.0, %v3649
  %v3651 = vrcp.pop %v3646
  %v3652 = vmul.f32 1.0, %v3651
  %v3653 = vrcp.pop %v3647
  %v3654 = vmul.f32 1.0, %v3653
  %v3655 = vrcp.pop %v3648
  %v3656 = vmul.f32 1.0, %v3655
  %3661 = vrot.lane.b32.xlu0 %v3583, 14
  %v3662 = vpop.permute.xlu0 %3661
  %3663 = vrot.lane.b32.xlu0 %v3586, 14
  %v3664 = vpop.permute.xlu0 %3663
  %3665 = vrot.lane.b32.xlu0 %v3591, 14
  %v3666 = vpop.permute.xlu0 %3665
  %3667 = vrot.lane.b32.xlu0 %v3594, 14
  %v3668 = vpop.permute.xlu0 %3667
  %v3673 = vadd.f32 %v1769, %v3662
  %v3674 = vadd.f32 %v1772, %v3664
  %v3675 = vadd.f32 %v1777, %v3666
  %v3676 = vadd.f32 %v1780, %v3668
  %v3677 = vxor.u32 %v3673, 2147483648
  %v3678 = vxor.u32 %v3674, 2147483648
  %v3679 = vxor.u32 %v3675, 2147483648
  %v3680 = vxor.u32 %v3676, 2147483648
  %v3681 = vmul.f32 %v3677, 1.442695
  %v3682 = vpow.pop %v3681
  %v3683 = vmul.f32 %v3678, 1.442695
  %v3684 = vpow.pop %v3683
  %v3685 = vmul.f32 %v3679, 1.442695
  %v3686 = vpow.pop %v3685
  %v3687 = vmul.f32 %v3680, 1.442695
  %v3688 = vpow.pop %v3687
  %v3689 = vadd.f32 %v3682, 1.0
  %v3690 = vadd.f32 %v3684, 1.0
  %v3691 = vadd.f32 %v3686, 1.0
  %v3692 = vadd.f32 %v3688, 1.0
  %v3693 = vrcp.pop %v3689
  %v3694 = vmul.f32 1.0, %v3693
  %v3695 = vrcp.pop %v3690
  %v3696 = vmul.f32 1.0, %v3695
  %v3697 = vrcp.pop %v3691
  %v3698 = vmul.f32 1.0, %v3697
  %v3699 = vrcp.pop %v3692
  %v3700 = vmul.f32 1.0, %v3699
  %3705 = vrot.lane.b32.xlu0 %v3599, 14
  %v3706 = vpop.permute.xlu0 %3705
  %3707 = vrot.lane.b32.xlu0 %v3602, 14
  %v3708 = vpop.permute.xlu0 %3707
  %3709 = vrot.lane.b32.xlu0 %v3607, 14
  %v3710 = vpop.permute.xlu0 %3709
  %3711 = vrot.lane.b32.xlu0 %v3610, 14
  %v3712 = vpop.permute.xlu0 %3711
  %v3717 = vmul.f32 %v3650, %v3706
  %v3718 = vmul.f32 %v3652, %v3708
  %v3719 = vmul.f32 %v3654, %v3710
  %v3720 = vmul.f32 %v3656, %v3712
  %v3721 = vadd.f32 %v1785, %v3717
  %v3722 = vadd.f32 %v1788, %v3718
  %v3723 = vadd.f32 %v1793, %v3719
  %v3724 = vadd.f32 %v1796, %v3720
  %v3725 = vtanh.pop %v3721
  %v3726 = vtanh.pop %v3722
  %v3727 = vtanh.pop %v3723
  %v3728 = vtanh.pop %v3724
  %v3729 = vsub.f32 1.0, %v3694
  %v3730 = vsub.f32 1.0, %v3696
  %v3731 = vsub.f32 1.0, %v3698
  %v3732 = vsub.f32 1.0, %v3700
  %v3733 = vmul.f32 %v3729, %v3725
  %v3734 = vmul.f32 %v3730, %v3726
  %v3735 = vmul.f32 %v3731, %v3727
  %v3736 = vmul.f32 %v3732, %v3728
  %3741 = vrot.lane.b32.xlu0 %v3518, 2
  %v3742 = vpop.permute.xlu0 %3741
  %3743 = vrot.lane.b32.xlu0 %v3519, 2
  %v3744 = vpop.permute.xlu0 %3743
  %3745 = vrot.lane.b32.xlu0 %v3520, 2
  %v3746 = vpop.permute.xlu0 %3745
  %3747 = vrot.lane.b32.xlu0 %v3521, 2
  %v3748 = vpop.permute.xlu0 %3747
  %v3753 = vmul.f32 %v3694, %v3742
  %v3754 = vmul.f32 %v3696, %v3744
  %v3755 = vmul.f32 %v3698, %v3746
  %v3756 = vmul.f32 %v3700, %v3748
  %v3757 = vadd.f32 %v3733, %v3753
  %v3758 = vadd.f32 %v3734, %v3754
  %v3759 = vadd.f32 %v3735, %v3755
  %v3760 = vadd.f32 %v3736, %v3756
  %v3761 = vld [vmem:[%s7] sm:$0xf]
  %v3762 = vpack.c.bf16 %v3758, %v3757
  %v3763 = vpack.c.bf16 %v3760, %v3759
  %v3764 = vld [vmem:[%s8] sm:$0xff]
  %3766 = vset.pattern.permute.xlu0 0
  %3767 = vperm.xlu0 %3766, %v3764
  %v3768 = vpop.permute.xlu0 %3767
  %3772 = vrot.lane.b32.xlu0 %v3762, 114
  %v3773 = vpop.permute.xlu0 %3772
  %3774 = vrot.lane.b32.xlu0 %v3763, 114
  %v3775 = vpop.permute.xlu0 %3774
  %v3779 = vsel %vm1699, %v3761, 0
  %3781 = vmatprep.subr.bf16.mxu0 0
  %3782 = vmatpush1.bf16.msra.mxu0 0
  %3783 = vmatprep.subr.bf16.mxu0 0
  %3784 = vmatpush1.bf16.msra.mxu0 0
  %3785 = vmatprep.subr.bf16.mxu0 0
  %3786 = vmatpush1.bf16.msra.mxu0 0
  %3787 = vmatprep.subr.bf16.mxu0 0
  %3788 = vmatpush1.bf16.msra.mxu0 0
  %3789 = vmatprep.subr.bf16.mxu0 0
  %3790 = vmatpush1.bf16.msra.mxu0 0
  %3791 = vmatprep.subr.bf16.mxu0 0
  %3792 = vmatpush1.bf16.msra.mxu0 0
  %3793 = vmatprep.subr.bf16.mxu0 0
  %3794 = vmatpush1.bf16.msra.mxu0 %v3775
  %3795 = vmatprep.subr.bf16.mxu0 0
  %3796 = vmatpush1.bf16.msra.mxu0 %v3773
  %3797 = vmatprep.subr.bf16.mxu0 0
  %3798 = vmatpush2.bf16.msra.mxu0 0
  %3799 = vmatprep.subr.bf16.mxu0 0
  %3800 = vmatpush2.bf16.msra.mxu0 0
  %3801 = vmatprep.subr.bf16.mxu0 0
  %3802 = vmatpush2.bf16.msra.mxu0 0
  %3803 = vmatprep.subr.bf16.mxu0 0
  %3804 = vmatpush2.bf16.msra.mxu0 0
  %3805 = vmatprep.subr.bf16.mxu0 0
  %3806 = vmatpush2.bf16.msra.mxu0 0
  %3807 = vmatprep.subr.bf16.mxu0 0
  %3808 = vmatpush2.bf16.msra.mxu0 0
  %3809 = vmatprep.subr.bf16.mxu0 0
  %3810 = vmatpush2.bf16.msra.mxu0 0
  %3811 = vmatprep.subr.bf16.mxu0 0
  %3812 = vmatpush2.bf16.msra.mxu0 0
  %3813 = vmatprep.mubr.bf16.mxu0 0
  %3814 = vmatmul.mubr.bf16.gmra.mxu0 %v3779
  %v3815 = vpop.f32.mrf.mxu0
  %v3816 = vadd.f32 %v3768, %v3815
  %v3817 = vpop.f32.mrf.mxu0
  %v3818 = vpop.f32.mrf.mxu0
  %v3819 = vpop.f32.mrf.mxu0
  %3820 = vdwg.mxu0
  %vm3821 = vcmask 15360
  %v3822 = vsel %vm3821, %v3816, -inf
  %v3823 = vrot.slane %v3822, 4
  %v3824 = vmax.f32 %v3822, %v3823
  %v3825 = vrot.slane %v3824, 2
  %v3826 = vmax.f32 %v3824, %v3825
  %v3827 = vrot.slane %v3826, 1
  %v3828 = vmax.f32 %v3826, %v3827
  %v3829 = vsub.f32 %v3816, %v3828
  %v3830 = vmul.f32 %v3829, 1.442695
  %v3831 = vpow.pop %v3830
  %v3832 = vsel %vm3821, %v3831, 0.0
  %v3833 = vrot.slane %v3832, 4
  %v3834 = vadd.f32 %v3832, %v3833
  %v3835 = vrot.slane %v3834, 2
  %v3836 = vadd.f32 %v3834, %v3835
  %v3837 = vrot.slane %v3836, 1
  %v3838 = vadd.f32 %v3836, %v3837
  %v3839 = vrcp.pop %v3838
  %v3840 = vmul.f32 %v3831, %v3839
  %3841 = vst.msk [vmem:[%s9] sm:$0xff] %vm3821, %v3840
  // Predicated region
  $region38: #{tpu_custom_call.1} parent=0 // pred_check
    _
  $region39: #{tpu_custom_call.1} parent=0 // pred_check_branch
    %3843 = sbr.rel (0) target = $region41
  $region40: #{tpu_custom_call.1} parent=0 // pred_region
    _
  $region41: #{tpu_custom_call.1} parent=0 // pred_fallthru
    _
  // Predicated region
  $region42: #{tpu_custom_call.1} parent=0 // pred_check
    _
  $region43: #{tpu_custom_call.1} parent=0 // pred_check_branch
    %3845 = sbr.rel (0) target = $region45
  $region44: #{tpu_custom_call.1} parent=0 // pred_region
    _
  $region45: #{tpu_custom_call.1} parent=0 // pred_fallthru
    _

</llo_original>
